<compile_context>
chip_gen: v6e
topology: v6e:2x2x1
jax: 0.10.0
libtpu: 0.0.40
codegen_flags: <defaults>
</compile_context>

<pallas_src>
import functools
import math

import jax
import jax.numpy as jnp
from jax.experimental import pallas as pl
from jax.experimental.pallas import tpu as pltpu


def mha_kernel(x_ref, wqkv_ref, bqkv_ref, wo_ref, bo_ref, o_ref, *,
               num_heads, block_b, seq_len, input_dim, n_filters, inner_dim):
    D, H, S, Bt = input_dim, num_heads, seq_len, block_b
    hd = D // H
    M = Bt * S
    scale = 1.0 / math.sqrt(hd)

    # torch: x.transpose(1, 2).reshape(batch, -1, D); block_b batch elements
    # are folded into the matmul M dimension.
    x = x_ref[...]                                            # (Bt, F, I)
    x_seq = jnp.swapaxes(x, 1, 2).reshape(M, D)               # (Bt*S, D)

    # Fused Q/K/V projection: one M=Bt*S, K=D, N=3D MXU matmul.
    qkv = (jnp.dot(x_seq, wqkv_ref[...], preferred_element_type=jnp.float32)
           + bqkv_ref[...])                                   # (M, 3D)
    q = qkv[:, :D] * scale                                    # fold 1/sqrt(hd) into q
    k = qkv[:, D:2 * D]
    v = qkv[:, 2 * D:]

    # Split heads out of the lane dim via static slices + leading-dim concat
    # (only leading-dim reshapes; no 4-D transpose), then run attention as a
    # single batched einsum over all (head, batch) pairs -- no VMEM scratch.
    def to_heads(t):                                          # (M, D) -> (H*Bt, S, hd)
        heads = [t[:, h * hd:(h + 1) * hd].reshape(Bt, S, hd) for h in range(H)]
        return jnp.concatenate(heads, axis=0)

    qh, kh, vh = to_heads(q), to_heads(k), to_heads(v)        # (H*Bt, S, hd)

    s = jnp.einsum('bqd,bkd->bqk', qh, kh,
                   preferred_element_type=jnp.float32)        # (H*Bt, S, S)
    s = s - jnp.max(s, axis=-1, keepdims=True)
    p = jnp.exp(s)
    p = p / jnp.sum(p, axis=-1, keepdims=True)                # exact softmax (torch parity)
    ctx = jnp.einsum('bqk,bkd->bqd', p, vh,
                     preferred_element_type=jnp.float32)      # (H*Bt, S, hd)

    # Merge heads back along lanes -> (M, D), then one K=D output projection.
    ctx_heads = [ctx[h * Bt:(h + 1) * Bt].reshape(M, hd) for h in range(H)]
    ctx2 = jnp.concatenate(ctx_heads, axis=-1)                # (M, D)
    out = (jnp.dot(ctx2, wo_ref[...], preferred_element_type=jnp.float32)
           + bo_ref[...])                                     # (M, D)

    # torch: view(batch, inner_dim, n_filters).transpose(1, 2)
    o_ref[...] = jnp.swapaxes(out.reshape(Bt, inner_dim, n_filters), 1, 2)


def _pick_block_b(batch, seq_len, target_rows=256):
    """Largest batch tile s.t. M = block_b*seq_len ~ target_rows and grid >= 2."""
    bt = max(1, min(batch, target_rows // max(seq_len, 1)))
    if batch >= 2:
        bt = min(bt, (batch + 1) // 2)   # keep grid length >= 2 (v7x megacore)
    while batch % bt:                    # make it an exact divisor of the batch
        bt -= 1
    return bt


def multi_head_attention(x, params, *, num_heads=4, block_b=None):
    B, n_filters, inner_dim = x.shape
    D = params['w_qkv'].shape[0]                     # input_dim
    assert D % num_heads == 0, 'input_dim must be divisible by num_heads'
    assert (n_filters * inner_dim) % D == 0, 'n_filters*inner_dim must divide input_dim'
    S = (n_filters * inner_dim) // D                 # sequence length after reshape
    x = x.astype(jnp.float32)

    if block_b is None:
        block_b = _pick_block_b(B, S)
    assert B % block_b == 0
    grid = (B // block_b,)

    kernel = functools.partial(
        mha_kernel, num_heads=num_heads, block_b=block_b, seq_len=S,
        input_dim=D, n_filters=n_filters, inner_dim=inner_dim)

    return pl.pallas_call(
        kernel,
        out_shape=jax.ShapeDtypeStruct((B, n_filters, inner_dim), jnp.float32),
        grid=grid,
        in_specs=[
            pl.BlockSpec((block_b, n_filters, inner_dim), lambda b: (b, 0, 0)),  # x
            pl.BlockSpec((D, 3 * D), lambda b: (0, 0)),                          # w_qkv (resident)
            pl.BlockSpec((1, 3 * D), lambda b: (0, 0)),                          # b_qkv
            pl.BlockSpec((D, D), lambda b: (0, 0)),                              # w_o
            pl.BlockSpec((1, D), lambda b: (0, 0)),                              # b_o
        ],
        out_specs=pl.BlockSpec((block_b, n_filters, inner_dim), lambda b: (b, 0, 0)),
        compiler_params=pltpu.CompilerParams(dimension_semantics=("parallel",)),
    )(x, params['w_qkv'], params['b_qkv'], params['w_o'], params['b_o'])


def init_params(key, input_dim=32):
    keys = jax.random.split(key, 8)

    def w(k, shape, scale=0.05):
        return scale * jax.random.normal(k, shape, dtype=jnp.float32)

    # torch Linear weights transposed to (in, out); Q/K/V packed along lanes.
    wq = w(keys[0], (input_dim, input_dim))
    wk = w(keys[1], (input_dim, input_dim))
    wv = w(keys[2], (input_dim, input_dim))
    bq = w(keys[3], (1, input_dim))
    bk = w(keys[4], (1, input_dim))
    bv = w(keys[5], (1, input_dim))
    return {
        'w_qkv': jnp.concatenate([wq, wk, wv], axis=1),   # (D, 3D)
        'b_qkv': jnp.concatenate([bq, bk, bv], axis=1),   # (1, 3D)
        'w_o':   w(keys[6], (input_dim, input_dim)),      # (D, D)
        'b_o':   w(keys[7], (1, input_dim)),              # (1, D)
    }


def mha_reference(x, params, *, num_heads=4):
    """Pure-JAX mirror of the PyTorch forward, for correctness checking."""
    B, n_filters, inner_dim = x.shape
    D = params['w_qkv'].shape[0]
    S = (n_filters * inner_dim) // D
    hd = D // num_heads
    xs = jnp.swapaxes(x, 1, 2).reshape(B, S, D)
    qkv = xs @ params['w_qkv'] + params['b_qkv']
    q, k, v = qkv[..., :D], qkv[..., D:2 * D], qkv[..., 2 * D:]

    def split(t):
        return t.reshape(B, S, num_heads, hd).transpose(0, 2, 1, 3)

    q, k, v = split(q), split(k), split(v)
    s = (q @ jnp.swapaxes(k, -1, -2)) / math.sqrt(hd)
    p = jax.nn.softmax(s, axis=-1)
    ctx = (p @ v).transpose(0, 2, 1, 3).reshape(B, S, D)
    out = ctx @ params['w_o'] + params['b_o']
    return jnp.swapaxes(out.reshape(B, inner_dim, n_filters), 1, 2)


if __name__ == "__main__":
    # Small shapes consistent with the module's usage (input_dim = inner_dim);
    # batch=8 exercises block_b=4 (M = 128 rows/step) and a grid of 2.
    batch, n_filters, inner_dim, num_heads = 8, 32, 32, 4
    input_dim = inner_dim

    key = jax.random.PRNGKey(0)
    pkey, xkey = jax.random.split(key)
    params = init_params(pkey, input_dim)
    x = jax.random.normal(xkey, (batch, n_filters, inner_dim), dtype=jnp.float32)

    fwd = jax.jit(functools.partial(multi_head_attention, num_heads=num_heads))
    out = fwd(x, params)
    jax.block_until_ready(out)

    assert out.shape == (batch, n_filters, inner_dim) and out.dtype == jnp.float32

    ref = mha_reference(x, params, num_heads=num_heads)
    max_err = float(jnp.max(jnp.abs(out - ref)))
    assert jnp.allclose(out, ref, atol=2e-3, rtol=2e-2), f"max abs diff {max_err}"
    print("KERNEL_OK")
</pallas_src>

<mosaic_0001>
module attributes {stable_mosaic.version = 11 : i64} {
  func.func @mha_kernel(%arg0: i32, %arg1: memref<4x32x32xf32, #tpu.memory_space<vmem>>, %arg2: memref<32x96xf32, #tpu.memory_space<vmem>>, %arg3: memref<1x96xf32, #tpu.memory_space<vmem>>, %arg4: memref<32x32xf32, #tpu.memory_space<vmem>>, %arg5: memref<1x32xf32, #tpu.memory_space<vmem>>, %arg6: memref<4x32x32xf32, #tpu.memory_space<vmem>>) attributes {dimension_semantics = [#tpu.dimension_semantics<parallel>], iteration_bounds = array<i64: 2>, scalar_prefetch = 0 : i64, scratch_operands = 0 : i64, tpu.core_type = #tpu.core_type<tc>, window_params = [{transform_indices = @transform_0, window_bounds = array<i64: 4, 32, 32>}, {pipeline_mode = #tpu.pipeline_mode<synchronous>, transform_indices = @transform_1, window_bounds = array<i64: 32, 96>}, {pipeline_mode = #tpu.pipeline_mode<synchronous>, transform_indices = @transform_2, window_bounds = array<i64: 1, 96>}, {pipeline_mode = #tpu.pipeline_mode<synchronous>, transform_indices = @transform_3, window_bounds = array<i64: 32, 32>}, {pipeline_mode = #tpu.pipeline_mode<synchronous>, transform_indices = @transform_4, window_bounds = array<i64: 1, 32>}, {transform_indices = @transform_5, window_bounds = array<i64: 4, 32, 32>}]} {
    %c0 = arith.constant 0 : index
    %c0_0 = arith.constant 0 : index
    %c0_1 = arith.constant 0 : index
    %0 = vector.load %arg1[%c0, %c0_0, %c0_1] : memref<4x32x32xf32, #tpu.memory_space<vmem>>, vector<4x32x32xf32>
    %1 = tpu.transpose %0, [0, 2, 1] : vector<4x32x32xf32> -> vector<4x32x32xf32>
    %2 = vector.shape_cast %1 : vector<4x32x32xf32> to vector<128x32xf32>
    %c0_2 = arith.constant 0 : index
    %c0_3 = arith.constant 0 : index
    %3 = vector.load %arg2[%c0_2, %c0_3] : memref<32x96xf32, #tpu.memory_space<vmem>>, vector<32x96xf32>
    %cst = arith.constant dense<0.000000e+00> : vector<128x96xf32>
    %4 = tpu.matmul %2, %3, %cst {dimension_numbers = #tpu.dot_dimension_numbers<[1], [0], [0], [1], [0, 0, 1, 1], [], []>} : vector<128x32xf32>, vector<32x96xf32>, vector<128x96xf32> -> vector<128x96xf32>
    %c0_4 = arith.constant 0 : index
    %c0_5 = arith.constant 0 : index
    %5 = vector.load %arg3[%c0_4, %c0_5] : memref<1x96xf32, #tpu.memory_space<vmem>>, vector<1x96xf32>
    %6 = vector.broadcast %5 : vector<1x96xf32> to vector<128x96xf32>
    %7 = arith.addf %4, %6 : vector<128x96xf32>
    %8 = vector.extract_strided_slice %7 {offsets = [0, 0], sizes = [128, 32], strides = [1, 1]} : vector<128x96xf32> to vector<128x32xf32>
    %cst_6 = arith.constant 0.353553385 : f32
    %9 = vector.broadcast %cst_6 : f32 to vector<128x32xf32>
    %10 = arith.mulf %8, %9 : vector<128x32xf32>
    %11 = vector.extract_strided_slice %7 {offsets = [0, 32], sizes = [128, 32], strides = [1, 1]} : vector<128x96xf32> to vector<128x32xf32>
    %12 = vector.extract_strided_slice %7 {offsets = [0, 64], sizes = [128, 32], strides = [1, 1]} : vector<128x96xf32> to vector<128x32xf32>
    %13 = vector.extract_strided_slice %10 {offsets = [0, 0], sizes = [128, 8], strides = [1, 1]} : vector<128x32xf32> to vector<128x8xf32>
    %14 = vector.shape_cast %13 : vector<128x8xf32> to vector<4x32x8xf32>
    %15 = vector.extract_strided_slice %10 {offsets = [0, 8], sizes = [128, 8], strides = [1, 1]} : vector<128x32xf32> to vector<128x8xf32>
    %16 = vector.shape_cast %15 : vector<128x8xf32> to vector<4x32x8xf32>
    %17 = vector.extract_strided_slice %10 {offsets = [0, 16], sizes = [128, 8], strides = [1, 1]} : vector<128x32xf32> to vector<128x8xf32>
    %18 = vector.shape_cast %17 : vector<128x8xf32> to vector<4x32x8xf32>
    %19 = vector.extract_strided_slice %10 {offsets = [0, 24], sizes = [128, 8], strides = [1, 1]} : vector<128x32xf32> to vector<128x8xf32>
    %20 = vector.shape_cast %19 : vector<128x8xf32> to vector<4x32x8xf32>
    %21 = tpu.concatenate %14, %16, %18, %20 in 0 : vector<4x32x8xf32>, vector<4x32x8xf32>, vector<4x32x8xf32>, vector<4x32x8xf32> -> vector<16x32x8xf32>
    %22 = vector.extract_strided_slice %11 {offsets = [0, 0], sizes = [128, 8], strides = [1, 1]} : vector<128x32xf32> to vector<128x8xf32>
    %23 = vector.shape_cast %22 : vector<128x8xf32> to vector<4x32x8xf32>
    %24 = vector.extract_strided_slice %11 {offsets = [0, 8], sizes = [128, 8], strides = [1, 1]} : vector<128x32xf32> to vector<128x8xf32>
    %25 = vector.shape_cast %24 : vector<128x8xf32> to vector<4x32x8xf32>
    %26 = vector.extract_strided_slice %11 {offsets = [0, 16], sizes = [128, 8], strides = [1, 1]} : vector<128x32xf32> to vector<128x8xf32>
    %27 = vector.shape_cast %26 : vector<128x8xf32> to vector<4x32x8xf32>
    %28 = vector.extract_strided_slice %11 {offsets = [0, 24], sizes = [128, 8], strides = [1, 1]} : vector<128x32xf32> to vector<128x8xf32>
    %29 = vector.shape_cast %28 : vector<128x8xf32> to vector<4x32x8xf32>
    %30 = tpu.concatenate %23, %25, %27, %29 in 0 : vector<4x32x8xf32>, vector<4x32x8xf32>, vector<4x32x8xf32>, vector<4x32x8xf32> -> vector<16x32x8xf32>
    %31 = vector.extract_strided_slice %12 {offsets = [0, 0], sizes = [128, 8], strides = [1, 1]} : vector<128x32xf32> to vector<128x8xf32>
    %32 = vector.shape_cast %31 : vector<128x8xf32> to vector<4x32x8xf32>
    %33 = vector.extract_strided_slice %12 {offsets = [0, 8], sizes = [128, 8], strides = [1, 1]} : vector<128x32xf32> to vector<128x8xf32>
    %34 = vector.shape_cast %33 : vector<128x8xf32> to vector<4x32x8xf32>
    %35 = vector.extract_strided_slice %12 {offsets = [0, 16], sizes = [128, 8], strides = [1, 1]} : vector<128x32xf32> to vector<128x8xf32>
    %36 = vector.shape_cast %35 : vector<128x8xf32> to vector<4x32x8xf32>
    %37 = vector.extract_strided_slice %12 {offsets = [0, 24], sizes = [128, 8], strides = [1, 1]} : vector<128x32xf32> to vector<128x8xf32>
    %38 = vector.shape_cast %37 : vector<128x8xf32> to vector<4x32x8xf32>
    %39 = tpu.concatenate %32, %34, %36, %38 in 0 : vector<4x32x8xf32>, vector<4x32x8xf32>, vector<4x32x8xf32>, vector<4x32x8xf32> -> vector<16x32x8xf32>
    "tpu.trace_start"() <{level = 10 : i32, message = "bqd,bkd->bqk"}> : () -> ()
    %cst_7 = arith.constant dense<0.000000e+00> : vector<16x32x32xf32>
    %40 = tpu.matmul %21, %30, %cst_7 {dimension_numbers = #tpu.dot_dimension_numbers<[2], [2], [1], [1], [0, 0, 0, 1, 1, 1], [0], [0]>} : vector<16x32x8xf32>, vector<16x32x8xf32>, vector<16x32x32xf32> -> vector<16x32x32xf32>
    "tpu.trace_stop"() : () -> ()
    %cst_8 = arith.constant dense<0xFF800000> : vector<16x32xf32>
    %41 = vector.multi_reduction <maximumf>, %40, %cst_8 [2] : vector<16x32x32xf32> to vector<16x32xf32>
    %42 = vector.shape_cast %41 : vector<16x32xf32> to vector<16x32x1xf32>
    %43 = vector.broadcast %42 : vector<16x32x1xf32> to vector<16x32x32xf32>
    %44 = arith.subf %40, %43 : vector<16x32x32xf32>
    %45 = math.exp %44 : vector<16x32x32xf32>
    %cst_9 = arith.constant dense<0.000000e+00> : vector<16x32xf32>
    %46 = vector.multi_reduction <add>, %45, %cst_9 [2] : vector<16x32x32xf32> to vector<16x32xf32>
    %47 = vector.shape_cast %46 : vector<16x32xf32> to vector<16x32x1xf32>
    %48 = vector.broadcast %47 : vector<16x32x1xf32> to vector<16x32x32xf32>
    %49 = arith.divf %45, %48 : vector<16x32x32xf32>
    "tpu.trace_start"() <{level = 10 : i32, message = "bqk,bkd->bqd"}> : () -> ()
    %cst_10 = arith.constant dense<0.000000e+00> : vector<16x32x8xf32>
    %50 = tpu.matmul %49, %39, %cst_10 {dimension_numbers = #tpu.dot_dimension_numbers<[2], [1], [1], [2], [0, 0, 0, 1, 1, 2], [0], [0]>} : vector<16x32x32xf32>, vector<16x32x8xf32>, vector<16x32x8xf32> -> vector<16x32x8xf32>
    "tpu.trace_stop"() : () -> ()
    %51 = vector.extract_strided_slice %50 {offsets = [0, 0, 0], sizes = [4, 32, 8], strides = [1, 1, 1]} : vector<16x32x8xf32> to vector<4x32x8xf32>
    %52 = vector.shape_cast %51 : vector<4x32x8xf32> to vector<128x8xf32>
    %53 = vector.extract_strided_slice %50 {offsets = [4, 0, 0], sizes = [4, 32, 8], strides = [1, 1, 1]} : vector<16x32x8xf32> to vector<4x32x8xf32>
    %54 = vector.shape_cast %53 : vector<4x32x8xf32> to vector<128x8xf32>
    %55 = vector.extract_strided_slice %50 {offsets = [8, 0, 0], sizes = [4, 32, 8], strides = [1, 1, 1]} : vector<16x32x8xf32> to vector<4x32x8xf32>
    %56 = vector.shape_cast %55 : vector<4x32x8xf32> to vector<128x8xf32>
    %57 = vector.extract_strided_slice %50 {offsets = [12, 0, 0], sizes = [4, 32, 8], strides = [1, 1, 1]} : vector<16x32x8xf32> to vector<4x32x8xf32>
    %58 = vector.shape_cast %57 : vector<4x32x8xf32> to vector<128x8xf32>
    %59 = tpu.concatenate %52, %54, %56, %58 in 1 : vector<128x8xf32>, vector<128x8xf32>, vector<128x8xf32>, vector<128x8xf32> -> vector<128x32xf32>
    %c0_11 = arith.constant 0 : index
    %c0_12 = arith.constant 0 : index
    %60 = vector.load %arg4[%c0_11, %c0_12] : memref<32x32xf32, #tpu.memory_space<vmem>>, vector<32x32xf32>
    %cst_13 = arith.constant dense<0.000000e+00> : vector<128x32xf32>
    %61 = tpu.matmul %59, %60, %cst_13 {dimension_numbers = #tpu.dot_dimension_numbers<[1], [0], [0], [1], [0, 0, 1, 1], [], []>} : vector<128x32xf32>, vector<32x32xf32>, vector<128x32xf32> -> vector<128x32xf32>
    %c0_14 = arith.constant 0 : index
    %c0_15 = arith.constant 0 : index
    %62 = vector.load %arg5[%c0_14, %c0_15] : memref<1x32xf32, #tpu.memory_space<vmem>>, vector<1x32xf32>
    %63 = vector.broadcast %62 : vector<1x32xf32> to vector<128x32xf32>
    %64 = arith.addf %61, %63 : vector<128x32xf32>
    %65 = vector.shape_cast %64 : vector<128x32xf32> to vector<4x32x32xf32>
    %66 = tpu.transpose %65, [0, 2, 1] : vector<4x32x32xf32> -> vector<4x32x32xf32>
    %c0_16 = arith.constant 0 : index
    %c0_17 = arith.constant 0 : index
    %c0_18 = arith.constant 0 : index
    %67 = vector.load %arg6[%c0_16, %c0_17, %c0_18] : memref<4x32x32xf32, #tpu.memory_space<vmem>>, vector<4x32x32xf32>
    tpu.vector_store %arg6[%c0_16, %c0_17, %c0_18], %66 {strides = array<i32>} : memref<4x32x32xf32, #tpu.memory_space<vmem>>, vector<4x32x32xf32>,
    return
  }
  func.func @transform_0(%arg0: i32) -> (i32, i32, i32) {
    %c0_i32 = arith.constant 0 : i32
    %c0_i32_0 = arith.constant 0 : i32
    %c0_i32_1 = arith.constant 0 : i32
    return %arg0, %c0_i32, %c0_i32_0 : i32, i32, i32
  }
  func.func @transform_1(%arg0: i32) -> (i32, i32) {
    %c0_i32 = arith.constant 0 : i32
    %c0_i32_0 = arith.constant 0 : i32
    %c0_i32_1 = arith.constant 0 : i32
    return %c0_i32, %c0_i32_0 : i32, i32
  }
  func.func @transform_2(%arg0: i32) -> (i32, i32) {
    %c0_i32 = arith.constant 0 : i32
    %c0_i32_0 = arith.constant 0 : i32
    %c0_i32_1 = arith.constant 0 : i32
    return %c0_i32, %c0_i32_0 : i32, i32
  }
  func.func @transform_3(%arg0: i32) -> (i32, i32) {
    %c0_i32 = arith.constant 0 : i32
    %c0_i32_0 = arith.constant 0 : i32
    %c0_i32_1 = arith.constant 0 : i32
    return %c0_i32, %c0_i32_0 : i32, i32
  }
  func.func @transform_4(%arg0: i32) -> (i32, i32) {
    %c0_i32 = arith.constant 0 : i32
    %c0_i32_0 = arith.constant 0 : i32
    %c0_i32_1 = arith.constant 0 : i32
    return %c0_i32, %c0_i32_0 : i32, i32
  }
  func.func @transform_5(%arg0: i32) -> (i32, i32, i32) {
    %c0_i32 = arith.constant 0 : i32
    %c0_i32_0 = arith.constant 0 : i32
    %c0_i32_1 = arith.constant 0 : i32
    return %arg0, %c0_i32, %c0_i32_0 : i32, i32, i32
  }
}

</mosaic_0001>

<llo_original>
// kernel: multi_head_attention.1
$region0: #{multi_head_attention.1}
  #allocation0 [shape = 'u32[]', space=smem, size = 0x4, offset = 0x4, fixed_abs, tag = 'smem constant byte address 0x4 - core index']
  #allocation1 [shape = 'u32[144,128]{1,0:T(1,128)}', space=vmem, size = 0x12000, scoped, tag = 'internal scratch']
  %s0 = inlined_call_operand.hbm [shape: f32[8,32,32], index: 0, kind: input, shape index: {}]
  %s1 = inlined_call_operand.hbm [shape: f32[32,96], index: 1, kind: input, shape index: {}]
  %s2 = inlined_call_operand.vmem [shape: f32[1,96], index: 2, kind: input, shape index: {}]
  %s3 = inlined_call_operand.hbm [shape: f32[32,32], index: 3, kind: input, shape index: {}]
  %s4 = inlined_call_operand.hbm [shape: f32[1,32], index: 4, kind: input, shape index: {}]
  %s5 = inlined_call_operand.hbm [shape: f32[8,32,32], index: 5, kind: output, shape index: {}]
  %s6 = sld [smem:[#allocation0]]
  $region69: #{multi_head_attention.1} parent=0
    _
  %s8 = ssub.s32 1, %s6
  %s9 = scalar_select 0, %s8, %s6
  $region1: #{multi_head_attention.1} parent=0
    #allocation2 [shape = 'u8[131072]{0}', space=vmem, size = 0x20000, scoped, tag = 'input window, operand 0']
    #allocation3 [shape = 's32[2]{0}', space=sflag, size = 0x8, scoped, tag = 'scoped memory for multi_head_attention.1']
    #allocation4 [shape = 's32[2]{0}', space=sflag, size = 0x8, scoped, tag = 'scoped memory for multi_head_attention.1']
    #allocation5 [shape = 'u8[16384]{0}', space=vmem, size = 0x4000, scoped, tag = 'input window, operand 1, single buffered']
    #allocation6 [shape = 's32[1]{0}', space=sflag, size = 0x4, scoped, tag = 'scoped memory for multi_head_attention.1']
    #allocation7 [shape = 'u8[16384]{0}', space=vmem, size = 0x4000, scoped, tag = 'input window, operand 3, single buffered']
    #allocation8 [shape = 'u8[512]{0}', space=vmem, size = 0x400, scoped, tag = 'input window, operand 4, single buffered']
    #allocation9 [shape = 's32[1]{0}', space=sflag, size = 0x4, scoped, tag = 'scoped memory for multi_head_attention.1']
    #allocation10 [shape = 'u8[131072]{0}', space=vmem, size = 0x20000, scoped, tag = 'output window, operand 0']
    %10 = vsyncpa [#allocation3], 0
    %s11 = scalar_lea.sflag [#allocation3], 1
    %12 = vsyncpa %s11, 0
    %13 = vsyncpa [#allocation6], 0
    %14 = vsyncpa [#allocation9], 0
    %15 = vsyncpa [#allocation4], 0
    %s16 = scalar_lea.sflag [#allocation4], 1
    %17 = vsyncpa %s16, 0
    loop: start=0, step=1, limit=4
    $region2: #{multi_head_attention.1} parent=1 // loop_pre_header
      _
    $region3: #{multi_head_attention.1} parent=1 // loop_header
      %s19 = sphi 0, %s23
      %p20 = scmp.ge.s32.totalorder %s19, 4
      %s29 = sphi 0, %s31
      %s32 = sphi 0, %s29
      %s33 = sphi 0, %s32
      %s49 = sphi 0, %s33
      %s53 = sphi 0, %s53
      %s55 = sphi 0, %s53
      %s56 = sphi 0, %s55
      %s70 = sphi 0, %s56
      %s74 = sphi 0, %s74
      %s76 = sphi 0, %s74
      %s77 = sphi 0, %s76
      %s91 = sphi 0, %s77
      %s95 = sphi 0, %s95
      %s97 = sphi 0, %s95
      %s98 = sphi 0, %s97
      %s112 = sphi 0, %s98
      %s116 = sphi 0, %s116
      %s118 = sphi 0, %s116
      %s119 = sphi 0, %s118
      %s133 = sphi 0, %s119
      %s139 = sphi 0, %s141
      %s142 = sphi 0, %s139
      %s143 = sphi 0, %s142
      %s159 = sphi 0, %s143
    $region4: #{multi_head_attention.1} parent=1 // loop_header_branch
      %22 = sbr.rel (%p20) target = $region8
    $region5: #{multi_head_attention.1} parent=1 // loop_body
      %s24 = ssub.s32 %s19, 1
      %s25 = ssub.s32 %s19, 2
      %s26 = sadd.s32 %s19, 1
      %s27 = ssub.s32 %s19, %s26
      %p28 = scmp.eq.s32.totalorder %s27, 0
      %s30 = sadd.s32 %s29, 1
      %s31 = scalar_select %p28, %s29, %s30
      %p34 = pneg %p28
      %p35 = scmp.eq.s32.totalorder %s19, 1
      %p36 = por %p34, %p35
      %p37 = scmp.ne.s32.totalorder %s29, %s32
      %p38 = scmp.eq.s32.totalorder %s19, 0
      %p39 = por %p37, %p38
      %p40 = scmp.ne.s32.totalorder %s29, %s32
      %p41 = scmp.eq.s32.totalorder %s24, 1
      %p42 = por %p40, %p41
      %p43 = scmp.ne.s32.totalorder %s32, %s33
      %p44 = scmp.eq.s32.totalorder %s24, 0
      %p45 = por %p43, %p44
      %p46 = scmp.ne.s32.totalorder %s32, %s33
      %p47 = scmp.eq.s32.totalorder %s25, 1
      %p48 = por %p46, %p47
      %p50 = scmp.ne.s32.totalorder %s33, %s49
      %p51 = scmp.eq.s32.totalorder %s25, 0
      %p52 = por %p50, %p51
      %s54 = sadd.s32 %s53, 1
      %p57 = scmp.eq.s32.totalorder %s19, 1
      %p58 = scmp.ne.s32.totalorder %s53, %s55
      %p59 = scmp.eq.s32.totalorder %s19, 0
      %p60 = por %p58, %p59
      %p61 = scmp.ne.s32.totalorder %s53, %s55
      %p62 = scmp.eq.s32.totalorder %s24, 1
      %p63 = por %p61, %p62
      %p64 = scmp.ne.s32.totalorder %s55, %s56
      %p65 = scmp.eq.s32.totalorder %s24, 0
      %p66 = por %p64, %p65
      %p67 = scmp.ne.s32.totalorder %s55, %s56
      %p68 = scmp.eq.s32.totalorder %s25, 1
      %p69 = por %p67, %p68
      %p71 = scmp.ne.s32.totalorder %s56, %s70
      %p72 = scmp.eq.s32.totalorder %s25, 0
      %p73 = por %p71, %p72
      %s75 = sadd.s32 %s74, 1
      %p78 = scmp.eq.s32.totalorder %s19, 1
      %p79 = scmp.ne.s32.totalorder %s74, %s76
      %p80 = scmp.eq.s32.totalorder %s19, 0
      %p81 = por %p79, %p80
      %p82 = scmp.ne.s32.totalorder %s74, %s76
      %p83 = scmp.eq.s32.totalorder %s24, 1
      %p84 = por %p82, %p83
      %p85 = scmp.ne.s32.totalorder %s76, %s77
      %p86 = scmp.eq.s32.totalorder %s24, 0
      %p87 = por %p85, %p86
      %p88 = scmp.ne.s32.totalorder %s76, %s77
      %p89 = scmp.eq.s32.totalorder %s25, 1
      %p90 = por %p88, %p89
      %p92 = scmp.ne.s32.totalorder %s77, %s91
      %p93 = scmp.eq.s32.totalorder %s25, 0
      %p94 = por %p92, %p93
      %s96 = sadd.s32 %s95, 1
      %p99 = scmp.eq.s32.totalorder %s19, 1
      %p100 = scmp.ne.s32.totalorder %s95, %s97
      %p101 = scmp.eq.s32.totalorder %s19, 0
      %p102 = por %p100, %p101
      %p103 = scmp.ne.s32.totalorder %s95, %s97
      %p104 = scmp.eq.s32.totalorder %s24, 1
      %p105 = por %p103, %p104
      %p106 = scmp.ne.s32.totalorder %s97, %s98
      %p107 = scmp.eq.s32.totalorder %s24, 0
      %p108 = por %p106, %p107
      %p109 = scmp.ne.s32.totalorder %s97, %s98
      %p110 = scmp.eq.s32.totalorder %s25, 1
      %p111 = por %p109, %p110
      %p113 = scmp.ne.s32.totalorder %s98, %s112
      %p114 = scmp.eq.s32.totalorder %s25, 0
      %p115 = por %p113, %p114
      %s117 = sadd.s32 %s116, 1
      %p120 = scmp.eq.s32.totalorder %s19, 1
      %p121 = scmp.ne.s32.totalorder %s116, %s118
      %p122 = scmp.eq.s32.totalorder %s19, 0
      %p123 = por %p121, %p122
      %p124 = scmp.ne.s32.totalorder %s116, %s118
      %p125 = scmp.eq.s32.totalorder %s24, 1
      %p126 = por %p124, %p125
      %p127 = scmp.ne.s32.totalorder %s118, %s119
      %p128 = scmp.eq.s32.totalorder %s24, 0
      %p129 = por %p127, %p128
      %p130 = scmp.ne.s32.totalorder %s118, %s119
      %p131 = scmp.eq.s32.totalorder %s25, 1
      %p132 = por %p130, %p131
      %p134 = scmp.ne.s32.totalorder %s119, %s133
      %p135 = scmp.eq.s32.totalorder %s25, 0
      %p136 = por %p134, %p135
      %s137 = ssub.s32 %s19, %s26
      %p138 = scmp.eq.s32.totalorder %s137, 0
      %s140 = sadd.s32 %s139, 1
      %s141 = scalar_select %p138, %s139, %s140
      %p144 = pneg %p138
      %p145 = scmp.eq.s32.totalorder %s19, 1
      %p146 = por %p144, %p145
      %p147 = scmp.ne.s32.totalorder %s139, %s142
      %p148 = scmp.eq.s32.totalorder %s19, 0
      %p149 = por %p147, %p148
      %p150 = scmp.ne.s32.totalorder %s139, %s142
      %p151 = scmp.eq.s32.totalorder %s24, 1
      %p152 = por %p150, %p151
      %p153 = scmp.ne.s32.totalorder %s142, %s143
      %p154 = scmp.eq.s32.totalorder %s24, 0
      %p155 = por %p153, %p154
      %p156 = scmp.ne.s32.totalorder %s142, %s143
      %p157 = scmp.eq.s32.totalorder %s25, 1
      %p158 = por %p156, %p157
      %p160 = scmp.ne.s32.totalorder %s143, %s159
      %p161 = scmp.eq.s32.totalorder %s25, 0
      %p162 = por %p160, %p161
      %p163 = scmp.le.s32.totalorder 1, %s19
      %p164 = scmp.lt.s32.totalorder %s19, 3
      %p165 = pnand %p163, %p164
      %p166 = pneg %p165
      // Predicated region
      $region9: #{multi_head_attention.1} parent=5 // pred_check
        _
      $region10: #{multi_head_attention.1} parent=5 // pred_check_branch
        %168 = sbr.rel (%p165) target = $region12
      $region11: #{multi_head_attention.1} parent=5 // pred_region
        %s169 = ssub.s32 %s19, 1
        // Predicated region
        $region13: #{multi_head_attention.1} parent=11 // pred_check
          %p170 = pneg %p66
        $region14: #{multi_head_attention.1} parent=11 // pred_check_branch
          %172 = sbr.rel (%p170) target = $region16
        $region15: #{multi_head_attention.1} parent=11 // pred_region
          %s174 = ssub.s32 512, 512
          %175 = vsyncadd [#allocation6], %s174
          %s176 = sshll.u32 [#allocation5], 4
          %s177 = int_to_ptr.vmem [resolvable:$true] %s176
          %182 = dma.hbm_to_vmem [thread:$0]  %s1, 512, %s177, [#allocation6], 128, 128, 8
        $region16: #{multi_head_attention.1} parent=11 // pred_fallthru
          _
        // Predicated region
        $region17: #{multi_head_attention.1} parent=11 // pred_check
          %p183 = pneg %p87
        $region18: #{multi_head_attention.1} parent=11 // pred_check_branch
          %185 = sbr.rel (%p183) target = $region20
        $region19: #{multi_head_attention.1} parent=11 // pred_region
          _
        $region20: #{multi_head_attention.1} parent=11 // pred_fallthru
          _
        // Predicated region
        $region21: #{multi_head_attention.1} parent=11 // pred_check
          %p186 = pneg %p108
        $region22: #{multi_head_attention.1} parent=11 // pred_check_branch
          %188 = sbr.rel (%p186) target = $region24
        $region23: #{multi_head_attention.1} parent=11 // pred_region
          %s190 = ssub.s32 512, 512
          %191 = vsyncadd [#allocation6], %s190
          %s192 = sshll.u32 [#allocation7], 4
          %s193 = int_to_ptr.vmem [resolvable:$true] %s192
          %198 = dma.hbm_to_vmem [thread:$0]  %s3, 512, %s193, [#allocation6], 128, 128, 8
        $region24: #{multi_head_attention.1} parent=11 // pred_fallthru
          _
        // Predicated region
        $region25: #{multi_head_attention.1} parent=11 // pred_check
          %p199 = pneg %p129
        $region26: #{multi_head_attention.1} parent=11 // pred_check_branch
          %201 = sbr.rel (%p199) target = $region28
        $region27: #{multi_head_attention.1} parent=11 // pred_region
          %s203 = ssub.s32 16, 16
          %204 = vsyncadd [#allocation9], %s203
          %s206 = sshll.u32 [#allocation8], 4
          %s207 = int_to_ptr.vmem [resolvable:$true] %s206
          %209 = dma.hbm_to_vmem [thread:$0]  %s4, 16, %s207, [#allocation9]
        $region28: #{multi_head_attention.1} parent=11 // pred_fallthru
          _
      $region12: #{multi_head_attention.1} parent=5 // pred_fallthru
        _
      %p210 = scmp.lt.s32.totalorder %s19, 2
      // Predicated region
      $region29: #{multi_head_attention.1} parent=5 // pred_check
        %p211 = pneg %p210
      $region30: #{multi_head_attention.1} parent=5 // pred_check_branch
        %213 = sbr.rel (%p211) target = $region32
      $region31: #{multi_head_attention.1} parent=5 // pred_region
        // Predicated region
        $region33: #{multi_head_attention.1} parent=31 // pred_check
          %p214 = pneg %p39
        $region34: #{multi_head_attention.1} parent=31 // pred_check_branch
          %216 = sbr.rel (%p214) target = $region36
        $region35: #{multi_head_attention.1} parent=31 // pred_region
          %s217 = sand.u32 %s29, 1
          %s218 = scalar_lea.sflag [#allocation3], %s217
          %s219 = sand.u32 %s29, 1
          %s220 = smul.addr %s219, 128
          %s221 = scalar_lea.vmem [#allocation2], %s220
          %s222 = smul.u32 4, %s19
          %s224 = ssub.s32 2048, 2048
          %225 = vsyncadd %s218, %s224
          %s226 = smul.addr %s222, 4
          %s227 = smul.addr %s226, 128
          %s228 = scalar_lea.hbm %s0, %s227
          %s229 = sshll.u32 %s221, 4
          %s230 = int_to_ptr.vmem [resolvable:$true] %s229
          %235 = dma.hbm_to_vmem [thread:$0]  %s228, 2048, %s230, %s218, 128, 128, 8
        $region36: #{multi_head_attention.1} parent=31 // pred_fallthru
          _
      $region32: #{multi_head_attention.1} parent=5 // pred_fallthru
        _
      %p236 = scmp.le.s32.totalorder 1, %s19
      %p237 = scmp.lt.s32.totalorder %s19, 3
      %p238 = pnand %p236, %p237
      %p239 = pneg %p238
      // Predicated region
      $region37: #{multi_head_attention.1} parent=5 // pred_check
        _
      $region38: #{multi_head_attention.1} parent=5 // pred_check_branch
        %241 = sbr.rel (%p238) target = $region40
      $region39: #{multi_head_attention.1} parent=5 // pred_region
        %s242 = ssub.s32 %s19, 1
        %s243 = sand.u32 %s32, 1
        %s244 = scalar_lea.sflag [#allocation3], %s243
        %s245 = sand.u32 %s32, 1
        %s246 = smul.addr %s245, 128
        %s247 = scalar_lea.vmem [#allocation2], %s246
        // Predicated region
        $region41: #{multi_head_attention.1} parent=39 // pred_check
          %p248 = pneg %p45
        $region42: #{multi_head_attention.1} parent=39 // pred_check_branch
          %250 = sbr.rel (%p248) target = $region44
        $region43: #{multi_head_attention.1} parent=39 // pred_region
          %251 = dma.done %s244, 2048
        $region44: #{multi_head_attention.1} parent=39 // pred_fallthru
          _
        // Predicated region
        $region45: #{multi_head_attention.1} parent=39 // pred_check
          %p252 = pneg %p66
        $region46: #{multi_head_attention.1} parent=39 // pred_check_branch
          %254 = sbr.rel (%p252) target = $region48
        $region47: #{multi_head_attention.1} parent=39 // pred_region
          %255 = dma.done [#allocation6], 512
        $region48: #{multi_head_attention.1} parent=39 // pred_fallthru
          _
        // Predicated region
        $region49: #{multi_head_attention.1} parent=39 // pred_check
          %p256 = pneg %p108
        $region50: #{multi_head_attention.1} parent=39 // pred_check_branch
          %258 = sbr.rel (%p256) target = $region52
        $region51: #{multi_head_attention.1} parent=39 // pred_region
          %259 = dma.done [#allocation6], 512
        $region52: #{multi_head_attention.1} parent=39 // pred_fallthru
          _
        // Predicated region
        $region53: #{multi_head_attention.1} parent=39 // pred_check
          %p260 = pneg %p129
        $region54: #{multi_head_attention.1} parent=39 // pred_check_branch
          %262 = sbr.rel (%p260) target = $region56
        $region55: #{multi_head_attention.1} parent=39 // pred_region
          %263 = dma.done [#allocation9], 16
        $region56: #{multi_head_attention.1} parent=39 // pred_fallthru
          _
        %s264 = sand.u32 %s32, 1
        %s265 = scalar_lea.sflag [#allocation3], %s264
        %s266 = sand.u32 %s32, 1
        %s267 = smul.addr %s266, 128
        %s268 = scalar_lea.vmem [#allocation2], %s267
        %p269 = pneg %p45
        %p270 = pneg %p42
        %p271 = pneg %p66
        %p272 = pneg %p63
        %p273 = pneg %p87
        %p274 = pneg %p84
        %p275 = pneg %p108
        %p276 = pneg %p105
        %p277 = pneg %p129
        %p278 = pneg %p126
        %p279 = pneg %p155
        %p280 = pneg %p152
        %s281 = sand.u32 %s142, 1
        %s282 = scalar_lea.sflag [#allocation4], %s281
        %s283 = sand.u32 %s142, 1
        %s284 = smul.addr %s283, 128
        %s285 = scalar_lea.vmem [#allocation10], %s284
        %s286 = smul.u32 4, %s24
        %s287 = smul.u32 4, %s24
        %v288 = vld [vmem:[%s247] sm:$0xff]
        %v289 = vld [vmem:[%s247 + $0x8] sm:$0xff]
        %v290 = vld [vmem:[%s247 + $0x10] sm:$0xff]
        %v291 = vld [vmem:[%s247 + $0x18] sm:$0xff]
        %v292 = vld [vmem:[%s247 + $0x20] sm:$0xff]
        %v293 = vld [vmem:[%s247 + $0x28] sm:$0xff]
        %v294 = vld [vmem:[%s247 + $0x30] sm:$0xff]
        %v295 = vld [vmem:[%s247 + $0x38] sm:$0xff]
        %v296 = vld [vmem:[%s247 + $0x40] sm:$0xff]
        %v297 = vld [vmem:[%s247 + $0x48] sm:$0xff]
        %v298 = vld [vmem:[%s247 + $0x50] sm:$0xff]
        %v299 = vld [vmem:[%s247 + $0x58] sm:$0xff]
        %v300 = vld [vmem:[%s247 + $0x60] sm:$0xff]
        %v301 = vld [vmem:[%s247 + $0x68] sm:$0xff]
        %v302 = vld [vmem:[%s247 + $0x70] sm:$0xff]
        %v303 = vld [vmem:[%s247 + $0x78] sm:$0xff]
        %304 = vxpose.xlu0.b32.start [1/16] %v288, 128
        %305 = vxpose.xlu0.b32.cont [2/16] %v289, 128
        %306 = vxpose.xlu0.b32.cont [3/16] %v290, 128
        %307 = vxpose.xlu0.b32.cont [4/16] %v291, 128
        %308 = vxpose.xlu0.b32.cont [5/16] 0.0, 128
        %309 = vxpose.xlu0.b32.cont [6/16] 0.0, 128
        %310 = vxpose.xlu0.b32.cont [7/16] 0.0, 128
        %311 = vxpose.xlu0.b32.cont [8/16] 0.0, 128
        %312 = vxpose.xlu0.b32.cont [9/16] 0.0, 128
        %313 = vxpose.xlu0.b32.cont [10/16] 0.0, 128
        %314 = vxpose.xlu0.b32.cont [11/16] 0.0, 128
        %315 = vxpose.xlu0.b32.cont [12/16] 0.0, 128
        %316 = vxpose.xlu0.b32.cont [13/16] 0.0, 128
        %317 = vxpose.xlu0.b32.cont [14/16] 0.0, 128
        %318 = vxpose.xlu0.b32.cont [15/16] 0.0, 128
        %319 = vxpose.xlu0.b32.end [16/16] 0.0, 128
        %v320 = vpop.trf.xlu0
        %v321 = vpop.trf.xlu0
        %v322 = vpop.trf.xlu0
        %v323 = vpop.trf.xlu0
        %v324 = vpop.trf.xlu0
        %v325 = vpop.trf.xlu0
        %v326 = vpop.trf.xlu0
        %v327 = vpop.trf.xlu0
        %v328 = vpop.trf.xlu0
        %v329 = vpop.trf.xlu0
        %v330 = vpop.trf.xlu0
        %v331 = vpop.trf.xlu0
        %v332 = vpop.trf.xlu0
        %v333 = vpop.trf.xlu0
        %v334 = vpop.trf.xlu0
        %v335 = vpop.trf.xlu0
        %336 = vxpose.xlu0.b32.start [1/16] %v292, 128
        %337 = vxpose.xlu0.b32.cont [2/16] %v293, 128
        %338 = vxpose.xlu0.b32.cont [3/16] %v294, 128
        %339 = vxpose.xlu0.b32.cont [4/16] %v295, 128
        %340 = vxpose.xlu0.b32.cont [5/16] 0.0, 128
        %341 = vxpose.xlu0.b32.cont [6/16] 0.0, 128
        %342 = vxpose.xlu0.b32.cont [7/16] 0.0, 128
        %343 = vxpose.xlu0.b32.cont [8/16] 0.0, 128
        %344 = vxpose.xlu0.b32.cont [9/16] 0.0, 128
        %345 = vxpose.xlu0.b32.cont [10/16] 0.0, 128
        %346 = vxpose.xlu0.b32.cont [11/16] 0.0, 128
        %347 = vxpose.xlu0.b32.cont [12/16] 0.0, 128
        %348 = vxpose.xlu0.b32.cont [13/16] 0.0, 128
        %349 = vxpose.xlu0.b32.cont [14/16] 0.0, 128
        %350 = vxpose.xlu0.b32.cont [15/16] 0.0, 128
        %351 = vxpose.xlu0.b32.end [16/16] 0.0, 128
        %v352 = vpop.trf.xlu0
        %v353 = vpop.trf.xlu0
        %v354 = vpop.trf.xlu0
        %v355 = vpop.trf.xlu0
        %v356 = vpop.trf.xlu0
        %v357 = vpop.trf.xlu0
        %v358 = vpop.trf.xlu0
        %v359 = vpop.trf.xlu0
        %v360 = vpop.trf.xlu0
        %v361 = vpop.trf.xlu0
        %v362 = vpop.trf.xlu0
        %v363 = vpop.trf.xlu0
        %v364 = vpop.trf.xlu0
        %v365 = vpop.trf.xlu0
        %v366 = vpop.trf.xlu0
        %v367 = vpop.trf.xlu0
        %368 = vxpose.xlu0.b32.start [1/16] %v296, 128
        %369 = vxpose.xlu0.b32.cont [2/16] %v297, 128
        %370 = vxpose.xlu0.b32.cont [3/16] %v298, 128
        %371 = vxpose.xlu0.b32.cont [4/16] %v299, 128
        %372 = vxpose.xlu0.b32.cont [5/16] 0.0, 128
        %373 = vxpose.xlu0.b32.cont [6/16] 0.0, 128
        %374 = vxpose.xlu0.b32.cont [7/16] 0.0, 128
        %375 = vxpose.xlu0.b32.cont [8/16] 0.0, 128
        %376 = vxpose.xlu0.b32.cont [9/16] 0.0, 128
        %377 = vxpose.xlu0.b32.cont [10/16] 0.0, 128
        %378 = vxpose.xlu0.b32.cont [11/16] 0.0, 128
        %379 = vxpose.xlu0.b32.cont [12/16] 0.0, 128
        %380 = vxpose.xlu0.b32.cont [13/16] 0.0, 128
        %381 = vxpose.xlu0.b32.cont [14/16] 0.0, 128
        %382 = vxpose.xlu0.b32.cont [15/16] 0.0, 128
        %383 = vxpose.xlu0.b32.end [16/16] 0.0, 128
        %v384 = vpop.trf.xlu0
        %v385 = vpop.trf.xlu0
        %v386 = vpop.trf.xlu0
        %v387 = vpop.trf.xlu0
        %v388 = vpop.trf.xlu0
        %v389 = vpop.trf.xlu0
        %v390 = vpop.trf.xlu0
        %v391 = vpop.trf.xlu0
        %v392 = vpop.trf.xlu0
        %v393 = vpop.trf.xlu0
        %v394 = vpop.trf.xlu0
        %v395 = vpop.trf.xlu0
        %v396 = vpop.trf.xlu0
        %v397 = vpop.trf.xlu0
        %v398 = vpop.trf.xlu0
        %v399 = vpop.trf.xlu0
        %400 = vxpose.xlu0.b32.start [1/16] %v300, 128
        %401 = vxpose.xlu0.b32.cont [2/16] %v301, 128
        %402 = vxpose.xlu0.b32.cont [3/16] %v302, 128
        %403 = vxpose.xlu0.b32.cont [4/16] %v303, 128
        %404 = vxpose.xlu0.b32.cont [5/16] 0.0, 128
        %405 = vxpose.xlu0.b32.cont [6/16] 0.0, 128
        %406 = vxpose.xlu0.b32.cont [7/16] 0.0, 128
        %407 = vxpose.xlu0.b32.cont [8/16] 0.0, 128
        %408 = vxpose.xlu0.b32.cont [9/16] 0.0, 128
        %409 = vxpose.xlu0.b32.cont [10/16] 0.0, 128
        %410 = vxpose.xlu0.b32.cont [11/16] 0.0, 128
        %411 = vxpose.xlu0.b32.cont [12/16] 0.0, 128
        %412 = vxpose.xlu0.b32.cont [13/16] 0.0, 128
        %413 = vxpose.xlu0.b32.cont [14/16] 0.0, 128
        %414 = vxpose.xlu0.b32.cont [15/16] 0.0, 128
        %415 = vxpose.xlu0.b32.end [16/16] 0.0, 128
        %v416 = vpop.trf.xlu0
        %v417 = vpop.trf.xlu0
        %v418 = vpop.trf.xlu0
        %v419 = vpop.trf.xlu0
        %v420 = vpop.trf.xlu0
        %v421 = vpop.trf.xlu0
        %v422 = vpop.trf.xlu0
        %v423 = vpop.trf.xlu0
        %v424 = vpop.trf.xlu0
        %v425 = vpop.trf.xlu0
        %v426 = vpop.trf.xlu0
        %v427 = vpop.trf.xlu0
        %v428 = vpop.trf.xlu0
        %v429 = vpop.trf.xlu0
        %v430 = vpop.trf.xlu0
        %v431 = vpop.trf.xlu0
        %v432 = vld [vmem:[#allocation5] sm:$0xff]
        %v433 = vld [vmem:[#allocation5 + $0x8] sm:$0xff]
        %v434 = vld [vmem:[#allocation5 + $0x10] sm:$0xff]
        %v435 = vld [vmem:[#allocation5 + $0x18] sm:$0xff]
        %v436 = vld [vmem:[%s2] sm:$0x1]
        %v438 = vlaneseq
        %v439 = vshrl.u32 %v438, 7
        %v440 = vsub.s32 0, %v439
        %v441 = vrot.slane %v436, %v440
        %vm443 = vcmask 261120
        %v445 = vsel %vm443, %v320, 0
        %v448 = vsel %vm443, %v321, 0
        %v451 = vsel %vm443, %v322, 0
        %v454 = vsel %vm443, %v323, 0
        %v457 = vsel %vm443, %v352, 0
        %v460 = vsel %vm443, %v353, 0
        %v463 = vsel %vm443, %v354, 0
        %v466 = vsel %vm443, %v355, 0
        %v469 = vsel %vm443, %v384, 0
        %v472 = vsel %vm443, %v385, 0
        %v475 = vsel %vm443, %v386, 0
        %v478 = vsel %vm443, %v387, 0
        %v481 = vsel %vm443, %v416, 0
        %v484 = vsel %vm443, %v417, 0
        %v487 = vsel %vm443, %v418, 0
        %v490 = vsel %vm443, %v419, 0
        %492 = vmatprep.subr.mxu0 0.0
        %493 = vmatpush1.msra.mxu0 0.0
        %494 = vmatprep.subr.mxu0 0.0
        %495 = vmatpush1.msra.mxu0 0.0
        %496 = vmatprep.subr.mxu0 0.0
        %497 = vmatpush1.msra.mxu0 0.0
        %498 = vmatprep.subr.mxu0 0.0
        %499 = vmatpush1.msra.mxu0 0.0
        %500 = vmatprep.subr.mxu0 0.0
        %501 = vmatpush1.msra.mxu0 0.0
        %502 = vmatprep.subr.mxu0 0.0
        %503 = vmatpush1.msra.mxu0 0.0
        %504 = vmatprep.subr.mxu0 0.0
        %505 = vmatpush1.msra.mxu0 0.0
        %506 = vmatprep.subr.mxu0 0.0
        %507 = vmatpush1.msra.mxu0 0.0
        %508 = vmatprep.subr.mxu0 0.0
        %509 = vmatpush1.msra.mxu0 0.0
        %510 = vmatprep.subr.mxu0 0.0
        %511 = vmatpush1.msra.mxu0 0.0
        %512 = vmatprep.subr.mxu0 0.0
        %513 = vmatpush1.msra.mxu0 0.0
        %514 = vmatprep.subr.mxu0 0.0
        %515 = vmatpush1.msra.mxu0 0.0
        %516 = vmatprep.subr.mxu0 0.0
        %517 = vmatpush1.msra.mxu0 %v435
        %518 = vmatprep.subr.mxu0 0.0
        %519 = vmatpush1.msra.mxu0 %v434
        %520 = vmatprep.subr.mxu0 0.0
        %521 = vmatpush1.msra.mxu0 %v433
        %522 = vmatprep.subr.mxu0 0.0
        %523 = vmatpush1.msra.mxu0 %v432
        %524 = vmatprep.subr.mxu0 0.0
        %525 = vmatpush2.msra.mxu0 0.0
        %526 = vmatprep.subr.mxu0 0.0
        %527 = vmatpush2.msra.mxu0 0.0
        %528 = vmatprep.subr.mxu0 0.0
        %529 = vmatpush2.msra.mxu0 0.0
        %530 = vmatprep.subr.mxu0 0.0
        %531 = vmatpush2.msra.mxu0 0.0
        %532 = vmatprep.subr.mxu0 0.0
        %533 = vmatpush2.msra.mxu0 0.0
        %534 = vmatprep.subr.mxu0 0.0
        %535 = vmatpush2.msra.mxu0 0.0
        %536 = vmatprep.subr.mxu0 0.0
        %537 = vmatpush2.msra.mxu0 0.0
        %538 = vmatprep.subr.mxu0 0.0
        %539 = vmatpush2.msra.mxu0 0.0
        %540 = vmatprep.subr.mxu0 0.0
        %541 = vmatpush2.msra.mxu0 0.0
        %542 = vmatprep.subr.mxu0 0.0
        %543 = vmatpush2.msra.mxu0 0.0
        %544 = vmatprep.subr.mxu0 0.0
        %545 = vmatpush2.msra.mxu0 0.0
        %546 = vmatprep.subr.mxu0 0.0
        %547 = vmatpush2.msra.mxu0 0.0
        %548 = vmatprep.subr.mxu0 0.0
        %549 = vmatpush2.msra.mxu0 0.0
        %550 = vmatprep.subr.mxu0 0.0
        %551 = vmatpush2.msra.mxu0 0.0
        %552 = vmatprep.subr.mxu0 0.0
        %553 = vmatpush2.msra.mxu0 0.0
        %554 = vmatprep.subr.mxu0 0.0
        %555 = vmatpush2.msra.mxu0 0.0
        %556 = vmatprep.mubr.f32.mxu0 0.0
        %557 = vmatmul.mubr.f32.gmra.mxu0 %v445
        %v558 = vpop.f32.mrf.mxu0
        %v559 = vadd.f32 %v441, %v558
        %v560 = vpop.f32.mrf.mxu0
        %561 = vmatprep.mubr.f32.mxu0 0.0
        %562 = vmatmul.mubr.f32.gmra.mxu0 %v448
        %v563 = vpop.f32.mrf.mxu0
        %v564 = vadd.f32 %v441, %v563
        %v565 = vpop.f32.mrf.mxu0
        %566 = vmatprep.mubr.f32.mxu0 0.0
        %567 = vmatmul.mubr.f32.gmra.mxu0 %v451
        %v568 = vpop.f32.mrf.mxu0
        %v569 = vadd.f32 %v441, %v568
        %v570 = vpop.f32.mrf.mxu0
        %571 = vmatprep.mubr.f32.mxu0 0.0
        %572 = vmatmul.mubr.f32.gmra.mxu0 %v454
        %v573 = vpop.f32.mrf.mxu0
        %v574 = vadd.f32 %v441, %v573
        %v575 = vpop.f32.mrf.mxu0
        %576 = vmatprep.mubr.f32.mxu0 0.0
        %577 = vmatmul.mubr.f32.gmra.mxu0 %v457
        %v578 = vpop.f32.mrf.mxu0
        %v579 = vadd.f32 %v441, %v578
        %v580 = vpop.f32.mrf.mxu0
        %581 = vmatprep.mubr.f32.mxu0 0.0
        %582 = vmatmul.mubr.f32.gmra.mxu0 %v460
        %v583 = vpop.f32.mrf.mxu0
        %v584 = vadd.f32 %v441, %v583
        %v585 = vpop.f32.mrf.mxu0
        %586 = vmatprep.mubr.f32.mxu0 0.0
        %587 = vmatmul.mubr.f32.gmra.mxu0 %v463
        %v588 = vpop.f32.mrf.mxu0
        %v589 = vadd.f32 %v441, %v588
        %v590 = vpop.f32.mrf.mxu0
        %591 = vmatprep.mubr.f32.mxu0 0.0
        %592 = vmatmul.mubr.f32.gmra.mxu0 %v466
        %v593 = vpop.f32.mrf.mxu0
        %v594 = vadd.f32 %v441, %v593
        %v595 = vpop.f32.mrf.mxu0
        %596 = vmatprep.mubr.f32.mxu0 0.0
        %597 = vmatmul.mubr.f32.gmra.mxu0 %v469
        %v598 = vpop.f32.mrf.mxu0
        %v599 = vadd.f32 %v441, %v598
        %v600 = vpop.f32.mrf.mxu0
        %601 = vmatprep.mubr.f32.mxu0 0.0
        %602 = vmatmul.mubr.f32.gmra.mxu0 %v472
        %v603 = vpop.f32.mrf.mxu0
        %v604 = vadd.f32 %v441, %v603
        %v605 = vpop.f32.mrf.mxu0
        %606 = vmatprep.mubr.f32.mxu0 0.0
        %607 = vmatmul.mubr.f32.gmra.mxu0 %v475
        %v608 = vpop.f32.mrf.mxu0
        %v609 = vadd.f32 %v441, %v608
        %v610 = vpop.f32.mrf.mxu0
        %611 = vmatprep.mubr.f32.mxu0 0.0
        %612 = vmatmul.mubr.f32.gmra.mxu0 %v478
        %v613 = vpop.f32.mrf.mxu0
        %v614 = vadd.f32 %v441, %v613
        %v615 = vpop.f32.mrf.mxu0
        %616 = vmatprep.mubr.f32.mxu0 0.0
        %617 = vmatmul.mubr.f32.gmra.mxu0 %v481
        %v618 = vpop.f32.mrf.mxu0
        %v619 = vadd.f32 %v441, %v618
        %v620 = vpop.f32.mrf.mxu0
        %621 = vmatprep.mubr.f32.mxu0 0.0
        %622 = vmatmul.mubr.f32.gmra.mxu0 %v484
        %v623 = vpop.f32.mrf.mxu0
        %v624 = vadd.f32 %v441, %v623
        %v625 = vpop.f32.mrf.mxu0
        %626 = vmatprep.mubr.f32.mxu0 0.0
        %627 = vmatmul.mubr.f32.gmra.mxu0 %v487
        %v628 = vpop.f32.mrf.mxu0
        %v629 = vadd.f32 %v441, %v628
        %v630 = vpop.f32.mrf.mxu0
        %631 = vmatprep.mubr.f32.mxu0 0.0
        %632 = vmatmul.mubr.f32.gmra.mxu0 %v490
        %v633 = vpop.f32.mrf.mxu0
        %v634 = vadd.f32 %v441, %v633
        %v635 = vpop.f32.mrf.mxu0
        %636 = vdwg.mxu0
        %v637 = vmul.f32 %v559, 0.35355338
        %v638 = vmul.f32 %v564, 0.35355338
        %v639 = vmul.f32 %v569, 0.35355338
        %v640 = vmul.f32 %v574, 0.35355338
        %v641 = vmul.f32 %v579, 0.35355338
        %v642 = vmul.f32 %v584, 0.35355338
        %v643 = vmul.f32 %v589, 0.35355338
        %v644 = vmul.f32 %v594, 0.35355338
        %v645 = vmul.f32 %v599, 0.35355338
        %v646 = vmul.f32 %v604, 0.35355338
        %v647 = vmul.f32 %v609, 0.35355338
        %v648 = vmul.f32 %v614, 0.35355338
        %v649 = vmul.f32 %v619, 0.35355338
        %v650 = vmul.f32 %v624, 0.35355338
        %v651 = vmul.f32 %v629, 0.35355338
        %v652 = vmul.f32 %v634, 0.35355338
        %669 = vrot.lane.b32.xlu0 %v637, 120
        %v670 = vpop.permute.xlu0 %669
        %671 = vrot.lane.b32.xlu0 %v638, 120
        %v672 = vpop.permute.xlu0 %671
        %673 = vrot.lane.b32.xlu0 %v639, 120
        %v674 = vpop.permute.xlu0 %673
        %675 = vrot.lane.b32.xlu0 %v640, 120
        %v676 = vpop.permute.xlu0 %675
        %677 = vrot.lane.b32.xlu0 %v641, 120
        %v678 = vpop.permute.xlu0 %677
        %679 = vrot.lane.b32.xlu0 %v642, 120
        %v680 = vpop.permute.xlu0 %679
        %681 = vrot.lane.b32.xlu0 %v643, 120
        %v682 = vpop.permute.xlu0 %681
        %683 = vrot.lane.b32.xlu0 %v644, 120
        %v684 = vpop.permute.xlu0 %683
        %685 = vrot.lane.b32.xlu0 %v645, 120
        %v686 = vpop.permute.xlu0 %685
        %687 = vrot.lane.b32.xlu0 %v646, 120
        %v688 = vpop.permute.xlu0 %687
        %689 = vrot.lane.b32.xlu0 %v647, 120
        %v690 = vpop.permute.xlu0 %689
        %691 = vrot.lane.b32.xlu0 %v648, 120
        %v692 = vpop.permute.xlu0 %691
        %693 = vrot.lane.b32.xlu0 %v649, 120
        %v694 = vpop.permute.xlu0 %693
        %695 = vrot.lane.b32.xlu0 %v650, 120
        %v696 = vpop.permute.xlu0 %695
        %697 = vrot.lane.b32.xlu0 %v651, 120
        %v698 = vpop.permute.xlu0 %697
        %699 = vrot.lane.b32.xlu0 %v652, 120
        %v700 = vpop.permute.xlu0 %699
        %701 = vrot.lane.b32.xlu0 %v637, 112
        %v702 = vpop.permute.xlu0 %701
        %703 = vrot.lane.b32.xlu0 %v638, 112
        %v704 = vpop.permute.xlu0 %703
        %705 = vrot.lane.b32.xlu0 %v639, 112
        %v706 = vpop.permute.xlu0 %705
        %707 = vrot.lane.b32.xlu0 %v640, 112
        %v708 = vpop.permute.xlu0 %707
        %709 = vrot.lane.b32.xlu0 %v641, 112
        %v710 = vpop.permute.xlu0 %709
        %711 = vrot.lane.b32.xlu0 %v642, 112
        %v712 = vpop.permute.xlu0 %711
        %713 = vrot.lane.b32.xlu0 %v643, 112
        %v714 = vpop.permute.xlu0 %713
        %715 = vrot.lane.b32.xlu0 %v644, 112
        %v716 = vpop.permute.xlu0 %715
        %717 = vrot.lane.b32.xlu0 %v645, 112
        %v718 = vpop.permute.xlu0 %717
        %719 = vrot.lane.b32.xlu0 %v646, 112
        %v720 = vpop.permute.xlu0 %719
        %721 = vrot.lane.b32.xlu0 %v647, 112
        %v722 = vpop.permute.xlu0 %721
        %723 = vrot.lane.b32.xlu0 %v648, 112
        %v724 = vpop.permute.xlu0 %723
        %725 = vrot.lane.b32.xlu0 %v649, 112
        %v726 = vpop.permute.xlu0 %725
        %727 = vrot.lane.b32.xlu0 %v650, 112
        %v728 = vpop.permute.xlu0 %727
        %729 = vrot.lane.b32.xlu0 %v651, 112
        %v730 = vpop.permute.xlu0 %729
        %731 = vrot.lane.b32.xlu0 %v652, 112
        %v732 = vpop.permute.xlu0 %731
        %733 = vrot.lane.b32.xlu0 %v637, 104
        %v734 = vpop.permute.xlu0 %733
        %735 = vrot.lane.b32.xlu0 %v638, 104
        %v736 = vpop.permute.xlu0 %735
        %737 = vrot.lane.b32.xlu0 %v639, 104
        %v738 = vpop.permute.xlu0 %737
        %739 = vrot.lane.b32.xlu0 %v640, 104
        %v740 = vpop.permute.xlu0 %739
        %741 = vrot.lane.b32.xlu0 %v641, 104
        %v742 = vpop.permute.xlu0 %741
        %743 = vrot.lane.b32.xlu0 %v642, 104
        %v744 = vpop.permute.xlu0 %743
        %745 = vrot.lane.b32.xlu0 %v643, 104
        %v746 = vpop.permute.xlu0 %745
        %747 = vrot.lane.b32.xlu0 %v644, 104
        %v748 = vpop.permute.xlu0 %747
        %749 = vrot.lane.b32.xlu0 %v645, 104
        %v750 = vpop.permute.xlu0 %749
        %751 = vrot.lane.b32.xlu0 %v646, 104
        %v752 = vpop.permute.xlu0 %751
        %753 = vrot.lane.b32.xlu0 %v647, 104
        %v754 = vpop.permute.xlu0 %753
        %755 = vrot.lane.b32.xlu0 %v648, 104
        %v756 = vpop.permute.xlu0 %755
        %757 = vrot.lane.b32.xlu0 %v649, 104
        %v758 = vpop.permute.xlu0 %757
        %759 = vrot.lane.b32.xlu0 %v650, 104
        %v760 = vpop.permute.xlu0 %759
        %761 = vrot.lane.b32.xlu0 %v651, 104
        %v762 = vpop.permute.xlu0 %761
        %763 = vrot.lane.b32.xlu0 %v652, 104
        %v764 = vpop.permute.xlu0 %763
        %781 = vrot.lane.b32.xlu0 %v559, 120
        %v782 = vpop.permute.xlu0 %781
        %783 = vrot.lane.b32.xlu0 %v564, 120
        %v784 = vpop.permute.xlu0 %783
        %785 = vrot.lane.b32.xlu0 %v569, 120
        %v786 = vpop.permute.xlu0 %785
        %787 = vrot.lane.b32.xlu0 %v574, 120
        %v788 = vpop.permute.xlu0 %787
        %789 = vrot.lane.b32.xlu0 %v579, 120
        %v790 = vpop.permute.xlu0 %789
        %791 = vrot.lane.b32.xlu0 %v584, 120
        %v792 = vpop.permute.xlu0 %791
        %793 = vrot.lane.b32.xlu0 %v589, 120
        %v794 = vpop.permute.xlu0 %793
        %795 = vrot.lane.b32.xlu0 %v594, 120
        %v796 = vpop.permute.xlu0 %795
        %797 = vrot.lane.b32.xlu0 %v599, 120
        %v798 = vpop.permute.xlu0 %797
        %799 = vrot.lane.b32.xlu0 %v604, 120
        %v800 = vpop.permute.xlu0 %799
        %801 = vrot.lane.b32.xlu0 %v609, 120
        %v802 = vpop.permute.xlu0 %801
        %803 = vrot.lane.b32.xlu0 %v614, 120
        %v804 = vpop.permute.xlu0 %803
        %805 = vrot.lane.b32.xlu0 %v619, 120
        %v806 = vpop.permute.xlu0 %805
        %807 = vrot.lane.b32.xlu0 %v624, 120
        %v808 = vpop.permute.xlu0 %807
        %809 = vrot.lane.b32.xlu0 %v629, 120
        %v810 = vpop.permute.xlu0 %809
        %811 = vrot.lane.b32.xlu0 %v634, 120
        %v812 = vpop.permute.xlu0 %811
        %813 = vrot.lane.b32.xlu0 %v559, 112
        %v814 = vpop.permute.xlu0 %813
        %815 = vrot.lane.b32.xlu0 %v564, 112
        %v816 = vpop.permute.xlu0 %815
        %817 = vrot.lane.b32.xlu0 %v569, 112
        %v818 = vpop.permute.xlu0 %817
        %819 = vrot.lane.b32.xlu0 %v574, 112
        %v820 = vpop.permute.xlu0 %819
        %821 = vrot.lane.b32.xlu0 %v579, 112
        %v822 = vpop.permute.xlu0 %821
        %823 = vrot.lane.b32.xlu0 %v584, 112
        %v824 = vpop.permute.xlu0 %823
        %825 = vrot.lane.b32.xlu0 %v589, 112
        %v826 = vpop.permute.xlu0 %825
        %827 = vrot.lane.b32.xlu0 %v594, 112
        %v828 = vpop.permute.xlu0 %827
        %829 = vrot.lane.b32.xlu0 %v599, 112
        %v830 = vpop.permute.xlu0 %829
        %831 = vrot.lane.b32.xlu0 %v604, 112
        %v832 = vpop.permute.xlu0 %831
        %833 = vrot.lane.b32.xlu0 %v609, 112
        %v834 = vpop.permute.xlu0 %833
        %835 = vrot.lane.b32.xlu0 %v614, 112
        %v836 = vpop.permute.xlu0 %835
        %837 = vrot.lane.b32.xlu0 %v619, 112
        %v838 = vpop.permute.xlu0 %837
        %839 = vrot.lane.b32.xlu0 %v624, 112
        %v840 = vpop.permute.xlu0 %839
        %841 = vrot.lane.b32.xlu0 %v629, 112
        %v842 = vpop.permute.xlu0 %841
        %843 = vrot.lane.b32.xlu0 %v634, 112
        %v844 = vpop.permute.xlu0 %843
        %845 = vrot.lane.b32.xlu0 %v559, 104
        %v846 = vpop.permute.xlu0 %845
        %847 = vrot.lane.b32.xlu0 %v564, 104
        %v848 = vpop.permute.xlu0 %847
        %849 = vrot.lane.b32.xlu0 %v569, 104
        %v850 = vpop.permute.xlu0 %849
        %851 = vrot.lane.b32.xlu0 %v574, 104
        %v852 = vpop.permute.xlu0 %851
        %853 = vrot.lane.b32.xlu0 %v579, 104
        %v854 = vpop.permute.xlu0 %853
        %855 = vrot.lane.b32.xlu0 %v584, 104
        %v856 = vpop.permute.xlu0 %855
        %857 = vrot.lane.b32.xlu0 %v589, 104
        %v858 = vpop.permute.xlu0 %857
        %859 = vrot.lane.b32.xlu0 %v594, 104
        %v860 = vpop.permute.xlu0 %859
        %861 = vrot.lane.b32.xlu0 %v599, 104
        %v862 = vpop.permute.xlu0 %861
        %863 = vrot.lane.b32.xlu0 %v604, 104
        %v864 = vpop.permute.xlu0 %863
        %865 = vrot.lane.b32.xlu0 %v609, 104
        %v866 = vpop.permute.xlu0 %865
        %867 = vrot.lane.b32.xlu0 %v614, 104
        %v868 = vpop.permute.xlu0 %867
        %869 = vrot.lane.b32.xlu0 %v619, 104
        %v870 = vpop.permute.xlu0 %869
        %871 = vrot.lane.b32.xlu0 %v624, 104
        %v872 = vpop.permute.xlu0 %871
        %873 = vrot.lane.b32.xlu0 %v629, 104
        %v874 = vpop.permute.xlu0 %873
        %875 = vrot.lane.b32.xlu0 %v634, 104
        %v876 = vpop.permute.xlu0 %875
        %877 = vrot.lane.b32.xlu0 %v559, 96
        %v878 = vpop.permute.xlu0 %877
        %879 = vrot.lane.b32.xlu0 %v564, 96
        %v880 = vpop.permute.xlu0 %879
        %881 = vrot.lane.b32.xlu0 %v569, 96
        %v882 = vpop.permute.xlu0 %881
        %883 = vrot.lane.b32.xlu0 %v574, 96
        %v884 = vpop.permute.xlu0 %883
        %vm885 = vcmask 64512
        %v886 = vsel %vm885, %v637, 0
        %v888 = vsel %vm885, %v638, 0
        %v890 = vsel %vm885, %v639, 0
        %v892 = vsel %vm885, %v640, 0
        %v894 = vsel %vm885, %v878, 0
        %v896 = vsel %vm885, %v880, 0
        %v898 = vsel %vm885, %v882, 0
        %v900 = vsel %vm885, %v884, 0
        %902 = vmatprep.subr.mxu0 0.0
        %903 = vmatpush1.xpose.msra.mxu0 0.0
        %904 = vmatprep.subr.mxu0 0.0
        %905 = vmatpush1.xpose.msra.mxu0 0.0
        %906 = vmatprep.subr.mxu0 0.0
        %907 = vmatpush1.xpose.msra.mxu0 0.0
        %908 = vmatprep.subr.mxu0 0.0
        %909 = vmatpush1.xpose.msra.mxu0 0.0
        %910 = vmatprep.subr.mxu0 0.0
        %911 = vmatpush1.xpose.msra.mxu0 0.0
        %912 = vmatprep.subr.mxu0 0.0
        %913 = vmatpush1.xpose.msra.mxu0 0.0
        %914 = vmatprep.subr.mxu0 0.0
        %915 = vmatpush1.xpose.msra.mxu0 0.0
        %916 = vmatprep.subr.mxu0 0.0
        %917 = vmatpush1.xpose.msra.mxu0 0.0
        %918 = vmatprep.subr.mxu0 0.0
        %919 = vmatpush1.xpose.msra.mxu0 0.0
        %920 = vmatprep.subr.mxu0 0.0
        %921 = vmatpush1.xpose.msra.mxu0 0.0
        %922 = vmatprep.subr.mxu0 0.0
        %923 = vmatpush1.xpose.msra.mxu0 0.0
        %924 = vmatprep.subr.mxu0 0.0
        %925 = vmatpush1.xpose.msra.mxu0 0.0
        %926 = vmatprep.subr.mxu0 0.0
        %927 = vmatpush1.xpose.msra.mxu0 %v900
        %928 = vmatprep.subr.mxu0 0.0
        %929 = vmatpush1.xpose.msra.mxu0 %v898
        %930 = vmatprep.subr.mxu0 0.0
        %931 = vmatpush1.xpose.msra.mxu0 %v896
        %932 = vmatprep.subr.mxu0 0.0
        %933 = vmatpush1.xpose.msra.mxu0 %v894
        %934 = vmatprep.subr.mxu0 0.0
        %935 = vmatpush2.xpose.msra.mxu0 0.0
        %936 = vmatprep.subr.mxu0 0.0
        %937 = vmatpush2.xpose.msra.mxu0 0.0
        %938 = vmatprep.subr.mxu0 0.0
        %939 = vmatpush2.xpose.msra.mxu0 0.0
        %940 = vmatprep.subr.mxu0 0.0
        %941 = vmatpush2.xpose.msra.mxu0 0.0
        %942 = vmatprep.subr.mxu0 0.0
        %943 = vmatpush2.xpose.msra.mxu0 0.0
        %944 = vmatprep.subr.mxu0 0.0
        %945 = vmatpush2.xpose.msra.mxu0 0.0
        %946 = vmatprep.subr.mxu0 0.0
        %947 = vmatpush2.xpose.msra.mxu0 0.0
        %948 = vmatprep.subr.mxu0 0.0
        %949 = vmatpush2.xpose.msra.mxu0 0.0
        %950 = vmatprep.subr.mxu0 0.0
        %951 = vmatpush2.xpose.msra.mxu0 0.0
        %952 = vmatprep.subr.mxu0 0.0
        %953 = vmatpush2.xpose.msra.mxu0 0.0
        %954 = vmatprep.subr.mxu0 0.0
        %955 = vmatpush2.xpose.msra.mxu0 0.0
        %956 = vmatprep.subr.mxu0 0.0
        %957 = vmatpush2.xpose.msra.mxu0 0.0
        %958 = vmatprep.subr.mxu0 0.0
        %959 = vmatpush2.xpose.msra.mxu0 0.0
        %960 = vmatprep.subr.mxu0 0.0
        %961 = vmatpush2.xpose.msra.mxu0 0.0
        %962 = vmatprep.subr.mxu0 0.0
        %963 = vmatpush2.xpose.msra.mxu0 0.0
        %964 = vmatprep.subr.mxu0 0.0
        %965 = vmatpush2.xpose.msra.mxu0 0.0
        %966 = vmatprep.mubr.f32.mxu0 0.0
        %967 = vmatmul.mubr.f32.gmra.mxu0 %v886
        %v968 = vpop.f32.mrf.mxu0
        %v969 = vadd.f32 0.0, %v968
        %v970 = vpop.f32.mrf.mxu0
        %971 = vmatprep.mubr.f32.mxu0 0.0
        %972 = vmatmul.mubr.f32.gmra.mxu0 %v888
        %v973 = vpop.f32.mrf.mxu0
        %v974 = vadd.f32 0.0, %v973
        %v975 = vpop.f32.mrf.mxu0
        %976 = vmatprep.mubr.f32.mxu0 0.0
        %977 = vmatmul.mubr.f32.gmra.mxu0 %v890
        %v978 = vpop.f32.mrf.mxu0
        %v979 = vadd.f32 0.0, %v978
        %v980 = vpop.f32.mrf.mxu0
        %981 = vmatprep.mubr.f32.mxu0 0.0
        %982 = vmatmul.mubr.f32.gmra.mxu0 %v892
        %v983 = vpop.f32.mrf.mxu0
        %v984 = vadd.f32 0.0, %v983
        %v985 = vpop.f32.mrf.mxu0
        %986 = vdwg.mxu0
        %987 = vrot.lane.b32.xlu0 %v579, 96
        %v988 = vpop.permute.xlu0 %987
        %989 = vrot.lane.b32.xlu0 %v584, 96
        %v990 = vpop.permute.xlu0 %989
        %991 = vrot.lane.b32.xlu0 %v589, 96
        %v992 = vpop.permute.xlu0 %991
        %993 = vrot.lane.b32.xlu0 %v594, 96
        %v994 = vpop.permute.xlu0 %993
        %v995 = vsel %vm885, %v641, 0
        %v997 = vsel %vm885, %v642, 0
        %v999 = vsel %vm885, %v643, 0
        %v1001 = vsel %vm885, %v644, 0
        %v1003 = vsel %vm885, %v988, 0
        %v1005 = vsel %vm885, %v990, 0
        %v1007 = vsel %vm885, %v992, 0
        %v1009 = vsel %vm885, %v994, 0
        %1011 = vmatprep.subr.mxu0 0.0
        %1012 = vmatpush1.xpose.msra.mxu0 0.0
        %1013 = vmatprep.subr.mxu0 0.0
        %1014 = vmatpush1.xpose.msra.mxu0 0.0
        %1015 = vmatprep.subr.mxu0 0.0
        %1016 = vmatpush1.xpose.msra.mxu0 0.0
        %1017 = vmatprep.subr.mxu0 0.0
        %1018 = vmatpush1.xpose.msra.mxu0 0.0
        %1019 = vmatprep.subr.mxu0 0.0
        %1020 = vmatpush1.xpose.msra.mxu0 0.0
        %1021 = vmatprep.subr.mxu0 0.0
        %1022 = vmatpush1.xpose.msra.mxu0 0.0
        %1023 = vmatprep.subr.mxu0 0.0
        %1024 = vmatpush1.xpose.msra.mxu0 0.0
        %1025 = vmatprep.subr.mxu0 0.0
        %1026 = vmatpush1.xpose.msra.mxu0 0.0
        %1027 = vmatprep.subr.mxu0 0.0
        %1028 = vmatpush1.xpose.msra.mxu0 0.0
        %1029 = vmatprep.subr.mxu0 0.0
        %1030 = vmatpush1.xpose.msra.mxu0 0.0
        %1031 = vmatprep.subr.mxu0 0.0
        %1032 = vmatpush1.xpose.msra.mxu0 0.0
        %1033 = vmatprep.subr.mxu0 0.0
        %1034 = vmatpush1.xpose.msra.mxu0 0.0
        %1035 = vmatprep.subr.mxu0 0.0
        %1036 = vmatpush1.xpose.msra.mxu0 %v1009
        %1037 = vmatprep.subr.mxu0 0.0
        %1038 = vmatpush1.xpose.msra.mxu0 %v1007
        %1039 = vmatprep.subr.mxu0 0.0
        %1040 = vmatpush1.xpose.msra.mxu0 %v1005
        %1041 = vmatprep.subr.mxu0 0.0
        %1042 = vmatpush1.xpose.msra.mxu0 %v1003
        %1043 = vmatprep.subr.mxu0 0.0
        %1044 = vmatpush2.xpose.msra.mxu0 0.0
        %1045 = vmatprep.subr.mxu0 0.0
        %1046 = vmatpush2.xpose.msra.mxu0 0.0
        %1047 = vmatprep.subr.mxu0 0.0
        %1048 = vmatpush2.xpose.msra.mxu0 0.0
        %1049 = vmatprep.subr.mxu0 0.0
        %1050 = vmatpush2.xpose.msra.mxu0 0.0
        %1051 = vmatprep.subr.mxu0 0.0
        %1052 = vmatpush2.xpose.msra.mxu0 0.0
        %1053 = vmatprep.subr.mxu0 0.0
        %1054 = vmatpush2.xpose.msra.mxu0 0.0
        %1055 = vmatprep.subr.mxu0 0.0
        %1056 = vmatpush2.xpose.msra.mxu0 0.0
        %1057 = vmatprep.subr.mxu0 0.0
        %1058 = vmatpush2.xpose.msra.mxu0 0.0
        %1059 = vmatprep.subr.mxu0 0.0
        %1060 = vmatpush2.xpose.msra.mxu0 0.0
        %1061 = vmatprep.subr.mxu0 0.0
        %1062 = vmatpush2.xpose.msra.mxu0 0.0
        %1063 = vmatprep.subr.mxu0 0.0
        %1064 = vmatpush2.xpose.msra.mxu0 0.0
        %1065 = vmatprep.subr.mxu0 0.0
        %1066 = vmatpush2.xpose.msra.mxu0 0.0
        %1067 = vmatprep.subr.mxu0 0.0
        %1068 = vmatpush2.xpose.msra.mxu0 0.0
        %1069 = vmatprep.subr.mxu0 0.0
        %1070 = vmatpush2.xpose.msra.mxu0 0.0
        %1071 = vmatprep.subr.mxu0 0.0
        %1072 = vmatpush2.xpose.msra.mxu0 0.0
        %1073 = vmatprep.subr.mxu0 0.0
        %1074 = vmatpush2.xpose.msra.mxu0 0.0
        %1075 = vmatprep.mubr.f32.mxu0 0.0
        %1076 = vmatmul.mubr.f32.gmra.mxu0 %v995
        %v1077 = vpop.f32.mrf.mxu0
        %v1078 = vadd.f32 0.0, %v1077
        %v1079 = vpop.f32.mrf.mxu0
        %1080 = vmatprep.mubr.f32.mxu0 0.0
        %1081 = vmatmul.mubr.f32.gmra.mxu0 %v997
        %v1082 = vpop.f32.mrf.mxu0
        %v1083 = vadd.f32 0.0, %v1082
        %v1084 = vpop.f32.mrf.mxu0
        %1085 = vmatprep.mubr.f32.mxu0 0.0
        %1086 = vmatmul.mubr.f32.gmra.mxu0 %v999
        %v1087 = vpop.f32.mrf.mxu0
        %v1088 = vadd.f32 0.0, %v1087
        %v1089 = vpop.f32.mrf.mxu0
        %1090 = vmatprep.mubr.f32.mxu0 0.0
        %1091 = vmatmul.mubr.f32.gmra.mxu0 %v1001
        %v1092 = vpop.f32.mrf.mxu0
        %v1093 = vadd.f32 0.0, %v1092
        %v1094 = vpop.f32.mrf.mxu0
        %1095 = vdwg.mxu0
        %1096 = vrot.lane.b32.xlu0 %v599, 96
        %v1097 = vpop.permute.xlu0 %1096
        %1098 = vrot.lane.b32.xlu0 %v604, 96
        %v1099 = vpop.permute.xlu0 %1098
        %1100 = vrot.lane.b32.xlu0 %v609, 96
        %v1101 = vpop.permute.xlu0 %1100
        %1102 = vrot.lane.b32.xlu0 %v614, 96
        %v1103 = vpop.permute.xlu0 %1102
        %v1104 = vsel %vm885, %v645, 0
        %v1106 = vsel %vm885, %v646, 0
        %v1108 = vsel %vm885, %v647, 0
        %v1110 = vsel %vm885, %v648, 0
        %v1112 = vsel %vm885, %v1097, 0
        %v1114 = vsel %vm885, %v1099, 0
        %v1116 = vsel %vm885, %v1101, 0
        %v1118 = vsel %vm885, %v1103, 0
        %1120 = vmatprep.subr.mxu0 0.0
        %1121 = vmatpush1.xpose.msra.mxu0 0.0
        %1122 = vmatprep.subr.mxu0 0.0
        %1123 = vmatpush1.xpose.msra.mxu0 0.0
        %1124 = vmatprep.subr.mxu0 0.0
        %1125 = vmatpush1.xpose.msra.mxu0 0.0
        %1126 = vmatprep.subr.mxu0 0.0
        %1127 = vmatpush1.xpose.msra.mxu0 0.0
        %1128 = vmatprep.subr.mxu0 0.0
        %1129 = vmatpush1.xpose.msra.mxu0 0.0
        %1130 = vmatprep.subr.mxu0 0.0
        %1131 = vmatpush1.xpose.msra.mxu0 0.0
        %1132 = vmatprep.subr.mxu0 0.0
        %1133 = vmatpush1.xpose.msra.mxu0 0.0
        %1134 = vmatprep.subr.mxu0 0.0
        %1135 = vmatpush1.xpose.msra.mxu0 0.0
        %1136 = vmatprep.subr.mxu0 0.0
        %1137 = vmatpush1.xpose.msra.mxu0 0.0
        %1138 = vmatprep.subr.mxu0 0.0
        %1139 = vmatpush1.xpose.msra.mxu0 0.0
        %1140 = vmatprep.subr.mxu0 0.0
        %1141 = vmatpush1.xpose.msra.mxu0 0.0
        %1142 = vmatprep.subr.mxu0 0.0
        %1143 = vmatpush1.xpose.msra.mxu0 0.0
        %1144 = vmatprep.subr.mxu0 0.0
        %1145 = vmatpush1.xpose.msra.mxu0 %v1118
        %1146 = vmatprep.subr.mxu0 0.0
        %1147 = vmatpush1.xpose.msra.mxu0 %v1116
        %1148 = vmatprep.subr.mxu0 0.0
        %1149 = vmatpush1.xpose.msra.mxu0 %v1114
        %1150 = vmatprep.subr.mxu0 0.0
        %1151 = vmatpush1.xpose.msra.mxu0 %v1112
        %1152 = vmatprep.subr.mxu0 0.0
        %1153 = vmatpush2.xpose.msra.mxu0 0.0
        %1154 = vmatprep.subr.mxu0 0.0
        %1155 = vmatpush2.xpose.msra.mxu0 0.0
        %1156 = vmatprep.subr.mxu0 0.0
        %1157 = vmatpush2.xpose.msra.mxu0 0.0
        %1158 = vmatprep.subr.mxu0 0.0
        %1159 = vmatpush2.xpose.msra.mxu0 0.0
        %1160 = vmatprep.subr.mxu0 0.0
        %1161 = vmatpush2.xpose.msra.mxu0 0.0
        %1162 = vmatprep.subr.mxu0 0.0
        %1163 = vmatpush2.xpose.msra.mxu0 0.0
        %1164 = vmatprep.subr.mxu0 0.0
        %1165 = vmatpush2.xpose.msra.mxu0 0.0
        %1166 = vmatprep.subr.mxu0 0.0
        %1167 = vmatpush2.xpose.msra.mxu0 0.0
        %1168 = vmatprep.subr.mxu0 0.0
        %1169 = vmatpush2.xpose.msra.mxu0 0.0
        %1170 = vmatprep.subr.mxu0 0.0
        %1171 = vmatpush2.xpose.msra.mxu0 0.0
        %1172 = vmatprep.subr.mxu0 0.0
        %1173 = vmatpush2.xpose.msra.mxu0 0.0
        %1174 = vmatprep.subr.mxu0 0.0
        %1175 = vmatpush2.xpose.msra.mxu0 0.0
        %1176 = vmatprep.subr.mxu0 0.0
        %1177 = vmatpush2.xpose.msra.mxu0 0.0
        %1178 = vmatprep.subr.mxu0 0.0
        %1179 = vmatpush2.xpose.msra.mxu0 0.0
        %1180 = vmatprep.subr.mxu0 0.0
        %1181 = vmatpush2.xpose.msra.mxu0 0.0
        %1182 = vmatprep.subr.mxu0 0.0
        %1183 = vmatpush2.xpose.msra.mxu0 0.0
        %1184 = vmatprep.mubr.f32.mxu0 0.0
        %1185 = vmatmul.mubr.f32.gmra.mxu0 %v1104
        %v1186 = vpop.f32.mrf.mxu0
        %v1187 = vadd.f32 0.0, %v1186
        %v1188 = vpop.f32.mrf.mxu0
        %1189 = vmatprep.mubr.f32.mxu0 0.0
        %1190 = vmatmul.mubr.f32.gmra.mxu0 %v1106
        %v1191 = vpop.f32.mrf.mxu0
        %v1192 = vadd.f32 0.0, %v1191
        %v1193 = vpop.f32.mrf.mxu0
        %1194 = vmatprep.mubr.f32.mxu0 0.0
        %1195 = vmatmul.mubr.f32.gmra.mxu0 %v1108
        %v1196 = vpop.f32.mrf.mxu0
        %v1197 = vadd.f32 0.0, %v1196
        %v1198 = vpop.f32.mrf.mxu0
        %1199 = vmatprep.mubr.f32.mxu0 0.0
        %1200 = vmatmul.mubr.f32.gmra.mxu0 %v1110
        %v1201 = vpop.f32.mrf.mxu0
        %v1202 = vadd.f32 0.0, %v1201
        %v1203 = vpop.f32.mrf.mxu0
        %1204 = vdwg.mxu0
        %1205 = vrot.lane.b32.xlu0 %v619, 96
        %v1206 = vpop.permute.xlu0 %1205
        %1207 = vrot.lane.b32.xlu0 %v624, 96
        %v1208 = vpop.permute.xlu0 %1207
        %1209 = vrot.lane.b32.xlu0 %v629, 96
        %v1210 = vpop.permute.xlu0 %1209
        %1211 = vrot.lane.b32.xlu0 %v634, 96
        %v1212 = vpop.permute.xlu0 %1211
        %v1213 = vsel %vm885, %v649, 0
        %v1215 = vsel %vm885, %v650, 0
        %v1217 = vsel %vm885, %v651, 0
        %v1219 = vsel %vm885, %v652, 0
        %v1221 = vsel %vm885, %v1206, 0
        %v1223 = vsel %vm885, %v1208, 0
        %v1225 = vsel %vm885, %v1210, 0
        %v1227 = vsel %vm885, %v1212, 0
        %1229 = vmatprep.subr.mxu0 0.0
        %1230 = vmatpush1.xpose.msra.mxu0 0.0
        %1231 = vmatprep.subr.mxu0 0.0
        %1232 = vmatpush1.xpose.msra.mxu0 0.0
        %1233 = vmatprep.subr.mxu0 0.0
        %1234 = vmatpush1.xpose.msra.mxu0 0.0
        %1235 = vmatprep.subr.mxu0 0.0
        %1236 = vmatpush1.xpose.msra.mxu0 0.0
        %1237 = vmatprep.subr.mxu0 0.0
        %1238 = vmatpush1.xpose.msra.mxu0 0.0
        %1239 = vmatprep.subr.mxu0 0.0
        %1240 = vmatpush1.xpose.msra.mxu0 0.0
        %1241 = vmatprep.subr.mxu0 0.0
        %1242 = vmatpush1.xpose.msra.mxu0 0.0
        %1243 = vmatprep.subr.mxu0 0.0
        %1244 = vmatpush1.xpose.msra.mxu0 0.0
        %1245 = vmatprep.subr.mxu0 0.0
        %1246 = vmatpush1.xpose.msra.mxu0 0.0
        %1247 = vmatprep.subr.mxu0 0.0
        %1248 = vmatpush1.xpose.msra.mxu0 0.0
        %1249 = vmatprep.subr.mxu0 0.0
        %1250 = vmatpush1.xpose.msra.mxu0 0.0
        %1251 = vmatprep.subr.mxu0 0.0
        %1252 = vmatpush1.xpose.msra.mxu0 0.0
        %1253 = vmatprep.subr.mxu0 0.0
        %1254 = vmatpush1.xpose.msra.mxu0 %v1227
        %1255 = vmatprep.subr.mxu0 0.0
        %1256 = vmatpush1.xpose.msra.mxu0 %v1225
        %1257 = vmatprep.subr.mxu0 0.0
        %1258 = vmatpush1.xpose.msra.mxu0 %v1223
        %1259 = vmatprep.subr.mxu0 0.0
        %1260 = vmatpush1.xpose.msra.mxu0 %v1221
        %1261 = vmatprep.subr.mxu0 0.0
        %1262 = vmatpush2.xpose.msra.mxu0 0.0
        %1263 = vmatprep.subr.mxu0 0.0
        %1264 = vmatpush2.xpose.msra.mxu0 0.0
        %1265 = vmatprep.subr.mxu0 0.0
        %1266 = vmatpush2.xpose.msra.mxu0 0.0
        %1267 = vmatprep.subr.mxu0 0.0
        %1268 = vmatpush2.xpose.msra.mxu0 0.0
        %1269 = vmatprep.subr.mxu0 0.0
        %1270 = vmatpush2.xpose.msra.mxu0 0.0
        %1271 = vmatprep.subr.mxu0 0.0
        %1272 = vmatpush2.xpose.msra.mxu0 0.0
        %1273 = vmatprep.subr.mxu0 0.0
        %1274 = vmatpush2.xpose.msra.mxu0 0.0
        %1275 = vmatprep.subr.mxu0 0.0
        %1276 = vmatpush2.xpose.msra.mxu0 0.0
        %1277 = vmatprep.subr.mxu0 0.0
        %1278 = vmatpush2.xpose.msra.mxu0 0.0
        %1279 = vmatprep.subr.mxu0 0.0
        %1280 = vmatpush2.xpose.msra.mxu0 0.0
        %1281 = vmatprep.subr.mxu0 0.0
        %1282 = vmatpush2.xpose.msra.mxu0 0.0
        %1283 = vmatprep.subr.mxu0 0.0
        %1284 = vmatpush2.xpose.msra.mxu0 0.0
        %1285 = vmatprep.subr.mxu0 0.0
        %1286 = vmatpush2.xpose.msra.mxu0 0.0
        %1287 = vmatprep.subr.mxu0 0.0
        %1288 = vmatpush2.xpose.msra.mxu0 0.0
        %1289 = vmatprep.subr.mxu0 0.0
        %1290 = vmatpush2.xpose.msra.mxu0 0.0
        %1291 = vmatprep.subr.mxu0 0.0
        %1292 = vmatpush2.xpose.msra.mxu0 0.0
        %1293 = vmatprep.mubr.f32.mxu0 0.0
        %1294 = vmatmul.mubr.f32.gmra.mxu0 %v1213
        %v1295 = vpop.f32.mrf.mxu0
        %v1296 = vadd.f32 0.0, %v1295
        %v1297 = vpop.f32.mrf.mxu0
        %1298 = vmatprep.mubr.f32.mxu0 0.0
        %1299 = vmatmul.mubr.f32.gmra.mxu0 %v1215
        %v1300 = vpop.f32.mrf.mxu0
        %v1301 = vadd.f32 0.0, %v1300
        %v1302 = vpop.f32.mrf.mxu0
        %1303 = vmatprep.mubr.f32.mxu0 0.0
        %1304 = vmatmul.mubr.f32.gmra.mxu0 %v1217
        %v1305 = vpop.f32.mrf.mxu0
        %v1306 = vadd.f32 0.0, %v1305
        %v1307 = vpop.f32.mrf.mxu0
        %1308 = vmatprep.mubr.f32.mxu0 0.0
        %1309 = vmatmul.mubr.f32.gmra.mxu0 %v1219
        %v1310 = vpop.f32.mrf.mxu0
        %v1311 = vadd.f32 0.0, %v1310
        %v1312 = vpop.f32.mrf.mxu0
        %1313 = vdwg.mxu0
        %1314 = vrot.lane.b32.xlu0 %v782, 96
        %v1315 = vpop.permute.xlu0 %1314
        %1316 = vrot.lane.b32.xlu0 %v784, 96
        %v1317 = vpop.permute.xlu0 %1316
        %1318 = vrot.lane.b32.xlu0 %v786, 96
        %v1319 = vpop.permute.xlu0 %1318
        %1320 = vrot.lane.b32.xlu0 %v788, 96
        %v1321 = vpop.permute.xlu0 %1320
        %v1322 = vsel %vm885, %v670, 0
        %v1324 = vsel %vm885, %v672, 0
        %v1326 = vsel %vm885, %v674, 0
        %v1328 = vsel %vm885, %v676, 0
        %v1330 = vsel %vm885, %v1315, 0
        %v1332 = vsel %vm885, %v1317, 0
        %v1334 = vsel %vm885, %v1319, 0
        %v1336 = vsel %vm885, %v1321, 0
        %1338 = vmatprep.subr.mxu0 0.0
        %1339 = vmatpush1.xpose.msra.mxu0 0.0
        %1340 = vmatprep.subr.mxu0 0.0
        %1341 = vmatpush1.xpose.msra.mxu0 0.0
        %1342 = vmatprep.subr.mxu0 0.0
        %1343 = vmatpush1.xpose.msra.mxu0 0.0
        %1344 = vmatprep.subr.mxu0 0.0
        %1345 = vmatpush1.xpose.msra.mxu0 0.0
        %1346 = vmatprep.subr.mxu0 0.0
        %1347 = vmatpush1.xpose.msra.mxu0 0.0
        %1348 = vmatprep.subr.mxu0 0.0
        %1349 = vmatpush1.xpose.msra.mxu0 0.0
        %1350 = vmatprep.subr.mxu0 0.0
        %1351 = vmatpush1.xpose.msra.mxu0 0.0
        %1352 = vmatprep.subr.mxu0 0.0
        %1353 = vmatpush1.xpose.msra.mxu0 0.0
        %1354 = vmatprep.subr.mxu0 0.0
        %1355 = vmatpush1.xpose.msra.mxu0 0.0
        %1356 = vmatprep.subr.mxu0 0.0
        %1357 = vmatpush1.xpose.msra.mxu0 0.0
        %1358 = vmatprep.subr.mxu0 0.0
        %1359 = vmatpush1.xpose.msra.mxu0 0.0
        %1360 = vmatprep.subr.mxu0 0.0
        %1361 = vmatpush1.xpose.msra.mxu0 0.0
        %1362 = vmatprep.subr.mxu0 0.0
        %1363 = vmatpush1.xpose.msra.mxu0 %v1336
        %1364 = vmatprep.subr.mxu0 0.0
        %1365 = vmatpush1.xpose.msra.mxu0 %v1334
        %1366 = vmatprep.subr.mxu0 0.0
        %1367 = vmatpush1.xpose.msra.mxu0 %v1332
        %1368 = vmatprep.subr.mxu0 0.0
        %1369 = vmatpush1.xpose.msra.mxu0 %v1330
        %1370 = vmatprep.subr.mxu0 0.0
        %1371 = vmatpush2.xpose.msra.mxu0 0.0
        %1372 = vmatprep.subr.mxu0 0.0
        %1373 = vmatpush2.xpose.msra.mxu0 0.0
        %1374 = vmatprep.subr.mxu0 0.0
        %1375 = vmatpush2.xpose.msra.mxu0 0.0
        %1376 = vmatprep.subr.mxu0 0.0
        %1377 = vmatpush2.xpose.msra.mxu0 0.0
        %1378 = vmatprep.subr.mxu0 0.0
        %1379 = vmatpush2.xpose.msra.mxu0 0.0
        %1380 = vmatprep.subr.mxu0 0.0
        %1381 = vmatpush2.xpose.msra.mxu0 0.0
        %1382 = vmatprep.subr.mxu0 0.0
        %1383 = vmatpush2.xpose.msra.mxu0 0.0
        %1384 = vmatprep.subr.mxu0 0.0
        %1385 = vmatpush2.xpose.msra.mxu0 0.0
        %1386 = vmatprep.subr.mxu0 0.0
        %1387 = vmatpush2.xpose.msra.mxu0 0.0
        %1388 = vmatprep.subr.mxu0 0.0
        %1389 = vmatpush2.xpose.msra.mxu0 0.0
        %1390 = vmatprep.subr.mxu0 0.0
        %1391 = vmatpush2.xpose.msra.mxu0 0.0
        %1392 = vmatprep.subr.mxu0 0.0
        %1393 = vmatpush2.xpose.msra.mxu0 0.0
        %1394 = vmatprep.subr.mxu0 0.0
        %1395 = vmatpush2.xpose.msra.mxu0 0.0
        %1396 = vmatprep.subr.mxu0 0.0
        %1397 = vmatpush2.xpose.msra.mxu0 0.0
        %1398 = vmatprep.subr.mxu0 0.0
        %1399 = vmatpush2.xpose.msra.mxu0 0.0
        %1400 = vmatprep.subr.mxu0 0.0
        %1401 = vmatpush2.xpose.msra.mxu0 0.0
        %1402 = vmatprep.mubr.f32.mxu0 0.0
        %1403 = vmatmul.mubr.f32.gmra.mxu0 %v1322
        %v1404 = vpop.f32.mrf.mxu0
        %v1405 = vadd.f32 0.0, %v1404
        %v1406 = vpop.f32.mrf.mxu0
        %1407 = vmatprep.mubr.f32.mxu0 0.0
        %1408 = vmatmul.mubr.f32.gmra.mxu0 %v1324
        %v1409 = vpop.f32.mrf.mxu0
        %v1410 = vadd.f32 0.0, %v1409
        %v1411 = vpop.f32.mrf.mxu0
        %1412 = vmatprep.mubr.f32.mxu0 0.0
        %1413 = vmatmul.mubr.f32.gmra.mxu0 %v1326
        %v1414 = vpop.f32.mrf.mxu0
        %v1415 = vadd.f32 0.0, %v1414
        %v1416 = vpop.f32.mrf.mxu0
        %1417 = vmatprep.mubr.f32.mxu0 0.0
        %1418 = vmatmul.mubr.f32.gmra.mxu0 %v1328
        %v1419 = vpop.f32.mrf.mxu0
        %v1420 = vadd.f32 0.0, %v1419
        %v1421 = vpop.f32.mrf.mxu0
        %1422 = vdwg.mxu0
        %1423 = vrot.lane.b32.xlu0 %v790, 96
        %v1424 = vpop.permute.xlu0 %1423
        %1425 = vrot.lane.b32.xlu0 %v792, 96
        %v1426 = vpop.permute.xlu0 %1425
        %1427 = vrot.lane.b32.xlu0 %v794, 96
        %v1428 = vpop.permute.xlu0 %1427
        %1429 = vrot.lane.b32.xlu0 %v796, 96
        %v1430 = vpop.permute.xlu0 %1429
        %v1431 = vsel %vm885, %v678, 0
        %v1433 = vsel %vm885, %v680, 0
        %v1435 = vsel %vm885, %v682, 0
        %v1437 = vsel %vm885, %v684, 0
        %v1439 = vsel %vm885, %v1424, 0
        %v1441 = vsel %vm885, %v1426, 0
        %v1443 = vsel %vm885, %v1428, 0
        %v1445 = vsel %vm885, %v1430, 0
        %1447 = vmatprep.subr.mxu0 0.0
        %1448 = vmatpush1.xpose.msra.mxu0 0.0
        %1449 = vmatprep.subr.mxu0 0.0
        %1450 = vmatpush1.xpose.msra.mxu0 0.0
        %1451 = vmatprep.subr.mxu0 0.0
        %1452 = vmatpush1.xpose.msra.mxu0 0.0
        %1453 = vmatprep.subr.mxu0 0.0
        %1454 = vmatpush1.xpose.msra.mxu0 0.0
        %1455 = vmatprep.subr.mxu0 0.0
        %1456 = vmatpush1.xpose.msra.mxu0 0.0
        %1457 = vmatprep.subr.mxu0 0.0
        %1458 = vmatpush1.xpose.msra.mxu0 0.0
        %1459 = vmatprep.subr.mxu0 0.0
        %1460 = vmatpush1.xpose.msra.mxu0 0.0
        %1461 = vmatprep.subr.mxu0 0.0
        %1462 = vmatpush1.xpose.msra.mxu0 0.0
        %1463 = vmatprep.subr.mxu0 0.0
        %1464 = vmatpush1.xpose.msra.mxu0 0.0
        %1465 = vmatprep.subr.mxu0 0.0
        %1466 = vmatpush1.xpose.msra.mxu0 0.0
        %1467 = vmatprep.subr.mxu0 0.0
        %1468 = vmatpush1.xpose.msra.mxu0 0.0
        %1469 = vmatprep.subr.mxu0 0.0
        %1470 = vmatpush1.xpose.msra.mxu0 0.0
        %1471 = vmatprep.subr.mxu0 0.0
        %1472 = vmatpush1.xpose.msra.mxu0 %v1445
        %1473 = vmatprep.subr.mxu0 0.0
        %1474 = vmatpush1.xpose.msra.mxu0 %v1443
        %1475 = vmatprep.subr.mxu0 0.0
        %1476 = vmatpush1.xpose.msra.mxu0 %v1441
        %1477 = vmatprep.subr.mxu0 0.0
        %1478 = vmatpush1.xpose.msra.mxu0 %v1439
        %1479 = vmatprep.subr.mxu0 0.0
        %1480 = vmatpush2.xpose.msra.mxu0 0.0
        %1481 = vmatprep.subr.mxu0 0.0
        %1482 = vmatpush2.xpose.msra.mxu0 0.0
        %1483 = vmatprep.subr.mxu0 0.0
        %1484 = vmatpush2.xpose.msra.mxu0 0.0
        %1485 = vmatprep.subr.mxu0 0.0
        %1486 = vmatpush2.xpose.msra.mxu0 0.0
        %1487 = vmatprep.subr.mxu0 0.0
        %1488 = vmatpush2.xpose.msra.mxu0 0.0
        %1489 = vmatprep.subr.mxu0 0.0
        %1490 = vmatpush2.xpose.msra.mxu0 0.0
        %1491 = vmatprep.subr.mxu0 0.0
        %1492 = vmatpush2.xpose.msra.mxu0 0.0
        %1493 = vmatprep.subr.mxu0 0.0
        %1494 = vmatpush2.xpose.msra.mxu0 0.0
        %1495 = vmatprep.subr.mxu0 0.0
        %1496 = vmatpush2.xpose.msra.mxu0 0.0
        %1497 = vmatprep.subr.mxu0 0.0
        %1498 = vmatpush2.xpose.msra.mxu0 0.0
        %1499 = vmatprep.subr.mxu0 0.0
        %1500 = vmatpush2.xpose.msra.mxu0 0.0
        %1501 = vmatprep.subr.mxu0 0.0
        %1502 = vmatpush2.xpose.msra.mxu0 0.0
        %1503 = vmatprep.subr.mxu0 0.0
        %1504 = vmatpush2.xpose.msra.mxu0 0.0
        %1505 = vmatprep.subr.mxu0 0.0
        %1506 = vmatpush2.xpose.msra.mxu0 0.0
        %1507 = vmatprep.subr.mxu0 0.0
        %1508 = vmatpush2.xpose.msra.mxu0 0.0
        %1509 = vmatprep.subr.mxu0 0.0
        %1510 = vmatpush2.xpose.msra.mxu0 0.0
        %1511 = vmatprep.mubr.f32.mxu0 0.0
        %1512 = vmatmul.mubr.f32.gmra.mxu0 %v1431
        %v1513 = vpop.f32.mrf.mxu0
        %v1514 = vadd.f32 0.0, %v1513
        %v1515 = vpop.f32.mrf.mxu0
        %1516 = vmatprep.mubr.f32.mxu0 0.0
        %1517 = vmatmul.mubr.f32.gmra.mxu0 %v1433
        %v1518 = vpop.f32.mrf.mxu0
        %v1519 = vadd.f32 0.0, %v1518
        %v1520 = vpop.f32.mrf.mxu0
        %1521 = vmatprep.mubr.f32.mxu0 0.0
        %1522 = vmatmul.mubr.f32.gmra.mxu0 %v1435
        %v1523 = vpop.f32.mrf.mxu0
        %v1524 = vadd.f32 0.0, %v1523
        %v1525 = vpop.f32.mrf.mxu0
        %1526 = vmatprep.mubr.f32.mxu0 0.0
        %1527 = vmatmul.mubr.f32.gmra.mxu0 %v1437
        %v1528 = vpop.f32.mrf.mxu0
        %v1529 = vadd.f32 0.0, %v1528
        %v1530 = vpop.f32.mrf.mxu0
        %1531 = vdwg.mxu0
        %1532 = vrot.lane.b32.xlu0 %v798, 96
        %v1533 = vpop.permute.xlu0 %1532
        %1534 = vrot.lane.b32.xlu0 %v800, 96
        %v1535 = vpop.permute.xlu0 %1534
        %1536 = vrot.lane.b32.xlu0 %v802, 96
        %v1537 = vpop.permute.xlu0 %1536
        %1538 = vrot.lane.b32.xlu0 %v804, 96
        %v1539 = vpop.permute.xlu0 %1538
        %v1540 = vsel %vm885, %v686, 0
        %v1542 = vsel %vm885, %v688, 0
        %v1544 = vsel %vm885, %v690, 0
        %v1546 = vsel %vm885, %v692, 0
        %v1548 = vsel %vm885, %v1533, 0
        %v1550 = vsel %vm885, %v1535, 0
        %v1552 = vsel %vm885, %v1537, 0
        %v1554 = vsel %vm885, %v1539, 0
        %1556 = vmatprep.subr.mxu0 0.0
        %1557 = vmatpush1.xpose.msra.mxu0 0.0
        %1558 = vmatprep.subr.mxu0 0.0
        %1559 = vmatpush1.xpose.msra.mxu0 0.0
        %1560 = vmatprep.subr.mxu0 0.0
        %1561 = vmatpush1.xpose.msra.mxu0 0.0
        %1562 = vmatprep.subr.mxu0 0.0
        %1563 = vmatpush1.xpose.msra.mxu0 0.0
        %1564 = vmatprep.subr.mxu0 0.0
        %1565 = vmatpush1.xpose.msra.mxu0 0.0
        %1566 = vmatprep.subr.mxu0 0.0
        %1567 = vmatpush1.xpose.msra.mxu0 0.0
        %1568 = vmatprep.subr.mxu0 0.0
        %1569 = vmatpush1.xpose.msra.mxu0 0.0
        %1570 = vmatprep.subr.mxu0 0.0
        %1571 = vmatpush1.xpose.msra.mxu0 0.0
        %1572 = vmatprep.subr.mxu0 0.0
        %1573 = vmatpush1.xpose.msra.mxu0 0.0
        %1574 = vmatprep.subr.mxu0 0.0
        %1575 = vmatpush1.xpose.msra.mxu0 0.0
        %1576 = vmatprep.subr.mxu0 0.0
        %1577 = vmatpush1.xpose.msra.mxu0 0.0
        %1578 = vmatprep.subr.mxu0 0.0
        %1579 = vmatpush1.xpose.msra.mxu0 0.0
        %1580 = vmatprep.subr.mxu0 0.0
        %1581 = vmatpush1.xpose.msra.mxu0 %v1554
        %1582 = vmatprep.subr.mxu0 0.0
        %1583 = vmatpush1.xpose.msra.mxu0 %v1552
        %1584 = vmatprep.subr.mxu0 0.0
        %1585 = vmatpush1.xpose.msra.mxu0 %v1550
        %1586 = vmatprep.subr.mxu0 0.0
        %1587 = vmatpush1.xpose.msra.mxu0 %v1548
        %1588 = vmatprep.subr.mxu0 0.0
        %1589 = vmatpush2.xpose.msra.mxu0 0.0
        %1590 = vmatprep.subr.mxu0 0.0
        %1591 = vmatpush2.xpose.msra.mxu0 0.0
        %1592 = vmatprep.subr.mxu0 0.0
        %1593 = vmatpush2.xpose.msra.mxu0 0.0
        %1594 = vmatprep.subr.mxu0 0.0
        %1595 = vmatpush2.xpose.msra.mxu0 0.0
        %1596 = vmatprep.subr.mxu0 0.0
        %1597 = vmatpush2.xpose.msra.mxu0 0.0
        %1598 = vmatprep.subr.mxu0 0.0
        %1599 = vmatpush2.xpose.msra.mxu0 0.0
        %1600 = vmatprep.subr.mxu0 0.0
        %1601 = vmatpush2.xpose.msra.mxu0 0.0
        %1602 = vmatprep.subr.mxu0 0.0
        %1603 = vmatpush2.xpose.msra.mxu0 0.0
        %1604 = vmatprep.subr.mxu0 0.0
        %1605 = vmatpush2.xpose.msra.mxu0 0.0
        %1606 = vmatprep.subr.mxu0 0.0
        %1607 = vmatpush2.xpose.msra.mxu0 0.0
        %1608 = vmatprep.subr.mxu0 0.0
        %1609 = vmatpush2.xpose.msra.mxu0 0.0
        %1610 = vmatprep.subr.mxu0 0.0
        %1611 = vmatpush2.xpose.msra.mxu0 0.0
        %1612 = vmatprep.subr.mxu0 0.0
        %1613 = vmatpush2.xpose.msra.mxu0 0.0
        %1614 = vmatprep.subr.mxu0 0.0
        %1615 = vmatpush2.xpose.msra.mxu0 0.0
        %1616 = vmatprep.subr.mxu0 0.0
        %1617 = vmatpush2.xpose.msra.mxu0 0.0
        %1618 = vmatprep.subr.mxu0 0.0
        %1619 = vmatpush2.xpose.msra.mxu0 0.0
        %1620 = vmatprep.mubr.f32.mxu0 0.0
        %1621 = vmatmul.mubr.f32.gmra.mxu0 %v1540
        %v1622 = vpop.f32.mrf.mxu0
        %v1623 = vadd.f32 0.0, %v1622
        %v1624 = vpop.f32.mrf.mxu0
        %1625 = vmatprep.mubr.f32.mxu0 0.0
        %1626 = vmatmul.mubr.f32.gmra.mxu0 %v1542
        %v1627 = vpop.f32.mrf.mxu0
        %v1628 = vadd.f32 0.0, %v1627
        %v1629 = vpop.f32.mrf.mxu0
        %1630 = vmatprep.mubr.f32.mxu0 0.0
        %1631 = vmatmul.mubr.f32.gmra.mxu0 %v1544
        %v1632 = vpop.f32.mrf.mxu0
        %v1633 = vadd.f32 0.0, %v1632
        %v1634 = vpop.f32.mrf.mxu0
        %1635 = vmatprep.mubr.f32.mxu0 0.0
        %1636 = vmatmul.mubr.f32.gmra.mxu0 %v1546
        %v1637 = vpop.f32.mrf.mxu0
        %v1638 = vadd.f32 0.0, %v1637
        %v1639 = vpop.f32.mrf.mxu0
        %1640 = vdwg.mxu0
        %1641 = vrot.lane.b32.xlu0 %v806, 96
        %v1642 = vpop.permute.xlu0 %1641
        %1643 = vrot.lane.b32.xlu0 %v808, 96
        %v1644 = vpop.permute.xlu0 %1643
        %1645 = vrot.lane.b32.xlu0 %v810, 96
        %v1646 = vpop.permute.xlu0 %1645
        %1647 = vrot.lane.b32.xlu0 %v812, 96
        %v1648 = vpop.permute.xlu0 %1647
        %v1649 = vsel %vm885, %v694, 0
        %v1651 = vsel %vm885, %v696, 0
        %v1653 = vsel %vm885, %v698, 0
        %v1655 = vsel %vm885, %v700, 0
        %v1657 = vsel %vm885, %v1642, 0
        %v1659 = vsel %vm885, %v1644, 0
        %v1661 = vsel %vm885, %v1646, 0
        %v1663 = vsel %vm885, %v1648, 0
        %1665 = vmatprep.subr.mxu0 0.0
        %1666 = vmatpush1.xpose.msra.mxu0 0.0
        %1667 = vmatprep.subr.mxu0 0.0
        %1668 = vmatpush1.xpose.msra.mxu0 0.0
        %1669 = vmatprep.subr.mxu0 0.0
        %1670 = vmatpush1.xpose.msra.mxu0 0.0
        %1671 = vmatprep.subr.mxu0 0.0
        %1672 = vmatpush1.xpose.msra.mxu0 0.0
        %1673 = vmatprep.subr.mxu0 0.0
        %1674 = vmatpush1.xpose.msra.mxu0 0.0
        %1675 = vmatprep.subr.mxu0 0.0
        %1676 = vmatpush1.xpose.msra.mxu0 0.0
        %1677 = vmatprep.subr.mxu0 0.0
        %1678 = vmatpush1.xpose.msra.mxu0 0.0
        %1679 = vmatprep.subr.mxu0 0.0
        %1680 = vmatpush1.xpose.msra.mxu0 0.0
        %1681 = vmatprep.subr.mxu0 0.0
        %1682 = vmatpush1.xpose.msra.mxu0 0.0
        %1683 = vmatprep.subr.mxu0 0.0
        %1684 = vmatpush1.xpose.msra.mxu0 0.0
        %1685 = vmatprep.subr.mxu0 0.0
        %1686 = vmatpush1.xpose.msra.mxu0 0.0
        %1687 = vmatprep.subr.mxu0 0.0
        %1688 = vmatpush1.xpose.msra.mxu0 0.0
        %1689 = vmatprep.subr.mxu0 0.0
        %1690 = vmatpush1.xpose.msra.mxu0 %v1663
        %1691 = vmatprep.subr.mxu0 0.0
        %1692 = vmatpush1.xpose.msra.mxu0 %v1661
        %1693 = vmatprep.subr.mxu0 0.0
        %1694 = vmatpush1.xpose.msra.mxu0 %v1659
        %1695 = vmatprep.subr.mxu0 0.0
        %1696 = vmatpush1.xpose.msra.mxu0 %v1657
        %1697 = vmatprep.subr.mxu0 0.0
        %1698 = vmatpush2.xpose.msra.mxu0 0.0
        %1699 = vmatprep.subr.mxu0 0.0
        %1700 = vmatpush2.xpose.msra.mxu0 0.0
        %1701 = vmatprep.subr.mxu0 0.0
        %1702 = vmatpush2.xpose.msra.mxu0 0.0
        %1703 = vmatprep.subr.mxu0 0.0
        %1704 = vmatpush2.xpose.msra.mxu0 0.0
        %1705 = vmatprep.subr.mxu0 0.0
        %1706 = vmatpush2.xpose.msra.mxu0 0.0
        %1707 = vmatprep.subr.mxu0 0.0
        %1708 = vmatpush2.xpose.msra.mxu0 0.0
        %1709 = vmatprep.subr.mxu0 0.0
        %1710 = vmatpush2.xpose.msra.mxu0 0.0
        %1711 = vmatprep.subr.mxu0 0.0
        %1712 = vmatpush2.xpose.msra.mxu0 0.0
        %1713 = vmatprep.subr.mxu0 0.0
        %1714 = vmatpush2.xpose.msra.mxu0 0.0
        %1715 = vmatprep.subr.mxu0 0.0
        %1716 = vmatpush2.xpose.msra.mxu0 0.0
        %1717 = vmatprep.subr.mxu0 0.0
        %1718 = vmatpush2.xpose.msra.mxu0 0.0
        %1719 = vmatprep.subr.mxu0 0.0
        %1720 = vmatpush2.xpose.msra.mxu0 0.0
        %1721 = vmatprep.subr.mxu0 0.0
        %1722 = vmatpush2.xpose.msra.mxu0 0.0
        %1723 = vmatprep.subr.mxu0 0.0
        %1724 = vmatpush2.xpose.msra.mxu0 0.0
        %1725 = vmatprep.subr.mxu0 0.0
        %1726 = vmatpush2.xpose.msra.mxu0 0.0
        %1727 = vmatprep.subr.mxu0 0.0
        %1728 = vmatpush2.xpose.msra.mxu0 0.0
        %1729 = vmatprep.mubr.f32.mxu0 0.0
        %1730 = vmatmul.mubr.f32.gmra.mxu0 %v1649
        %v1731 = vpop.f32.mrf.mxu0
        %v1732 = vadd.f32 0.0, %v1731
        %v1733 = vpop.f32.mrf.mxu0
        %1734 = vmatprep.mubr.f32.mxu0 0.0
        %1735 = vmatmul.mubr.f32.gmra.mxu0 %v1651
        %v1736 = vpop.f32.mrf.mxu0
        %v1737 = vadd.f32 0.0, %v1736
        %v1738 = vpop.f32.mrf.mxu0
        %1739 = vmatprep.mubr.f32.mxu0 0.0
        %1740 = vmatmul.mubr.f32.gmra.mxu0 %v1653
        %v1741 = vpop.f32.mrf.mxu0
        %v1742 = vadd.f32 0.0, %v1741
        %v1743 = vpop.f32.mrf.mxu0
        %1744 = vmatprep.mubr.f32.mxu0 0.0
        %1745 = vmatmul.mubr.f32.gmra.mxu0 %v1655
        %v1746 = vpop.f32.mrf.mxu0
        %v1747 = vadd.f32 0.0, %v1746
        %v1748 = vpop.f32.mrf.mxu0
        %1749 = vdwg.mxu0
        %1750 = vrot.lane.b32.xlu0 %v814, 96
        %v1751 = vpop.permute.xlu0 %1750
        %1752 = vrot.lane.b32.xlu0 %v816, 96
        %v1753 = vpop.permute.xlu0 %1752
        %1754 = vrot.lane.b32.xlu0 %v818, 96
        %v1755 = vpop.permute.xlu0 %1754
        %1756 = vrot.lane.b32.xlu0 %v820, 96
        %v1757 = vpop.permute.xlu0 %1756
        %v1758 = vsel %vm885, %v702, 0
        %v1760 = vsel %vm885, %v704, 0
        %v1762 = vsel %vm885, %v706, 0
        %v1764 = vsel %vm885, %v708, 0
        %v1766 = vsel %vm885, %v1751, 0
        %v1768 = vsel %vm885, %v1753, 0
        %v1770 = vsel %vm885, %v1755, 0
        %v1772 = vsel %vm885, %v1757, 0
        %1774 = vmatprep.subr.mxu0 0.0
        %1775 = vmatpush1.xpose.msra.mxu0 0.0
        %1776 = vmatprep.subr.mxu0 0.0
        %1777 = vmatpush1.xpose.msra.mxu0 0.0
        %1778 = vmatprep.subr.mxu0 0.0
        %1779 = vmatpush1.xpose.msra.mxu0 0.0
        %1780 = vmatprep.subr.mxu0 0.0
        %1781 = vmatpush1.xpose.msra.mxu0 0.0
        %1782 = vmatprep.subr.mxu0 0.0
        %1783 = vmatpush1.xpose.msra.mxu0 0.0
        %1784 = vmatprep.subr.mxu0 0.0
        %1785 = vmatpush1.xpose.msra.mxu0 0.0
        %1786 = vmatprep.subr.mxu0 0.0
        %1787 = vmatpush1.xpose.msra.mxu0 0.0
        %1788 = vmatprep.subr.mxu0 0.0
        %1789 = vmatpush1.xpose.msra.mxu0 0.0
        %1790 = vmatprep.subr.mxu0 0.0
        %1791 = vmatpush1.xpose.msra.mxu0 0.0
        %1792 = vmatprep.subr.mxu0 0.0
        %1793 = vmatpush1.xpose.msra.mxu0 0.0
        %1794 = vmatprep.subr.mxu0 0.0
        %1795 = vmatpush1.xpose.msra.mxu0 0.0
        %1796 = vmatprep.subr.mxu0 0.0
        %1797 = vmatpush1.xpose.msra.mxu0 0.0
        %1798 = vmatprep.subr.mxu0 0.0
        %1799 = vmatpush1.xpose.msra.mxu0 %v1772
        %1800 = vmatprep.subr.mxu0 0.0
        %1801 = vmatpush1.xpose.msra.mxu0 %v1770
        %1802 = vmatprep.subr.mxu0 0.0
        %1803 = vmatpush1.xpose.msra.mxu0 %v1768
        %1804 = vmatprep.subr.mxu0 0.0
        %1805 = vmatpush1.xpose.msra.mxu0 %v1766
        %1806 = vmatprep.subr.mxu0 0.0
        %1807 = vmatpush2.xpose.msra.mxu0 0.0
        %1808 = vmatprep.subr.mxu0 0.0
        %1809 = vmatpush2.xpose.msra.mxu0 0.0
        %1810 = vmatprep.subr.mxu0 0.0
        %1811 = vmatpush2.xpose.msra.mxu0 0.0
        %1812 = vmatprep.subr.mxu0 0.0
        %1813 = vmatpush2.xpose.msra.mxu0 0.0
        %1814 = vmatprep.subr.mxu0 0.0
        %1815 = vmatpush2.xpose.msra.mxu0 0.0
        %1816 = vmatprep.subr.mxu0 0.0
        %1817 = vmatpush2.xpose.msra.mxu0 0.0
        %1818 = vmatprep.subr.mxu0 0.0
        %1819 = vmatpush2.xpose.msra.mxu0 0.0
        %1820 = vmatprep.subr.mxu0 0.0
        %1821 = vmatpush2.xpose.msra.mxu0 0.0
        %1822 = vmatprep.subr.mxu0 0.0
        %1823 = vmatpush2.xpose.msra.mxu0 0.0
        %1824 = vmatprep.subr.mxu0 0.0
        %1825 = vmatpush2.xpose.msra.mxu0 0.0
        %1826 = vmatprep.subr.mxu0 0.0
        %1827 = vmatpush2.xpose.msra.mxu0 0.0
        %1828 = vmatprep.subr.mxu0 0.0
        %1829 = vmatpush2.xpose.msra.mxu0 0.0
        %1830 = vmatprep.subr.mxu0 0.0
        %1831 = vmatpush2.xpose.msra.mxu0 0.0
        %1832 = vmatprep.subr.mxu0 0.0
        %1833 = vmatpush2.xpose.msra.mxu0 0.0
        %1834 = vmatprep.subr.mxu0 0.0
        %1835 = vmatpush2.xpose.msra.mxu0 0.0
        %1836 = vmatprep.subr.mxu0 0.0
        %1837 = vmatpush2.xpose.msra.mxu0 0.0
        %1838 = vmatprep.mubr.f32.mxu0 0.0
        %1839 = vmatmul.mubr.f32.gmra.mxu0 %v1758
        %v1840 = vpop.f32.mrf.mxu0
        %v1841 = vadd.f32 0.0, %v1840
        %v1842 = vpop.f32.mrf.mxu0
        %1843 = vmatprep.mubr.f32.mxu0 0.0
        %1844 = vmatmul.mubr.f32.gmra.mxu0 %v1760
        %v1845 = vpop.f32.mrf.mxu0
        %v1846 = vadd.f32 0.0, %v1845
        %v1847 = vpop.f32.mrf.mxu0
        %1848 = vmatprep.mubr.f32.mxu0 0.0
        %1849 = vmatmul.mubr.f32.gmra.mxu0 %v1762
        %v1850 = vpop.f32.mrf.mxu0
        %v1851 = vadd.f32 0.0, %v1850
        %v1852 = vpop.f32.mrf.mxu0
        %1853 = vmatprep.mubr.f32.mxu0 0.0
        %1854 = vmatmul.mubr.f32.gmra.mxu0 %v1764
        %v1855 = vpop.f32.mrf.mxu0
        %v1856 = vadd.f32 0.0, %v1855
        %v1857 = vpop.f32.mrf.mxu0
        %1858 = vdwg.mxu0
        %1859 = vrot.lane.b32.xlu0 %v822, 96
        %v1860 = vpop.permute.xlu0 %1859
        %1861 = vrot.lane.b32.xlu0 %v824, 96
        %v1862 = vpop.permute.xlu0 %1861
        %1863 = vrot.lane.b32.xlu0 %v826, 96
        %v1864 = vpop.permute.xlu0 %1863
        %1865 = vrot.lane.b32.xlu0 %v828, 96
        %v1866 = vpop.permute.xlu0 %1865
        %v1867 = vsel %vm885, %v710, 0
        %v1869 = vsel %vm885, %v712, 0
        %v1871 = vsel %vm885, %v714, 0
        %v1873 = vsel %vm885, %v716, 0
        %v1875 = vsel %vm885, %v1860, 0
        %v1877 = vsel %vm885, %v1862, 0
        %v1879 = vsel %vm885, %v1864, 0
        %v1881 = vsel %vm885, %v1866, 0
        %1883 = vmatprep.subr.mxu0 0.0
        %1884 = vmatpush1.xpose.msra.mxu0 0.0
        %1885 = vmatprep.subr.mxu0 0.0
        %1886 = vmatpush1.xpose.msra.mxu0 0.0
        %1887 = vmatprep.subr.mxu0 0.0
        %1888 = vmatpush1.xpose.msra.mxu0 0.0
        %1889 = vmatprep.subr.mxu0 0.0
        %1890 = vmatpush1.xpose.msra.mxu0 0.0
        %1891 = vmatprep.subr.mxu0 0.0
        %1892 = vmatpush1.xpose.msra.mxu0 0.0
        %1893 = vmatprep.subr.mxu0 0.0
        %1894 = vmatpush1.xpose.msra.mxu0 0.0
        %1895 = vmatprep.subr.mxu0 0.0
        %1896 = vmatpush1.xpose.msra.mxu0 0.0
        %1897 = vmatprep.subr.mxu0 0.0
        %1898 = vmatpush1.xpose.msra.mxu0 0.0
        %1899 = vmatprep.subr.mxu0 0.0
        %1900 = vmatpush1.xpose.msra.mxu0 0.0
        %1901 = vmatprep.subr.mxu0 0.0
        %1902 = vmatpush1.xpose.msra.mxu0 0.0
        %1903 = vmatprep.subr.mxu0 0.0
        %1904 = vmatpush1.xpose.msra.mxu0 0.0
        %1905 = vmatprep.subr.mxu0 0.0
        %1906 = vmatpush1.xpose.msra.mxu0 0.0
        %1907 = vmatprep.subr.mxu0 0.0
        %1908 = vmatpush1.xpose.msra.mxu0 %v1881
        %1909 = vmatprep.subr.mxu0 0.0
        %1910 = vmatpush1.xpose.msra.mxu0 %v1879
        %1911 = vmatprep.subr.mxu0 0.0
        %1912 = vmatpush1.xpose.msra.mxu0 %v1877
        %1913 = vmatprep.subr.mxu0 0.0
        %1914 = vmatpush1.xpose.msra.mxu0 %v1875
        %1915 = vmatprep.subr.mxu0 0.0
        %1916 = vmatpush2.xpose.msra.mxu0 0.0
        %1917 = vmatprep.subr.mxu0 0.0
        %1918 = vmatpush2.xpose.msra.mxu0 0.0
        %1919 = vmatprep.subr.mxu0 0.0
        %1920 = vmatpush2.xpose.msra.mxu0 0.0
        %1921 = vmatprep.subr.mxu0 0.0
        %1922 = vmatpush2.xpose.msra.mxu0 0.0
        %1923 = vmatprep.subr.mxu0 0.0
        %1924 = vmatpush2.xpose.msra.mxu0 0.0
        %1925 = vmatprep.subr.mxu0 0.0
        %1926 = vmatpush2.xpose.msra.mxu0 0.0
        %1927 = vmatprep.subr.mxu0 0.0
        %1928 = vmatpush2.xpose.msra.mxu0 0.0
        %1929 = vmatprep.subr.mxu0 0.0
        %1930 = vmatpush2.xpose.msra.mxu0 0.0
        %1931 = vmatprep.subr.mxu0 0.0
        %1932 = vmatpush2.xpose.msra.mxu0 0.0
        %1933 = vmatprep.subr.mxu0 0.0
        %1934 = vmatpush2.xpose.msra.mxu0 0.0
        %1935 = vmatprep.subr.mxu0 0.0
        %1936 = vmatpush2.xpose.msra.mxu0 0.0
        %1937 = vmatprep.subr.mxu0 0.0
        %1938 = vmatpush2.xpose.msra.mxu0 0.0
        %1939 = vmatprep.subr.mxu0 0.0
        %1940 = vmatpush2.xpose.msra.mxu0 0.0
        %1941 = vmatprep.subr.mxu0 0.0
        %1942 = vmatpush2.xpose.msra.mxu0 0.0
        %1943 = vmatprep.subr.mxu0 0.0
        %1944 = vmatpush2.xpose.msra.mxu0 0.0
        %1945 = vmatprep.subr.mxu0 0.0
        %1946 = vmatpush2.xpose.msra.mxu0 0.0
        %1947 = vmatprep.mubr.f32.mxu0 0.0
        %1948 = vmatmul.mubr.f32.gmra.mxu0 %v1867
        %v1949 = vpop.f32.mrf.mxu0
        %v1950 = vadd.f32 0.0, %v1949
        %v1951 = vpop.f32.mrf.mxu0
        %1952 = vmatprep.mubr.f32.mxu0 0.0
        %1953 = vmatmul.mubr.f32.gmra.mxu0 %v1869
        %v1954 = vpop.f32.mrf.mxu0
        %v1955 = vadd.f32 0.0, %v1954
        %v1956 = vpop.f32.mrf.mxu0
        %1957 = vmatprep.mubr.f32.mxu0 0.0
        %1958 = vmatmul.mubr.f32.gmra.mxu0 %v1871
        %v1959 = vpop.f32.mrf.mxu0
        %v1960 = vadd.f32 0.0, %v1959
        %v1961 = vpop.f32.mrf.mxu0
        %1962 = vmatprep.mubr.f32.mxu0 0.0
        %1963 = vmatmul.mubr.f32.gmra.mxu0 %v1873
        %v1964 = vpop.f32.mrf.mxu0
        %v1965 = vadd.f32 0.0, %v1964
        %v1966 = vpop.f32.mrf.mxu0
        %1967 = vdwg.mxu0
        %1968 = vrot.lane.b32.xlu0 %v830, 96
        %v1969 = vpop.permute.xlu0 %1968
        %1970 = vrot.lane.b32.xlu0 %v832, 96
        %v1971 = vpop.permute.xlu0 %1970
        %1972 = vrot.lane.b32.xlu0 %v834, 96
        %v1973 = vpop.permute.xlu0 %1972
        %1974 = vrot.lane.b32.xlu0 %v836, 96
        %v1975 = vpop.permute.xlu0 %1974
        %v1976 = vsel %vm885, %v718, 0
        %v1978 = vsel %vm885, %v720, 0
        %v1980 = vsel %vm885, %v722, 0
        %v1982 = vsel %vm885, %v724, 0
        %v1984 = vsel %vm885, %v1969, 0
        %v1986 = vsel %vm885, %v1971, 0
        %v1988 = vsel %vm885, %v1973, 0
        %v1990 = vsel %vm885, %v1975, 0
        %1992 = vmatprep.subr.mxu0 0.0
        %1993 = vmatpush1.xpose.msra.mxu0 0.0
        %1994 = vmatprep.subr.mxu0 0.0
        %1995 = vmatpush1.xpose.msra.mxu0 0.0
        %1996 = vmatprep.subr.mxu0 0.0
        %1997 = vmatpush1.xpose.msra.mxu0 0.0
        %1998 = vmatprep.subr.mxu0 0.0
        %1999 = vmatpush1.xpose.msra.mxu0 0.0
        %2000 = vmatprep.subr.mxu0 0.0
        %2001 = vmatpush1.xpose.msra.mxu0 0.0
        %2002 = vmatprep.subr.mxu0 0.0
        %2003 = vmatpush1.xpose.msra.mxu0 0.0
        %2004 = vmatprep.subr.mxu0 0.0
        %2005 = vmatpush1.xpose.msra.mxu0 0.0
        %2006 = vmatprep.subr.mxu0 0.0
        %2007 = vmatpush1.xpose.msra.mxu0 0.0
        %2008 = vmatprep.subr.mxu0 0.0
        %2009 = vmatpush1.xpose.msra.mxu0 0.0
        %2010 = vmatprep.subr.mxu0 0.0
        %2011 = vmatpush1.xpose.msra.mxu0 0.0
        %2012 = vmatprep.subr.mxu0 0.0
        %2013 = vmatpush1.xpose.msra.mxu0 0.0
        %2014 = vmatprep.subr.mxu0 0.0
        %2015 = vmatpush1.xpose.msra.mxu0 0.0
        %2016 = vmatprep.subr.mxu0 0.0
        %2017 = vmatpush1.xpose.msra.mxu0 %v1990
        %2018 = vmatprep.subr.mxu0 0.0
        %2019 = vmatpush1.xpose.msra.mxu0 %v1988
        %2020 = vmatprep.subr.mxu0 0.0
        %2021 = vmatpush1.xpose.msra.mxu0 %v1986
        %2022 = vmatprep.subr.mxu0 0.0
        %2023 = vmatpush1.xpose.msra.mxu0 %v1984
        %2024 = vmatprep.subr.mxu0 0.0
        %2025 = vmatpush2.xpose.msra.mxu0 0.0
        %2026 = vmatprep.subr.mxu0 0.0
        %2027 = vmatpush2.xpose.msra.mxu0 0.0
        %2028 = vmatprep.subr.mxu0 0.0
        %2029 = vmatpush2.xpose.msra.mxu0 0.0
        %2030 = vmatprep.subr.mxu0 0.0
        %2031 = vmatpush2.xpose.msra.mxu0 0.0
        %2032 = vmatprep.subr.mxu0 0.0
        %2033 = vmatpush2.xpose.msra.mxu0 0.0
        %2034 = vmatprep.subr.mxu0 0.0
        %2035 = vmatpush2.xpose.msra.mxu0 0.0
        %2036 = vmatprep.subr.mxu0 0.0
        %2037 = vmatpush2.xpose.msra.mxu0 0.0
        %2038 = vmatprep.subr.mxu0 0.0
        %2039 = vmatpush2.xpose.msra.mxu0 0.0
        %2040 = vmatprep.subr.mxu0 0.0
        %2041 = vmatpush2.xpose.msra.mxu0 0.0
        %2042 = vmatprep.subr.mxu0 0.0
        %2043 = vmatpush2.xpose.msra.mxu0 0.0
        %2044 = vmatprep.subr.mxu0 0.0
        %2045 = vmatpush2.xpose.msra.mxu0 0.0
        %2046 = vmatprep.subr.mxu0 0.0
        %2047 = vmatpush2.xpose.msra.mxu0 0.0
        %2048 = vmatprep.subr.mxu0 0.0
        %2049 = vmatpush2.xpose.msra.mxu0 0.0
        %2050 = vmatprep.subr.mxu0 0.0
        %2051 = vmatpush2.xpose.msra.mxu0 0.0
        %2052 = vmatprep.subr.mxu0 0.0
        %2053 = vmatpush2.xpose.msra.mxu0 0.0
        %2054 = vmatprep.subr.mxu0 0.0
        %2055 = vmatpush2.xpose.msra.mxu0 0.0
        %2056 = vmatprep.mubr.f32.mxu0 0.0
        %2057 = vmatmul.mubr.f32.gmra.mxu0 %v1976
        %v2058 = vpop.f32.mrf.mxu0
        %v2059 = vadd.f32 0.0, %v2058
        %v2060 = vpop.f32.mrf.mxu0
        %2061 = vmatprep.mubr.f32.mxu0 0.0
        %2062 = vmatmul.mubr.f32.gmra.mxu0 %v1978
        %v2063 = vpop.f32.mrf.mxu0
        %v2064 = vadd.f32 0.0, %v2063
        %v2065 = vpop.f32.mrf.mxu0
        %2066 = vmatprep.mubr.f32.mxu0 0.0
        %2067 = vmatmul.mubr.f32.gmra.mxu0 %v1980
        %v2068 = vpop.f32.mrf.mxu0
        %v2069 = vadd.f32 0.0, %v2068
        %v2070 = vpop.f32.mrf.mxu0
        %2071 = vmatprep.mubr.f32.mxu0 0.0
        %2072 = vmatmul.mubr.f32.gmra.mxu0 %v1982
        %v2073 = vpop.f32.mrf.mxu0
        %v2074 = vadd.f32 0.0, %v2073
        %v2075 = vpop.f32.mrf.mxu0
        %2076 = vdwg.mxu0
        %2077 = vrot.lane.b32.xlu0 %v838, 96
        %v2078 = vpop.permute.xlu0 %2077
        %2079 = vrot.lane.b32.xlu0 %v840, 96
        %v2080 = vpop.permute.xlu0 %2079
        %2081 = vrot.lane.b32.xlu0 %v842, 96
        %v2082 = vpop.permute.xlu0 %2081
        %2083 = vrot.lane.b32.xlu0 %v844, 96
        %v2084 = vpop.permute.xlu0 %2083
        %v2085 = vsel %vm885, %v726, 0
        %v2087 = vsel %vm885, %v728, 0
        %v2089 = vsel %vm885, %v730, 0
        %v2091 = vsel %vm885, %v732, 0
        %v2093 = vsel %vm885, %v2078, 0
        %v2095 = vsel %vm885, %v2080, 0
        %v2097 = vsel %vm885, %v2082, 0
        %v2099 = vsel %vm885, %v2084, 0
        %2101 = vmatprep.subr.mxu0 0.0
        %2102 = vmatpush1.xpose.msra.mxu0 0.0
        %2103 = vmatprep.subr.mxu0 0.0
        %2104 = vmatpush1.xpose.msra.mxu0 0.0
        %2105 = vmatprep.subr.mxu0 0.0
        %2106 = vmatpush1.xpose.msra.mxu0 0.0
        %2107 = vmatprep.subr.mxu0 0.0
        %2108 = vmatpush1.xpose.msra.mxu0 0.0
        %2109 = vmatprep.subr.mxu0 0.0
        %2110 = vmatpush1.xpose.msra.mxu0 0.0
        %2111 = vmatprep.subr.mxu0 0.0
        %2112 = vmatpush1.xpose.msra.mxu0 0.0
        %2113 = vmatprep.subr.mxu0 0.0
        %2114 = vmatpush1.xpose.msra.mxu0 0.0
        %2115 = vmatprep.subr.mxu0 0.0
        %2116 = vmatpush1.xpose.msra.mxu0 0.0
        %2117 = vmatprep.subr.mxu0 0.0
        %2118 = vmatpush1.xpose.msra.mxu0 0.0
        %2119 = vmatprep.subr.mxu0 0.0
        %2120 = vmatpush1.xpose.msra.mxu0 0.0
        %2121 = vmatprep.subr.mxu0 0.0
        %2122 = vmatpush1.xpose.msra.mxu0 0.0
        %2123 = vmatprep.subr.mxu0 0.0
        %2124 = vmatpush1.xpose.msra.mxu0 0.0
        %2125 = vmatprep.subr.mxu0 0.0
        %2126 = vmatpush1.xpose.msra.mxu0 %v2099
        %2127 = vmatprep.subr.mxu0 0.0
        %2128 = vmatpush1.xpose.msra.mxu0 %v2097
        %2129 = vmatprep.subr.mxu0 0.0
        %2130 = vmatpush1.xpose.msra.mxu0 %v2095
        %2131 = vmatprep.subr.mxu0 0.0
        %2132 = vmatpush1.xpose.msra.mxu0 %v2093
        %2133 = vmatprep.subr.mxu0 0.0
        %2134 = vmatpush2.xpose.msra.mxu0 0.0
        %2135 = vmatprep.subr.mxu0 0.0
        %2136 = vmatpush2.xpose.msra.mxu0 0.0
        %2137 = vmatprep.subr.mxu0 0.0
        %2138 = vmatpush2.xpose.msra.mxu0 0.0
        %2139 = vmatprep.subr.mxu0 0.0
        %2140 = vmatpush2.xpose.msra.mxu0 0.0
        %2141 = vmatprep.subr.mxu0 0.0
        %2142 = vmatpush2.xpose.msra.mxu0 0.0
        %2143 = vmatprep.subr.mxu0 0.0
        %2144 = vmatpush2.xpose.msra.mxu0 0.0
        %2145 = vmatprep.subr.mxu0 0.0
        %2146 = vmatpush2.xpose.msra.mxu0 0.0
        %2147 = vmatprep.subr.mxu0 0.0
        %2148 = vmatpush2.xpose.msra.mxu0 0.0
        %2149 = vmatprep.subr.mxu0 0.0
        %2150 = vmatpush2.xpose.msra.mxu0 0.0
        %2151 = vmatprep.subr.mxu0 0.0
        %2152 = vmatpush2.xpose.msra.mxu0 0.0
        %2153 = vmatprep.subr.mxu0 0.0
        %2154 = vmatpush2.xpose.msra.mxu0 0.0
        %2155 = vmatprep.subr.mxu0 0.0
        %2156 = vmatpush2.xpose.msra.mxu0 0.0
        %2157 = vmatprep.subr.mxu0 0.0
        %2158 = vmatpush2.xpose.msra.mxu0 0.0
        %2159 = vmatprep.subr.mxu0 0.0
        %2160 = vmatpush2.xpose.msra.mxu0 0.0
        %2161 = vmatprep.subr.mxu0 0.0
        %2162 = vmatpush2.xpose.msra.mxu0 0.0
        %2163 = vmatprep.subr.mxu0 0.0
        %2164 = vmatpush2.xpose.msra.mxu0 0.0
        %2165 = vmatprep.mubr.f32.mxu0 0.0
        %2166 = vmatmul.mubr.f32.gmra.mxu0 %v2085
        %v2167 = vpop.f32.mrf.mxu0
        %v2168 = vadd.f32 0.0, %v2167
        %v2169 = vpop.f32.mrf.mxu0
        %2170 = vmatprep.mubr.f32.mxu0 0.0
        %2171 = vmatmul.mubr.f32.gmra.mxu0 %v2087
        %v2172 = vpop.f32.mrf.mxu0
        %v2173 = vadd.f32 0.0, %v2172
        %v2174 = vpop.f32.mrf.mxu0
        %2175 = vmatprep.mubr.f32.mxu0 0.0
        %2176 = vmatmul.mubr.f32.gmra.mxu0 %v2089
        %v2177 = vpop.f32.mrf.mxu0
        %v2178 = vadd.f32 0.0, %v2177
        %v2179 = vpop.f32.mrf.mxu0
        %2180 = vmatprep.mubr.f32.mxu0 0.0
        %2181 = vmatmul.mubr.f32.gmra.mxu0 %v2091
        %v2182 = vpop.f32.mrf.mxu0
        %v2183 = vadd.f32 0.0, %v2182
        %v2184 = vpop.f32.mrf.mxu0
        %2185 = vdwg.mxu0
        %2186 = vrot.lane.b32.xlu0 %v846, 96
        %v2187 = vpop.permute.xlu0 %2186
        %2188 = vrot.lane.b32.xlu0 %v848, 96
        %v2189 = vpop.permute.xlu0 %2188
        %2190 = vrot.lane.b32.xlu0 %v850, 96
        %v2191 = vpop.permute.xlu0 %2190
        %2192 = vrot.lane.b32.xlu0 %v852, 96
        %v2193 = vpop.permute.xlu0 %2192
        %v2194 = vsel %vm885, %v734, 0
        %v2196 = vsel %vm885, %v736, 0
        %v2198 = vsel %vm885, %v738, 0
        %v2200 = vsel %vm885, %v740, 0
        %v2202 = vsel %vm885, %v2187, 0
        %v2204 = vsel %vm885, %v2189, 0
        %v2206 = vsel %vm885, %v2191, 0
        %v2208 = vsel %vm885, %v2193, 0
        %2210 = vmatprep.subr.mxu0 0.0
        %2211 = vmatpush1.xpose.msra.mxu0 0.0
        %2212 = vmatprep.subr.mxu0 0.0
        %2213 = vmatpush1.xpose.msra.mxu0 0.0
        %2214 = vmatprep.subr.mxu0 0.0
        %2215 = vmatpush1.xpose.msra.mxu0 0.0
        %2216 = vmatprep.subr.mxu0 0.0
        %2217 = vmatpush1.xpose.msra.mxu0 0.0
        %2218 = vmatprep.subr.mxu0 0.0
        %2219 = vmatpush1.xpose.msra.mxu0 0.0
        %2220 = vmatprep.subr.mxu0 0.0
        %2221 = vmatpush1.xpose.msra.mxu0 0.0
        %2222 = vmatprep.subr.mxu0 0.0
        %2223 = vmatpush1.xpose.msra.mxu0 0.0
        %2224 = vmatprep.subr.mxu0 0.0
        %2225 = vmatpush1.xpose.msra.mxu0 0.0
        %2226 = vmatprep.subr.mxu0 0.0
        %2227 = vmatpush1.xpose.msra.mxu0 0.0
        %2228 = vmatprep.subr.mxu0 0.0
        %2229 = vmatpush1.xpose.msra.mxu0 0.0
        %2230 = vmatprep.subr.mxu0 0.0
        %2231 = vmatpush1.xpose.msra.mxu0 0.0
        %2232 = vmatprep.subr.mxu0 0.0
        %2233 = vmatpush1.xpose.msra.mxu0 0.0
        %2234 = vmatprep.subr.mxu0 0.0
        %2235 = vmatpush1.xpose.msra.mxu0 %v2208
        %2236 = vmatprep.subr.mxu0 0.0
        %2237 = vmatpush1.xpose.msra.mxu0 %v2206
        %2238 = vmatprep.subr.mxu0 0.0
        %2239 = vmatpush1.xpose.msra.mxu0 %v2204
        %2240 = vmatprep.subr.mxu0 0.0
        %2241 = vmatpush1.xpose.msra.mxu0 %v2202
        %2242 = vmatprep.subr.mxu0 0.0
        %2243 = vmatpush2.xpose.msra.mxu0 0.0
        %2244 = vmatprep.subr.mxu0 0.0
        %2245 = vmatpush2.xpose.msra.mxu0 0.0
        %2246 = vmatprep.subr.mxu0 0.0
        %2247 = vmatpush2.xpose.msra.mxu0 0.0
        %2248 = vmatprep.subr.mxu0 0.0
        %2249 = vmatpush2.xpose.msra.mxu0 0.0
        %2250 = vmatprep.subr.mxu0 0.0
        %2251 = vmatpush2.xpose.msra.mxu0 0.0
        %2252 = vmatprep.subr.mxu0 0.0
        %2253 = vmatpush2.xpose.msra.mxu0 0.0
        %2254 = vmatprep.subr.mxu0 0.0
        %2255 = vmatpush2.xpose.msra.mxu0 0.0
        %2256 = vmatprep.subr.mxu0 0.0
        %2257 = vmatpush2.xpose.msra.mxu0 0.0
        %2258 = vmatprep.subr.mxu0 0.0
        %2259 = vmatpush2.xpose.msra.mxu0 0.0
        %2260 = vmatprep.subr.mxu0 0.0
        %2261 = vmatpush2.xpose.msra.mxu0 0.0
        %2262 = vmatprep.subr.mxu0 0.0
        %2263 = vmatpush2.xpose.msra.mxu0 0.0
        %2264 = vmatprep.subr.mxu0 0.0
        %2265 = vmatpush2.xpose.msra.mxu0 0.0
        %2266 = vmatprep.subr.mxu0 0.0
        %2267 = vmatpush2.xpose.msra.mxu0 0.0
        %2268 = vmatprep.subr.mxu0 0.0
        %2269 = vmatpush2.xpose.msra.mxu0 0.0
        %2270 = vmatprep.subr.mxu0 0.0
        %2271 = vmatpush2.xpose.msra.mxu0 0.0
        %2272 = vmatprep.subr.mxu0 0.0
        %2273 = vmatpush2.xpose.msra.mxu0 0.0
        %2274 = vmatprep.mubr.f32.mxu0 0.0
        %2275 = vmatmul.mubr.f32.gmra.mxu0 %v2194
        %v2276 = vpop.f32.mrf.mxu0
        %v2277 = vadd.f32 0.0, %v2276
        %v2278 = vpop.f32.mrf.mxu0
        %2279 = vmatprep.mubr.f32.mxu0 0.0
        %2280 = vmatmul.mubr.f32.gmra.mxu0 %v2196
        %v2281 = vpop.f32.mrf.mxu0
        %v2282 = vadd.f32 0.0, %v2281
        %v2283 = vpop.f32.mrf.mxu0
        %2284 = vmatprep.mubr.f32.mxu0 0.0
        %2285 = vmatmul.mubr.f32.gmra.mxu0 %v2198
        %v2286 = vpop.f32.mrf.mxu0
        %v2287 = vadd.f32 0.0, %v2286
        %v2288 = vpop.f32.mrf.mxu0
        %2289 = vmatprep.mubr.f32.mxu0 0.0
        %2290 = vmatmul.mubr.f32.gmra.mxu0 %v2200
        %v2291 = vpop.f32.mrf.mxu0
        %v2292 = vadd.f32 0.0, %v2291
        %v2293 = vpop.f32.mrf.mxu0
        %2294 = vdwg.mxu0
        %2295 = vrot.lane.b32.xlu0 %v854, 96
        %v2296 = vpop.permute.xlu0 %2295
        %2297 = vrot.lane.b32.xlu0 %v856, 96
        %v2298 = vpop.permute.xlu0 %2297
        %2299 = vrot.lane.b32.xlu0 %v858, 96
        %v2300 = vpop.permute.xlu0 %2299
        %2301 = vrot.lane.b32.xlu0 %v860, 96
        %v2302 = vpop.permute.xlu0 %2301
        %v2303 = vsel %vm885, %v742, 0
        %v2305 = vsel %vm885, %v744, 0
        %v2307 = vsel %vm885, %v746, 0
        %v2309 = vsel %vm885, %v748, 0
        %v2311 = vsel %vm885, %v2296, 0
        %v2313 = vsel %vm885, %v2298, 0
        %v2315 = vsel %vm885, %v2300, 0
        %v2317 = vsel %vm885, %v2302, 0
        %2319 = vmatprep.subr.mxu0 0.0
        %2320 = vmatpush1.xpose.msra.mxu0 0.0
        %2321 = vmatprep.subr.mxu0 0.0
        %2322 = vmatpush1.xpose.msra.mxu0 0.0
        %2323 = vmatprep.subr.mxu0 0.0
        %2324 = vmatpush1.xpose.msra.mxu0 0.0
        %2325 = vmatprep.subr.mxu0 0.0
        %2326 = vmatpush1.xpose.msra.mxu0 0.0
        %2327 = vmatprep.subr.mxu0 0.0
        %2328 = vmatpush1.xpose.msra.mxu0 0.0
        %2329 = vmatprep.subr.mxu0 0.0
        %2330 = vmatpush1.xpose.msra.mxu0 0.0
        %2331 = vmatprep.subr.mxu0 0.0
        %2332 = vmatpush1.xpose.msra.mxu0 0.0
        %2333 = vmatprep.subr.mxu0 0.0
        %2334 = vmatpush1.xpose.msra.mxu0 0.0
        %2335 = vmatprep.subr.mxu0 0.0
        %2336 = vmatpush1.xpose.msra.mxu0 0.0
        %2337 = vmatprep.subr.mxu0 0.0
        %2338 = vmatpush1.xpose.msra.mxu0 0.0
        %2339 = vmatprep.subr.mxu0 0.0
        %2340 = vmatpush1.xpose.msra.mxu0 0.0
        %2341 = vmatprep.subr.mxu0 0.0
        %2342 = vmatpush1.xpose.msra.mxu0 0.0
        %2343 = vmatprep.subr.mxu0 0.0
        %2344 = vmatpush1.xpose.msra.mxu0 %v2317
        %2345 = vmatprep.subr.mxu0 0.0
        %2346 = vmatpush1.xpose.msra.mxu0 %v2315
        %2347 = vmatprep.subr.mxu0 0.0
        %2348 = vmatpush1.xpose.msra.mxu0 %v2313
        %2349 = vmatprep.subr.mxu0 0.0
        %2350 = vmatpush1.xpose.msra.mxu0 %v2311
        %2351 = vmatprep.subr.mxu0 0.0
        %2352 = vmatpush2.xpose.msra.mxu0 0.0
        %2353 = vmatprep.subr.mxu0 0.0
        %2354 = vmatpush2.xpose.msra.mxu0 0.0
        %2355 = vmatprep.subr.mxu0 0.0
        %2356 = vmatpush2.xpose.msra.mxu0 0.0
        %2357 = vmatprep.subr.mxu0 0.0
        %2358 = vmatpush2.xpose.msra.mxu0 0.0
        %2359 = vmatprep.subr.mxu0 0.0
        %2360 = vmatpush2.xpose.msra.mxu0 0.0
        %2361 = vmatprep.subr.mxu0 0.0
        %2362 = vmatpush2.xpose.msra.mxu0 0.0
        %2363 = vmatprep.subr.mxu0 0.0
        %2364 = vmatpush2.xpose.msra.mxu0 0.0
        %2365 = vmatprep.subr.mxu0 0.0
        %2366 = vmatpush2.xpose.msra.mxu0 0.0
        %2367 = vmatprep.subr.mxu0 0.0
        %2368 = vmatpush2.xpose.msra.mxu0 0.0
        %2369 = vmatprep.subr.mxu0 0.0
        %2370 = vmatpush2.xpose.msra.mxu0 0.0
        %2371 = vmatprep.subr.mxu0 0.0
        %2372 = vmatpush2.xpose.msra.mxu0 0.0
        %2373 = vmatprep.subr.mxu0 0.0
        %2374 = vmatpush2.xpose.msra.mxu0 0.0
        %2375 = vmatprep.subr.mxu0 0.0
        %2376 = vmatpush2.xpose.msra.mxu0 0.0
        %2377 = vmatprep.subr.mxu0 0.0
        %2378 = vmatpush2.xpose.msra.mxu0 0.0
        %2379 = vmatprep.subr.mxu0 0.0
        %2380 = vmatpush2.xpose.msra.mxu0 0.0
        %2381 = vmatprep.subr.mxu0 0.0
        %2382 = vmatpush2.xpose.msra.mxu0 0.0
        %2383 = vmatprep.mubr.f32.mxu0 0.0
        %2384 = vmatmul.mubr.f32.gmra.mxu0 %v2303
        %v2385 = vpop.f32.mrf.mxu0
        %v2386 = vadd.f32 0.0, %v2385
        %v2387 = vpop.f32.mrf.mxu0
        %2388 = vmatprep.mubr.f32.mxu0 0.0
        %2389 = vmatmul.mubr.f32.gmra.mxu0 %v2305
        %v2390 = vpop.f32.mrf.mxu0
        %v2391 = vadd.f32 0.0, %v2390
        %v2392 = vpop.f32.mrf.mxu0
        %2393 = vmatprep.mubr.f32.mxu0 0.0
        %2394 = vmatmul.mubr.f32.gmra.mxu0 %v2307
        %v2395 = vpop.f32.mrf.mxu0
        %v2396 = vadd.f32 0.0, %v2395
        %v2397 = vpop.f32.mrf.mxu0
        %2398 = vmatprep.mubr.f32.mxu0 0.0
        %2399 = vmatmul.mubr.f32.gmra.mxu0 %v2309
        %v2400 = vpop.f32.mrf.mxu0
        %v2401 = vadd.f32 0.0, %v2400
        %v2402 = vpop.f32.mrf.mxu0
        %2403 = vdwg.mxu0
        %2404 = vrot.lane.b32.xlu0 %v862, 96
        %v2405 = vpop.permute.xlu0 %2404
        %2406 = vrot.lane.b32.xlu0 %v864, 96
        %v2407 = vpop.permute.xlu0 %2406
        %2408 = vrot.lane.b32.xlu0 %v866, 96
        %v2409 = vpop.permute.xlu0 %2408
        %2410 = vrot.lane.b32.xlu0 %v868, 96
        %v2411 = vpop.permute.xlu0 %2410
        %v2412 = vsel %vm885, %v750, 0
        %v2414 = vsel %vm885, %v752, 0
        %v2416 = vsel %vm885, %v754, 0
        %v2418 = vsel %vm885, %v756, 0
        %v2420 = vsel %vm885, %v2405, 0
        %v2422 = vsel %vm885, %v2407, 0
        %v2424 = vsel %vm885, %v2409, 0
        %v2426 = vsel %vm885, %v2411, 0
        %2428 = vmatprep.subr.mxu0 0.0
        %2429 = vmatpush1.xpose.msra.mxu0 0.0
        %2430 = vmatprep.subr.mxu0 0.0
        %2431 = vmatpush1.xpose.msra.mxu0 0.0
        %2432 = vmatprep.subr.mxu0 0.0
        %2433 = vmatpush1.xpose.msra.mxu0 0.0
        %2434 = vmatprep.subr.mxu0 0.0
        %2435 = vmatpush1.xpose.msra.mxu0 0.0
        %2436 = vmatprep.subr.mxu0 0.0
        %2437 = vmatpush1.xpose.msra.mxu0 0.0
        %2438 = vmatprep.subr.mxu0 0.0
        %2439 = vmatpush1.xpose.msra.mxu0 0.0
        %2440 = vmatprep.subr.mxu0 0.0
        %2441 = vmatpush1.xpose.msra.mxu0 0.0
        %2442 = vmatprep.subr.mxu0 0.0
        %2443 = vmatpush1.xpose.msra.mxu0 0.0
        %2444 = vmatprep.subr.mxu0 0.0
        %2445 = vmatpush1.xpose.msra.mxu0 0.0
        %2446 = vmatprep.subr.mxu0 0.0
        %2447 = vmatpush1.xpose.msra.mxu0 0.0
        %2448 = vmatprep.subr.mxu0 0.0
        %2449 = vmatpush1.xpose.msra.mxu0 0.0
        %2450 = vmatprep.subr.mxu0 0.0
        %2451 = vmatpush1.xpose.msra.mxu0 0.0
        %2452 = vmatprep.subr.mxu0 0.0
        %2453 = vmatpush1.xpose.msra.mxu0 %v2426
        %2454 = vmatprep.subr.mxu0 0.0
        %2455 = vmatpush1.xpose.msra.mxu0 %v2424
        %2456 = vmatprep.subr.mxu0 0.0
        %2457 = vmatpush1.xpose.msra.mxu0 %v2422
        %2458 = vmatprep.subr.mxu0 0.0
        %2459 = vmatpush1.xpose.msra.mxu0 %v2420
        %2460 = vmatprep.subr.mxu0 0.0
        %2461 = vmatpush2.xpose.msra.mxu0 0.0
        %2462 = vmatprep.subr.mxu0 0.0
        %2463 = vmatpush2.xpose.msra.mxu0 0.0
        %2464 = vmatprep.subr.mxu0 0.0
        %2465 = vmatpush2.xpose.msra.mxu0 0.0
        %2466 = vmatprep.subr.mxu0 0.0
        %2467 = vmatpush2.xpose.msra.mxu0 0.0
        %2468 = vmatprep.subr.mxu0 0.0
        %2469 = vmatpush2.xpose.msra.mxu0 0.0
        %2470 = vmatprep.subr.mxu0 0.0
        %2471 = vmatpush2.xpose.msra.mxu0 0.0
        %2472 = vmatprep.subr.mxu0 0.0
        %2473 = vmatpush2.xpose.msra.mxu0 0.0
        %2474 = vmatprep.subr.mxu0 0.0
        %2475 = vmatpush2.xpose.msra.mxu0 0.0
        %2476 = vmatprep.subr.mxu0 0.0
        %2477 = vmatpush2.xpose.msra.mxu0 0.0
        %2478 = vmatprep.subr.mxu0 0.0
        %2479 = vmatpush2.xpose.msra.mxu0 0.0
        %2480 = vmatprep.subr.mxu0 0.0
        %2481 = vmatpush2.xpose.msra.mxu0 0.0
        %2482 = vmatprep.subr.mxu0 0.0
        %2483 = vmatpush2.xpose.msra.mxu0 0.0
        %2484 = vmatprep.subr.mxu0 0.0
        %2485 = vmatpush2.xpose.msra.mxu0 0.0
        %2486 = vmatprep.subr.mxu0 0.0
        %2487 = vmatpush2.xpose.msra.mxu0 0.0
        %2488 = vmatprep.subr.mxu0 0.0
        %2489 = vmatpush2.xpose.msra.mxu0 0.0
        %2490 = vmatprep.subr.mxu0 0.0
        %2491 = vmatpush2.xpose.msra.mxu0 0.0
        %2492 = vmatprep.mubr.f32.mxu0 0.0
        %2493 = vmatmul.mubr.f32.gmra.mxu0 %v2412
        %v2494 = vpop.f32.mrf.mxu0
        %v2495 = vadd.f32 0.0, %v2494
        %v2496 = vpop.f32.mrf.mxu0
        %2497 = vmatprep.mubr.f32.mxu0 0.0
        %2498 = vmatmul.mubr.f32.gmra.mxu0 %v2414
        %v2499 = vpop.f32.mrf.mxu0
        %v2500 = vadd.f32 0.0, %v2499
        %v2501 = vpop.f32.mrf.mxu0
        %2502 = vmatprep.mubr.f32.mxu0 0.0
        %2503 = vmatmul.mubr.f32.gmra.mxu0 %v2416
        %v2504 = vpop.f32.mrf.mxu0
        %v2505 = vadd.f32 0.0, %v2504
        %v2506 = vpop.f32.mrf.mxu0
        %2507 = vmatprep.mubr.f32.mxu0 0.0
        %2508 = vmatmul.mubr.f32.gmra.mxu0 %v2418
        %v2509 = vpop.f32.mrf.mxu0
        %v2510 = vadd.f32 0.0, %v2509
        %v2511 = vpop.f32.mrf.mxu0
        %2512 = vdwg.mxu0
        %2513 = vrot.lane.b32.xlu0 %v870, 96
        %v2514 = vpop.permute.xlu0 %2513
        %2515 = vrot.lane.b32.xlu0 %v872, 96
        %v2516 = vpop.permute.xlu0 %2515
        %2517 = vrot.lane.b32.xlu0 %v874, 96
        %v2518 = vpop.permute.xlu0 %2517
        %2519 = vrot.lane.b32.xlu0 %v876, 96
        %v2520 = vpop.permute.xlu0 %2519
        %v2521 = vsel %vm885, %v758, 0
        %v2523 = vsel %vm885, %v760, 0
        %v2525 = vsel %vm885, %v762, 0
        %v2527 = vsel %vm885, %v764, 0
        %v2529 = vsel %vm885, %v2514, 0
        %v2531 = vsel %vm885, %v2516, 0
        %v2533 = vsel %vm885, %v2518, 0
        %v2535 = vsel %vm885, %v2520, 0
        %2537 = vmatprep.subr.mxu0 0.0
        %2538 = vmatpush1.xpose.msra.mxu0 0.0
        %2539 = vmatprep.subr.mxu0 0.0
        %2540 = vmatpush1.xpose.msra.mxu0 0.0
        %2541 = vmatprep.subr.mxu0 0.0
        %2542 = vmatpush1.xpose.msra.mxu0 0.0
        %2543 = vmatprep.subr.mxu0 0.0
        %2544 = vmatpush1.xpose.msra.mxu0 0.0
        %2545 = vmatprep.subr.mxu0 0.0
        %2546 = vmatpush1.xpose.msra.mxu0 0.0
        %2547 = vmatprep.subr.mxu0 0.0
        %2548 = vmatpush1.xpose.msra.mxu0 0.0
        %2549 = vmatprep.subr.mxu0 0.0
        %2550 = vmatpush1.xpose.msra.mxu0 0.0
        %2551 = vmatprep.subr.mxu0 0.0
        %2552 = vmatpush1.xpose.msra.mxu0 0.0
        %2553 = vmatprep.subr.mxu0 0.0
        %2554 = vmatpush1.xpose.msra.mxu0 0.0
        %2555 = vmatprep.subr.mxu0 0.0
        %2556 = vmatpush1.xpose.msra.mxu0 0.0
        %2557 = vmatprep.subr.mxu0 0.0
        %2558 = vmatpush1.xpose.msra.mxu0 0.0
        %2559 = vmatprep.subr.mxu0 0.0
        %2560 = vmatpush1.xpose.msra.mxu0 0.0
        %2561 = vmatprep.subr.mxu0 0.0
        %2562 = vmatpush1.xpose.msra.mxu0 %v2535
        %2563 = vmatprep.subr.mxu0 0.0
        %2564 = vmatpush1.xpose.msra.mxu0 %v2533
        %2565 = vmatprep.subr.mxu0 0.0
        %2566 = vmatpush1.xpose.msra.mxu0 %v2531
        %2567 = vmatprep.subr.mxu0 0.0
        %2568 = vmatpush1.xpose.msra.mxu0 %v2529
        %2569 = vmatprep.subr.mxu0 0.0
        %2570 = vmatpush2.xpose.msra.mxu0 0.0
        %2571 = vmatprep.subr.mxu0 0.0
        %2572 = vmatpush2.xpose.msra.mxu0 0.0
        %2573 = vmatprep.subr.mxu0 0.0
        %2574 = vmatpush2.xpose.msra.mxu0 0.0
        %2575 = vmatprep.subr.mxu0 0.0
        %2576 = vmatpush2.xpose.msra.mxu0 0.0
        %2577 = vmatprep.subr.mxu0 0.0
        %2578 = vmatpush2.xpose.msra.mxu0 0.0
        %2579 = vmatprep.subr.mxu0 0.0
        %2580 = vmatpush2.xpose.msra.mxu0 0.0
        %2581 = vmatprep.subr.mxu0 0.0
        %2582 = vmatpush2.xpose.msra.mxu0 0.0
        %2583 = vmatprep.subr.mxu0 0.0
        %2584 = vmatpush2.xpose.msra.mxu0 0.0
        %2585 = vmatprep.subr.mxu0 0.0
        %2586 = vmatpush2.xpose.msra.mxu0 0.0
        %2587 = vmatprep.subr.mxu0 0.0
        %2588 = vmatpush2.xpose.msra.mxu0 0.0
        %2589 = vmatprep.subr.mxu0 0.0
        %2590 = vmatpush2.xpose.msra.mxu0 0.0
        %2591 = vmatprep.subr.mxu0 0.0
        %2592 = vmatpush2.xpose.msra.mxu0 0.0
        %2593 = vmatprep.subr.mxu0 0.0
        %2594 = vmatpush2.xpose.msra.mxu0 0.0
        %2595 = vmatprep.subr.mxu0 0.0
        %2596 = vmatpush2.xpose.msra.mxu0 0.0
        %2597 = vmatprep.subr.mxu0 0.0
        %2598 = vmatpush2.xpose.msra.mxu0 0.0
        %2599 = vmatprep.subr.mxu0 0.0
        %2600 = vmatpush2.xpose.msra.mxu0 0.0
        %2601 = vmatprep.mubr.f32.mxu0 0.0
        %2602 = vmatmul.mubr.f32.gmra.mxu0 %v2521
        %v2603 = vpop.f32.mrf.mxu0
        %v2604 = vadd.f32 0.0, %v2603
        %v2605 = vpop.f32.mrf.mxu0
        %2606 = vmatprep.mubr.f32.mxu0 0.0
        %2607 = vmatmul.mubr.f32.gmra.mxu0 %v2523
        %v2608 = vpop.f32.mrf.mxu0
        %v2609 = vadd.f32 0.0, %v2608
        %v2610 = vpop.f32.mrf.mxu0
        %2611 = vmatprep.mubr.f32.mxu0 0.0
        %2612 = vmatmul.mubr.f32.gmra.mxu0 %v2525
        %v2613 = vpop.f32.mrf.mxu0
        %v2614 = vadd.f32 0.0, %v2613
        %v2615 = vpop.f32.mrf.mxu0
        %2616 = vmatprep.mubr.f32.mxu0 0.0
        %2617 = vmatmul.mubr.f32.gmra.mxu0 %v2527
        %v2618 = vpop.f32.mrf.mxu0
        %v2619 = vadd.f32 0.0, %v2618
        %v2620 = vpop.f32.mrf.mxu0
        %2621 = vdwg.mxu0
        %v2622 = vsel %vm443, %v969, -inf
        %2623 = vmax.xlane.f32.xlu0 %v2622
        %v2624 = vpop.xlane.xlu0 %2623
        %v2625 = vsel %vm443, %v974, -inf
        %2626 = vmax.xlane.f32.xlu0 %v2625
        %v2627 = vpop.xlane.xlu0 %2626
        %v2628 = vsel %vm443, %v979, -inf
        %2629 = vmax.xlane.f32.xlu0 %v2628
        %v2630 = vpop.xlane.xlu0 %2629
        %v2631 = vsel %vm443, %v984, -inf
        %2632 = vmax.xlane.f32.xlu0 %v2631
        %v2633 = vpop.xlane.xlu0 %2632
        %v2634 = vsel %vm443, %v1078, -inf
        %2635 = vmax.xlane.f32.xlu0 %v2634
        %v2636 = vpop.xlane.xlu0 %2635
        %v2637 = vsel %vm443, %v1083, -inf
        %2638 = vmax.xlane.f32.xlu0 %v2637
        %v2639 = vpop.xlane.xlu0 %2638
        %v2640 = vsel %vm443, %v1088, -inf
        %2641 = vmax.xlane.f32.xlu0 %v2640
        %v2642 = vpop.xlane.xlu0 %2641
        %v2643 = vsel %vm443, %v1093, -inf
        %2644 = vmax.xlane.f32.xlu0 %v2643
        %v2645 = vpop.xlane.xlu0 %2644
        %v2646 = vsel %vm443, %v1187, -inf
        %2647 = vmax.xlane.f32.xlu0 %v2646
        %v2648 = vpop.xlane.xlu0 %2647
        %v2649 = vsel %vm443, %v1192, -inf
        %2650 = vmax.xlane.f32.xlu0 %v2649
        %v2651 = vpop.xlane.xlu0 %2650
        %v2652 = vsel %vm443, %v1197, -inf
        %2653 = vmax.xlane.f32.xlu0 %v2652
        %v2654 = vpop.xlane.xlu0 %2653
        %v2655 = vsel %vm443, %v1202, -inf
        %2656 = vmax.xlane.f32.xlu0 %v2655
        %v2657 = vpop.xlane.xlu0 %2656
        %v2658 = vsel %vm443, %v1296, -inf
        %2659 = vmax.xlane.f32.xlu0 %v2658
        %v2660 = vpop.xlane.xlu0 %2659
        %v2661 = vsel %vm443, %v1301, -inf
        %2662 = vmax.xlane.f32.xlu0 %v2661
        %v2663 = vpop.xlane.xlu0 %2662
        %v2664 = vsel %vm443, %v1306, -inf
        %2665 = vmax.xlane.f32.xlu0 %v2664
        %v2666 = vpop.xlane.xlu0 %2665
        %v2667 = vsel %vm443, %v1311, -inf
        %2668 = vmax.xlane.f32.xlu0 %v2667
        %v2669 = vpop.xlane.xlu0 %2668
        %v2670 = vsel %vm443, %v1405, -inf
        %2671 = vmax.xlane.f32.xlu0 %v2670
        %v2672 = vpop.xlane.xlu0 %2671
        %v2673 = vsel %vm443, %v1410, -inf
        %2674 = vmax.xlane.f32.xlu0 %v2673
        %v2675 = vpop.xlane.xlu0 %2674
        %v2676 = vsel %vm443, %v1415, -inf
        %2677 = vmax.xlane.f32.xlu0 %v2676
        %v2678 = vpop.xlane.xlu0 %2677
        %v2679 = vsel %vm443, %v1420, -inf
        %2680 = vmax.xlane.f32.xlu0 %v2679
        %v2681 = vpop.xlane.xlu0 %2680
        %v2682 = vsel %vm443, %v1514, -inf
        %2683 = vmax.xlane.f32.xlu0 %v2682
        %v2684 = vpop.xlane.xlu0 %2683
        %v2685 = vsel %vm443, %v1519, -inf
        %2686 = vmax.xlane.f32.xlu0 %v2685
        %v2687 = vpop.xlane.xlu0 %2686
        %v2688 = vsel %vm443, %v1524, -inf
        %2689 = vmax.xlane.f32.xlu0 %v2688
        %v2690 = vpop.xlane.xlu0 %2689
        %v2691 = vsel %vm443, %v1529, -inf
        %2692 = vmax.xlane.f32.xlu0 %v2691
        %v2693 = vpop.xlane.xlu0 %2692
        %v2694 = vsel %vm443, %v1623, -inf
        %2695 = vmax.xlane.f32.xlu0 %v2694
        %v2696 = vpop.xlane.xlu0 %2695
        %v2697 = vsel %vm443, %v1628, -inf
        %2698 = vmax.xlane.f32.xlu0 %v2697
        %v2699 = vpop.xlane.xlu0 %2698
        %v2700 = vsel %vm443, %v1633, -inf
        %2701 = vmax.xlane.f32.xlu0 %v2700
        %v2702 = vpop.xlane.xlu0 %2701
        %v2703 = vsel %vm443, %v1638, -inf
        %2704 = vmax.xlane.f32.xlu0 %v2703
        %v2705 = vpop.xlane.xlu0 %2704
        %v2706 = vsel %vm443, %v1732, -inf
        %2707 = vmax.xlane.f32.xlu0 %v2706
        %v2708 = vpop.xlane.xlu0 %2707
        %v2709 = vsel %vm443, %v1737, -inf
        %2710 = vmax.xlane.f32.xlu0 %v2709
        %v2711 = vpop.xlane.xlu0 %2710
        %v2712 = vsel %vm443, %v1742, -inf
        %2713 = vmax.xlane.f32.xlu0 %v2712
        %v2714 = vpop.xlane.xlu0 %2713
        %v2715 = vsel %vm443, %v1747, -inf
        %2716 = vmax.xlane.f32.xlu0 %v2715
        %v2717 = vpop.xlane.xlu0 %2716
        %v2718 = vsel %vm443, %v1841, -inf
        %2719 = vmax.xlane.f32.xlu0 %v2718
        %v2720 = vpop.xlane.xlu0 %2719
        %v2721 = vsel %vm443, %v1846, -inf
        %2722 = vmax.xlane.f32.xlu0 %v2721
        %v2723 = vpop.xlane.xlu0 %2722
        %v2724 = vsel %vm443, %v1851, -inf
        %2725 = vmax.xlane.f32.xlu0 %v2724
        %v2726 = vpop.xlane.xlu0 %2725
        %v2727 = vsel %vm443, %v1856, -inf
        %2728 = vmax.xlane.f32.xlu0 %v2727
        %v2729 = vpop.xlane.xlu0 %2728
        %v2730 = vsel %vm443, %v1950, -inf
        %2731 = vmax.xlane.f32.xlu0 %v2730
        %v2732 = vpop.xlane.xlu0 %2731
        %v2733 = vsel %vm443, %v1955, -inf
        %2734 = vmax.xlane.f32.xlu0 %v2733
        %v2735 = vpop.xlane.xlu0 %2734
        %v2736 = vsel %vm443, %v1960, -inf
        %2737 = vmax.xlane.f32.xlu0 %v2736
        %v2738 = vpop.xlane.xlu0 %2737
        %v2739 = vsel %vm443, %v1965, -inf
        %2740 = vmax.xlane.f32.xlu0 %v2739
        %v2741 = vpop.xlane.xlu0 %2740
        %v2742 = vsel %vm443, %v2059, -inf
        %2743 = vmax.xlane.f32.xlu0 %v2742
        %v2744 = vpop.xlane.xlu0 %2743
        %v2745 = vsel %vm443, %v2064, -inf
        %2746 = vmax.xlane.f32.xlu0 %v2745
        %v2747 = vpop.xlane.xlu0 %2746
        %v2748 = vsel %vm443, %v2069, -inf
        %2749 = vmax.xlane.f32.xlu0 %v2748
        %v2750 = vpop.xlane.xlu0 %2749
        %v2751 = vsel %vm443, %v2074, -inf
        %2752 = vmax.xlane.f32.xlu0 %v2751
        %v2753 = vpop.xlane.xlu0 %2752
        %v2754 = vsel %vm443, %v2168, -inf
        %2755 = vmax.xlane.f32.xlu0 %v2754
        %v2756 = vpop.xlane.xlu0 %2755
        %v2757 = vsel %vm443, %v2173, -inf
        %2758 = vmax.xlane.f32.xlu0 %v2757
        %v2759 = vpop.xlane.xlu0 %2758
        %v2760 = vsel %vm443, %v2178, -inf
        %2761 = vmax.xlane.f32.xlu0 %v2760
        %v2762 = vpop.xlane.xlu0 %2761
        %v2763 = vsel %vm443, %v2183, -inf
        %2764 = vmax.xlane.f32.xlu0 %v2763
        %v2765 = vpop.xlane.xlu0 %2764
        %v2766 = vsel %vm443, %v2277, -inf
        %2767 = vmax.xlane.f32.xlu0 %v2766
        %v2768 = vpop.xlane.xlu0 %2767
        %v2769 = vsel %vm443, %v2282, -inf
        %2770 = vmax.xlane.f32.xlu0 %v2769
        %v2771 = vpop.xlane.xlu0 %2770
        %v2772 = vsel %vm443, %v2287, -inf
        %2773 = vmax.xlane.f32.xlu0 %v2772
        %v2774 = vpop.xlane.xlu0 %2773
        %v2775 = vsel %vm443, %v2292, -inf
        %2776 = vmax.xlane.f32.xlu0 %v2775
        %v2777 = vpop.xlane.xlu0 %2776
        %v2778 = vsel %vm443, %v2386, -inf
        %2779 = vmax.xlane.f32.xlu0 %v2778
        %v2780 = vpop.xlane.xlu0 %2779
        %v2781 = vsel %vm443, %v2391, -inf
        %2782 = vmax.xlane.f32.xlu0 %v2781
        %v2783 = vpop.xlane.xlu0 %2782
        %v2784 = vsel %vm443, %v2396, -inf
        %2785 = vmax.xlane.f32.xlu0 %v2784
        %v2786 = vpop.xlane.xlu0 %2785
        %v2787 = vsel %vm443, %v2401, -inf
        %2788 = vmax.xlane.f32.xlu0 %v2787
        %v2789 = vpop.xlane.xlu0 %2788
        %v2790 = vsel %vm443, %v2495, -inf
        %2791 = vmax.xlane.f32.xlu0 %v2790
        %v2792 = vpop.xlane.xlu0 %2791
        %v2793 = vsel %vm443, %v2500, -inf
        %2794 = vmax.xlane.f32.xlu0 %v2793
        %v2795 = vpop.xlane.xlu0 %2794
        %v2796 = vsel %vm443, %v2505, -inf
        %2797 = vmax.xlane.f32.xlu0 %v2796
        %v2798 = vpop.xlane.xlu0 %2797
        %v2799 = vsel %vm443, %v2510, -inf
        %2800 = vmax.xlane.f32.xlu0 %v2799
        %v2801 = vpop.xlane.xlu0 %2800
        %v2802 = vsel %vm443, %v2604, -inf
        %2803 = vmax.xlane.f32.xlu0 %v2802
        %v2804 = vpop.xlane.xlu0 %2803
        %v2805 = vsel %vm443, %v2609, -inf
        %2806 = vmax.xlane.f32.xlu0 %v2805
        %v2807 = vpop.xlane.xlu0 %2806
        %v2808 = vsel %vm443, %v2614, -inf
        %2809 = vmax.xlane.f32.xlu0 %v2808
        %v2810 = vpop.xlane.xlu0 %2809
        %v2811 = vsel %vm443, %v2619, -inf
        %2812 = vmax.xlane.f32.xlu0 %v2811
        %v2813 = vpop.xlane.xlu0 %2812
        %v2814 = vsub.f32 %v969, %v2624
        %v2815 = vsub.f32 %v974, %v2627
        %v2816 = vsub.f32 %v979, %v2630
        %v2817 = vsub.f32 %v984, %v2633
        %v2818 = vsub.f32 %v1078, %v2636
        %v2819 = vsub.f32 %v1083, %v2639
        %v2820 = vsub.f32 %v1088, %v2642
        %v2821 = vsub.f32 %v1093, %v2645
        %v2822 = vsub.f32 %v1187, %v2648
        %v2823 = vsub.f32 %v1192, %v2651
        %v2824 = vsub.f32 %v1197, %v2654
        %v2825 = vsub.f32 %v1202, %v2657
        %v2826 = vsub.f32 %v1296, %v2660
        %v2827 = vsub.f32 %v1301, %v2663
        %v2828 = vsub.f32 %v1306, %v2666
        %v2829 = vsub.f32 %v1311, %v2669
        %v2830 = vsub.f32 %v1405, %v2672
        %v2831 = vsub.f32 %v1410, %v2675
        %v2832 = vsub.f32 %v1415, %v2678
        %v2833 = vsub.f32 %v1420, %v2681
        %v2834 = vsub.f32 %v1514, %v2684
        %v2835 = vsub.f32 %v1519, %v2687
        %v2836 = vsub.f32 %v1524, %v2690
        %v2837 = vsub.f32 %v1529, %v2693
        %v2838 = vsub.f32 %v1623, %v2696
        %v2839 = vsub.f32 %v1628, %v2699
        %v2840 = vsub.f32 %v1633, %v2702
        %v2841 = vsub.f32 %v1638, %v2705
        %v2842 = vsub.f32 %v1732, %v2708
        %v2843 = vsub.f32 %v1737, %v2711
        %v2844 = vsub.f32 %v1742, %v2714
        %v2845 = vsub.f32 %v1747, %v2717
        %v2846 = vsub.f32 %v1841, %v2720
        %v2847 = vsub.f32 %v1846, %v2723
        %v2848 = vsub.f32 %v1851, %v2726
        %v2849 = vsub.f32 %v1856, %v2729
        %v2850 = vsub.f32 %v1950, %v2732
        %v2851 = vsub.f32 %v1955, %v2735
        %v2852 = vsub.f32 %v1960, %v2738
        %v2853 = vsub.f32 %v1965, %v2741
        %v2854 = vsub.f32 %v2059, %v2744
        %v2855 = vsub.f32 %v2064, %v2747
        %v2856 = vsub.f32 %v2069, %v2750
        %v2857 = vsub.f32 %v2074, %v2753
        %v2858 = vsub.f32 %v2168, %v2756
        %v2859 = vsub.f32 %v2173, %v2759
        %v2860 = vsub.f32 %v2178, %v2762
        %v2861 = vsub.f32 %v2183, %v2765
        %v2862 = vsub.f32 %v2277, %v2768
        %v2863 = vsub.f32 %v2282, %v2771
        %v2864 = vsub.f32 %v2287, %v2774
        %v2865 = vsub.f32 %v2292, %v2777
        %v2866 = vsub.f32 %v2386, %v2780
        %v2867 = vsub.f32 %v2391, %v2783
        %v2868 = vsub.f32 %v2396, %v2786
        %v2869 = vsub.f32 %v2401, %v2789
        %v2870 = vsub.f32 %v2495, %v2792
        %v2871 = vsub.f32 %v2500, %v2795
        %v2872 = vsub.f32 %v2505, %v2798
        %v2873 = vsub.f32 %v2510, %v2801
        %v2874 = vsub.f32 %v2604, %v2804
        %v2875 = vsub.f32 %v2609, %v2807
        %v2876 = vsub.f32 %v2614, %v2810
        %v2877 = vsub.f32 %v2619, %v2813
        %v2878 = vmul.f32 %v2814, 1.442695
        %v2879 = vpow.pop %v2878
        %v2880 = vmul.f32 %v2815, 1.442695
        %v2881 = vpow.pop %v2880
        %v2882 = vmul.f32 %v2816, 1.442695
        %v2883 = vpow.pop %v2882
        %v2884 = vmul.f32 %v2817, 1.442695
        %v2885 = vpow.pop %v2884
        %v2886 = vmul.f32 %v2818, 1.442695
        %v2887 = vpow.pop %v2886
        %v2888 = vmul.f32 %v2819, 1.442695
        %v2889 = vpow.pop %v2888
        %v2890 = vmul.f32 %v2820, 1.442695
        %v2891 = vpow.pop %v2890
        %v2892 = vmul.f32 %v2821, 1.442695
        %v2893 = vpow.pop %v2892
        %v2894 = vmul.f32 %v2822, 1.442695
        %v2895 = vpow.pop %v2894
        %v2896 = vmul.f32 %v2823, 1.442695
        %v2897 = vpow.pop %v2896
        %v2898 = vmul.f32 %v2824, 1.442695
        %v2899 = vpow.pop %v2898
        %v2900 = vmul.f32 %v2825, 1.442695
        %v2901 = vpow.pop %v2900
        %v2902 = vmul.f32 %v2826, 1.442695
        %v2903 = vpow.pop %v2902
        %v2904 = vmul.f32 %v2827, 1.442695
        %v2905 = vpow.pop %v2904
        %v2906 = vmul.f32 %v2828, 1.442695
        %v2907 = vpow.pop %v2906
        %v2908 = vmul.f32 %v2829, 1.442695
        %v2909 = vpow.pop %v2908
        %v2910 = vmul.f32 %v2830, 1.442695
        %v2911 = vpow.pop %v2910
        %v2912 = vmul.f32 %v2831, 1.442695
        %v2913 = vpow.pop %v2912
        %v2914 = vmul.f32 %v2832, 1.442695
        %v2915 = vpow.pop %v2914
        %v2916 = vmul.f32 %v2833, 1.442695
        %v2917 = vpow.pop %v2916
        %v2918 = vmul.f32 %v2834, 1.442695
        %v2919 = vpow.pop %v2918
        %v2920 = vmul.f32 %v2835, 1.442695
        %v2921 = vpow.pop %v2920
        %v2922 = vmul.f32 %v2836, 1.442695
        %v2923 = vpow.pop %v2922
        %v2924 = vmul.f32 %v2837, 1.442695
        %v2925 = vpow.pop %v2924
        %v2926 = vmul.f32 %v2838, 1.442695
        %v2927 = vpow.pop %v2926
        %v2928 = vmul.f32 %v2839, 1.442695
        %v2929 = vpow.pop %v2928
        %v2930 = vmul.f32 %v2840, 1.442695
        %v2931 = vpow.pop %v2930
        %v2932 = vmul.f32 %v2841, 1.442695
        %v2933 = vpow.pop %v2932
        %v2934 = vmul.f32 %v2842, 1.442695
        %v2935 = vpow.pop %v2934
        %v2936 = vmul.f32 %v2843, 1.442695
        %v2937 = vpow.pop %v2936
        %v2938 = vmul.f32 %v2844, 1.442695
        %v2939 = vpow.pop %v2938
        %v2940 = vmul.f32 %v2845, 1.442695
        %v2941 = vpow.pop %v2940
        %v2942 = vmul.f32 %v2846, 1.442695
        %v2943 = vpow.pop %v2942
        %v2944 = vmul.f32 %v2847, 1.442695
        %v2945 = vpow.pop %v2944
        %v2946 = vmul.f32 %v2848, 1.442695
        %v2947 = vpow.pop %v2946
        %v2948 = vmul.f32 %v2849, 1.442695
        %v2949 = vpow.pop %v2948
        %v2950 = vmul.f32 %v2850, 1.442695
        %v2951 = vpow.pop %v2950
        %v2952 = vmul.f32 %v2851, 1.442695
        %v2953 = vpow.pop %v2952
        %v2954 = vmul.f32 %v2852, 1.442695
        %v2955 = vpow.pop %v2954
        %v2956 = vmul.f32 %v2853, 1.442695
        %v2957 = vpow.pop %v2956
        %v2958 = vmul.f32 %v2854, 1.442695
        %v2959 = vpow.pop %v2958
        %v2960 = vmul.f32 %v2855, 1.442695
        %v2961 = vpow.pop %v2960
        %v2962 = vmul.f32 %v2856, 1.442695
        %v2963 = vpow.pop %v2962
        %v2964 = vmul.f32 %v2857, 1.442695
        %v2965 = vpow.pop %v2964
        %v2966 = vmul.f32 %v2858, 1.442695
        %v2967 = vpow.pop %v2966
        %v2968 = vmul.f32 %v2859, 1.442695
        %v2969 = vpow.pop %v2968
        %v2970 = vmul.f32 %v2860, 1.442695
        %v2971 = vpow.pop %v2970
        %v2972 = vmul.f32 %v2861, 1.442695
        %v2973 = vpow.pop %v2972
        %v2974 = vmul.f32 %v2862, 1.442695
        %v2975 = vpow.pop %v2974
        %v2976 = vmul.f32 %v2863, 1.442695
        %v2977 = vpow.pop %v2976
        %v2978 = vmul.f32 %v2864, 1.442695
        %v2979 = vpow.pop %v2978
        %v2980 = vmul.f32 %v2865, 1.442695
        %v2981 = vpow.pop %v2980
        %v2982 = vmul.f32 %v2866, 1.442695
        %v2983 = vpow.pop %v2982
        %v2984 = vmul.f32 %v2867, 1.442695
        %v2985 = vpow.pop %v2984
        %v2986 = vmul.f32 %v2868, 1.442695
        %v2987 = vpow.pop %v2986
        %v2988 = vmul.f32 %v2869, 1.442695
        %v2989 = vpow.pop %v2988
        %v2990 = vmul.f32 %v2870, 1.442695
        %v2991 = vpow.pop %v2990
        %v2992 = vmul.f32 %v2871, 1.442695
        %v2993 = vpow.pop %v2992
        %v2994 = vmul.f32 %v2872, 1.442695
        %v2995 = vpow.pop %v2994
        %v2996 = vmul.f32 %v2873, 1.442695
        %v2997 = vpow.pop %v2996
        %v2998 = vmul.f32 %v2874, 1.442695
        %v2999 = vpow.pop %v2998
        %v3000 = vmul.f32 %v2875, 1.442695
        %v3001 = vpow.pop %v3000
        %v3002 = vmul.f32 %v2876, 1.442695
        %v3003 = vpow.pop %v3002
        %v3004 = vmul.f32 %v2877, 1.442695
        %v3005 = vpow.pop %v3004
        %v3006 = vsel %vm443, %v2879, 0.0
        %3007 = vadd.xlane.f32.xlu0 %v3006
        %v3008 = vpop.xlane.xlu0 %3007
        %v3009 = vsel %vm443, %v2881, 0.0
        %3010 = vadd.xlane.f32.xlu0 %v3009
        %v3011 = vpop.xlane.xlu0 %3010
        %v3012 = vsel %vm443, %v2883, 0.0
        %3013 = vadd.xlane.f32.xlu0 %v3012
        %v3014 = vpop.xlane.xlu0 %3013
        %v3015 = vsel %vm443, %v2885, 0.0
        %3016 = vadd.xlane.f32.xlu0 %v3015
        %v3017 = vpop.xlane.xlu0 %3016
        %v3018 = vsel %vm443, %v2887, 0.0
        %3019 = vadd.xlane.f32.xlu0 %v3018
        %v3020 = vpop.xlane.xlu0 %3019
        %v3021 = vsel %vm443, %v2889, 0.0
        %3022 = vadd.xlane.f32.xlu0 %v3021
        %v3023 = vpop.xlane.xlu0 %3022
        %v3024 = vsel %vm443, %v2891, 0.0
        %3025 = vadd.xlane.f32.xlu0 %v3024
        %v3026 = vpop.xlane.xlu0 %3025
        %v3027 = vsel %vm443, %v2893, 0.0
        %3028 = vadd.xlane.f32.xlu0 %v3027
        %v3029 = vpop.xlane.xlu0 %3028
        %v3030 = vsel %vm443, %v2895, 0.0
        %3031 = vadd.xlane.f32.xlu0 %v3030
        %v3032 = vpop.xlane.xlu0 %3031
        %v3033 = vsel %vm443, %v2897, 0.0
        %3034 = vadd.xlane.f32.xlu0 %v3033
        %v3035 = vpop.xlane.xlu0 %3034
        %v3036 = vsel %vm443, %v2899, 0.0
        %3037 = vadd.xlane.f32.xlu0 %v3036
        %v3038 = vpop.xlane.xlu0 %3037
        %v3039 = vsel %vm443, %v2901, 0.0
        %3040 = vadd.xlane.f32.xlu0 %v3039
        %v3041 = vpop.xlane.xlu0 %3040
        %v3042 = vsel %vm443, %v2903, 0.0
        %3043 = vadd.xlane.f32.xlu0 %v3042
        %v3044 = vpop.xlane.xlu0 %3043
        %v3045 = vsel %vm443, %v2905, 0.0
        %3046 = vadd.xlane.f32.xlu0 %v3045
        %v3047 = vpop.xlane.xlu0 %3046
        %v3048 = vsel %vm443, %v2907, 0.0
        %3049 = vadd.xlane.f32.xlu0 %v3048
        %v3050 = vpop.xlane.xlu0 %3049
        %v3051 = vsel %vm443, %v2909, 0.0
        %3052 = vadd.xlane.f32.xlu0 %v3051
        %v3053 = vpop.xlane.xlu0 %3052
        %v3054 = vsel %vm443, %v2911, 0.0
        %3055 = vadd.xlane.f32.xlu0 %v3054
        %v3056 = vpop.xlane.xlu0 %3055
        %v3057 = vsel %vm443, %v2913, 0.0
        %3058 = vadd.xlane.f32.xlu0 %v3057
        %v3059 = vpop.xlane.xlu0 %3058
        %v3060 = vsel %vm443, %v2915, 0.0
        %3061 = vadd.xlane.f32.xlu0 %v3060
        %v3062 = vpop.xlane.xlu0 %3061
        %v3063 = vsel %vm443, %v2917, 0.0
        %3064 = vadd.xlane.f32.xlu0 %v3063
        %v3065 = vpop.xlane.xlu0 %3064
        %v3066 = vsel %vm443, %v2919, 0.0
        %3067 = vadd.xlane.f32.xlu0 %v3066
        %v3068 = vpop.xlane.xlu0 %3067
        %v3069 = vsel %vm443, %v2921, 0.0
        %3070 = vadd.xlane.f32.xlu0 %v3069
        %v3071 = vpop.xlane.xlu0 %3070
        %v3072 = vsel %vm443, %v2923, 0.0
        %3073 = vadd.xlane.f32.xlu0 %v3072
        %v3074 = vpop.xlane.xlu0 %3073
        %v3075 = vsel %vm443, %v2925, 0.0
        %3076 = vadd.xlane.f32.xlu0 %v3075
        %v3077 = vpop.xlane.xlu0 %3076
        %v3078 = vsel %vm443, %v2927, 0.0
        %3079 = vadd.xlane.f32.xlu0 %v3078
        %v3080 = vpop.xlane.xlu0 %3079
        %v3081 = vsel %vm443, %v2929, 0.0
        %3082 = vadd.xlane.f32.xlu0 %v3081
        %v3083 = vpop.xlane.xlu0 %3082
        %v3084 = vsel %vm443, %v2931, 0.0
        %3085 = vadd.xlane.f32.xlu0 %v3084
        %v3086 = vpop.xlane.xlu0 %3085
        %v3087 = vsel %vm443, %v2933, 0.0
        %3088 = vadd.xlane.f32.xlu0 %v3087
        %v3089 = vpop.xlane.xlu0 %3088
        %v3090 = vsel %vm443, %v2935, 0.0
        %3091 = vadd.xlane.f32.xlu0 %v3090
        %v3092 = vpop.xlane.xlu0 %3091
        %v3093 = vsel %vm443, %v2937, 0.0
        %3094 = vadd.xlane.f32.xlu0 %v3093
        %v3095 = vpop.xlane.xlu0 %3094
        %v3096 = vsel %vm443, %v2939, 0.0
        %3097 = vadd.xlane.f32.xlu0 %v3096
        %v3098 = vpop.xlane.xlu0 %3097
        %v3099 = vsel %vm443, %v2941, 0.0
        %3100 = vadd.xlane.f32.xlu0 %v3099
        %v3101 = vpop.xlane.xlu0 %3100
        %v3102 = vsel %vm443, %v2943, 0.0
        %3103 = vadd.xlane.f32.xlu0 %v3102
        %v3104 = vpop.xlane.xlu0 %3103
        %v3105 = vsel %vm443, %v2945, 0.0
        %3106 = vadd.xlane.f32.xlu0 %v3105
        %v3107 = vpop.xlane.xlu0 %3106
        %v3108 = vsel %vm443, %v2947, 0.0
        %3109 = vadd.xlane.f32.xlu0 %v3108
        %v3110 = vpop.xlane.xlu0 %3109
        %v3111 = vsel %vm443, %v2949, 0.0
        %3112 = vadd.xlane.f32.xlu0 %v3111
        %v3113 = vpop.xlane.xlu0 %3112
        %v3114 = vsel %vm443, %v2951, 0.0
        %3115 = vadd.xlane.f32.xlu0 %v3114
        %v3116 = vpop.xlane.xlu0 %3115
        %v3117 = vsel %vm443, %v2953, 0.0
        %3118 = vadd.xlane.f32.xlu0 %v3117
        %v3119 = vpop.xlane.xlu0 %3118
        %v3120 = vsel %vm443, %v2955, 0.0
        %3121 = vadd.xlane.f32.xlu0 %v3120
        %v3122 = vpop.xlane.xlu0 %3121
        %v3123 = vsel %vm443, %v2957, 0.0
        %3124 = vadd.xlane.f32.xlu0 %v3123
        %v3125 = vpop.xlane.xlu0 %3124
        %v3126 = vsel %vm443, %v2959, 0.0
        %3127 = vadd.xlane.f32.xlu0 %v3126
        %v3128 = vpop.xlane.xlu0 %3127
        %v3129 = vsel %vm443, %v2961, 0.0
        %3130 = vadd.xlane.f32.xlu0 %v3129
        %v3131 = vpop.xlane.xlu0 %3130
        %v3132 = vsel %vm443, %v2963, 0.0
        %3133 = vadd.xlane.f32.xlu0 %v3132
        %v3134 = vpop.xlane.xlu0 %3133
        %v3135 = vsel %vm443, %v2965, 0.0
        %3136 = vadd.xlane.f32.xlu0 %v3135
        %v3137 = vpop.xlane.xlu0 %3136
        %v3138 = vsel %vm443, %v2967, 0.0
        %3139 = vadd.xlane.f32.xlu0 %v3138
        %v3140 = vpop.xlane.xlu0 %3139
        %v3141 = vsel %vm443, %v2969, 0.0
        %3142 = vadd.xlane.f32.xlu0 %v3141
        %v3143 = vpop.xlane.xlu0 %3142
        %v3144 = vsel %vm443, %v2971, 0.0
        %3145 = vadd.xlane.f32.xlu0 %v3144
        %v3146 = vpop.xlane.xlu0 %3145
        %v3147 = vsel %vm443, %v2973, 0.0
        %3148 = vadd.xlane.f32.xlu0 %v3147
        %v3149 = vpop.xlane.xlu0 %3148
        %v3150 = vsel %vm443, %v2975, 0.0
        %3151 = vadd.xlane.f32.xlu0 %v3150
        %v3152 = vpop.xlane.xlu0 %3151
        %v3153 = vsel %vm443, %v2977, 0.0
        %3154 = vadd.xlane.f32.xlu0 %v3153
        %v3155 = vpop.xlane.xlu0 %3154
        %v3156 = vsel %vm443, %v2979, 0.0
        %3157 = vadd.xlane.f32.xlu0 %v3156
        %v3158 = vpop.xlane.xlu0 %3157
        %v3159 = vsel %vm443, %v2981, 0.0
        %3160 = vadd.xlane.f32.xlu0 %v3159
        %v3161 = vpop.xlane.xlu0 %3160
        %v3162 = vsel %vm443, %v2983, 0.0
        %3163 = vadd.xlane.f32.xlu0 %v3162
        %v3164 = vpop.xlane.xlu0 %3163
        %v3165 = vsel %vm443, %v2985, 0.0
        %3166 = vadd.xlane.f32.xlu0 %v3165
        %v3167 = vpop.xlane.xlu0 %3166
        %v3168 = vsel %vm443, %v2987, 0.0
        %3169 = vadd.xlane.f32.xlu0 %v3168
        %v3170 = vpop.xlane.xlu0 %3169
        %v3171 = vsel %vm443, %v2989, 0.0
        %3172 = vadd.xlane.f32.xlu0 %v3171
        %v3173 = vpop.xlane.xlu0 %3172
        %v3174 = vsel %vm443, %v2991, 0.0
        %3175 = vadd.xlane.f32.xlu0 %v3174
        %v3176 = vpop.xlane.xlu0 %3175
        %v3177 = vsel %vm443, %v2993, 0.0
        %3178 = vadd.xlane.f32.xlu0 %v3177
        %v3179 = vpop.xlane.xlu0 %3178
        %v3180 = vsel %vm443, %v2995, 0.0
        %3181 = vadd.xlane.f32.xlu0 %v3180
        %v3182 = vpop.xlane.xlu0 %3181
        %v3183 = vsel %vm443, %v2997, 0.0
        %3184 = vadd.xlane.f32.xlu0 %v3183
        %v3185 = vpop.xlane.xlu0 %3184
        %v3186 = vsel %vm443, %v2999, 0.0
        %3187 = vadd.xlane.f32.xlu0 %v3186
        %v3188 = vpop.xlane.xlu0 %3187
        %v3189 = vsel %vm443, %v3001, 0.0
        %3190 = vadd.xlane.f32.xlu0 %v3189
        %v3191 = vpop.xlane.xlu0 %3190
        %v3192 = vsel %vm443, %v3003, 0.0
        %3193 = vadd.xlane.f32.xlu0 %v3192
        %v3194 = vpop.xlane.xlu0 %3193
        %v3195 = vsel %vm443, %v3005, 0.0
        %3196 = vadd.xlane.f32.xlu0 %v3195
        %v3197 = vpop.xlane.xlu0 %3196
        %v3198 = vrcp.pop %v3008
        %v3199 = vmul.f32 %v2879, %v3198
        %v3200 = vrcp.pop %v3011
        %v3201 = vmul.f32 %v2881, %v3200
        %v3202 = vrcp.pop %v3014
        %v3203 = vmul.f32 %v2883, %v3202
        %v3204 = vrcp.pop %v3017
        %v3205 = vmul.f32 %v2885, %v3204
        %v3206 = vrcp.pop %v3020
        %v3207 = vmul.f32 %v2887, %v3206
        %v3208 = vrcp.pop %v3023
        %v3209 = vmul.f32 %v2889, %v3208
        %v3210 = vrcp.pop %v3026
        %v3211 = vmul.f32 %v2891, %v3210
        %v3212 = vrcp.pop %v3029
        %v3213 = vmul.f32 %v2893, %v3212
        %v3214 = vrcp.pop %v3032
        %v3215 = vmul.f32 %v2895, %v3214
        %v3216 = vrcp.pop %v3035
        %v3217 = vmul.f32 %v2897, %v3216
        %v3218 = vrcp.pop %v3038
        %v3219 = vmul.f32 %v2899, %v3218
        %v3220 = vrcp.pop %v3041
        %v3221 = vmul.f32 %v2901, %v3220
        %v3222 = vrcp.pop %v3044
        %v3223 = vmul.f32 %v2903, %v3222
        %v3224 = vrcp.pop %v3047
        %v3225 = vmul.f32 %v2905, %v3224
        %v3226 = vrcp.pop %v3050
        %v3227 = vmul.f32 %v2907, %v3226
        %v3228 = vrcp.pop %v3053
        %v3229 = vmul.f32 %v2909, %v3228
        %v3230 = vrcp.pop %v3056
        %v3231 = vmul.f32 %v2911, %v3230
        %v3232 = vrcp.pop %v3059
        %v3233 = vmul.f32 %v2913, %v3232
        %v3234 = vrcp.pop %v3062
        %v3235 = vmul.f32 %v2915, %v3234
        %v3236 = vrcp.pop %v3065
        %v3237 = vmul.f32 %v2917, %v3236
        %v3238 = vrcp.pop %v3068
        %v3239 = vmul.f32 %v2919, %v3238
        %v3240 = vrcp.pop %v3071
        %v3241 = vmul.f32 %v2921, %v3240
        %v3242 = vrcp.pop %v3074
        %v3243 = vmul.f32 %v2923, %v3242
        %v3244 = vrcp.pop %v3077
        %v3245 = vmul.f32 %v2925, %v3244
        %v3246 = vrcp.pop %v3080
        %v3247 = vmul.f32 %v2927, %v3246
        %v3248 = vrcp.pop %v3083
        %v3249 = vmul.f32 %v2929, %v3248
        %v3250 = vrcp.pop %v3086
        %v3251 = vmul.f32 %v2931, %v3250
        %v3252 = vrcp.pop %v3089
        %v3253 = vmul.f32 %v2933, %v3252
        %v3254 = vrcp.pop %v3092
        %v3255 = vmul.f32 %v2935, %v3254
        %v3256 = vrcp.pop %v3095
        %v3257 = vmul.f32 %v2937, %v3256
        %v3258 = vrcp.pop %v3098
        %v3259 = vmul.f32 %v2939, %v3258
        %v3260 = vrcp.pop %v3101
        %v3261 = vmul.f32 %v2941, %v3260
        %v3262 = vrcp.pop %v3104
        %v3263 = vmul.f32 %v2943, %v3262
        %v3264 = vrcp.pop %v3107
        %v3265 = vmul.f32 %v2945, %v3264
        %v3266 = vrcp.pop %v3110
        %v3267 = vmul.f32 %v2947, %v3266
        %v3268 = vrcp.pop %v3113
        %v3269 = vmul.f32 %v2949, %v3268
        %v3270 = vrcp.pop %v3116
        %v3271 = vmul.f32 %v2951, %v3270
        %v3272 = vrcp.pop %v3119
        %v3273 = vmul.f32 %v2953, %v3272
        %v3274 = vrcp.pop %v3122
        %v3275 = vmul.f32 %v2955, %v3274
        %v3276 = vrcp.pop %v3125
        %v3277 = vmul.f32 %v2957, %v3276
        %v3278 = vrcp.pop %v3128
        %v3279 = vmul.f32 %v2959, %v3278
        %v3280 = vrcp.pop %v3131
        %v3281 = vmul.f32 %v2961, %v3280
        %v3282 = vrcp.pop %v3134
        %v3283 = vmul.f32 %v2963, %v3282
        %v3284 = vrcp.pop %v3137
        %v3285 = vmul.f32 %v2965, %v3284
        %v3286 = vrcp.pop %v3140
        %v3287 = vmul.f32 %v2967, %v3286
        %v3288 = vrcp.pop %v3143
        %v3289 = vmul.f32 %v2969, %v3288
        %v3290 = vrcp.pop %v3146
        %v3291 = vmul.f32 %v2971, %v3290
        %v3292 = vrcp.pop %v3149
        %v3293 = vmul.f32 %v2973, %v3292
        %v3294 = vrcp.pop %v3152
        %v3295 = vmul.f32 %v2975, %v3294
        %v3296 = vrcp.pop %v3155
        %v3297 = vmul.f32 %v2977, %v3296
        %v3298 = vrcp.pop %v3158
        %v3299 = vmul.f32 %v2979, %v3298
        %v3300 = vrcp.pop %v3161
        %v3301 = vmul.f32 %v2981, %v3300
        %v3302 = vrcp.pop %v3164
        %v3303 = vmul.f32 %v2983, %v3302
        %v3304 = vrcp.pop %v3167
        %v3305 = vmul.f32 %v2985, %v3304
        %v3306 = vrcp.pop %v3170
        %v3307 = vmul.f32 %v2987, %v3306
        %v3308 = vrcp.pop %v3173
        %v3309 = vmul.f32 %v2989, %v3308
        %v3310 = vrcp.pop %v3176
        %v3311 = vmul.f32 %v2991, %v3310
        %v3312 = vrcp.pop %v3179
        %v3313 = vmul.f32 %v2993, %v3312
        %v3314 = vrcp.pop %v3182
        %v3315 = vmul.f32 %v2995, %v3314
        %v3316 = vrcp.pop %v3185
        %v3317 = vmul.f32 %v2997, %v3316
        %v3318 = vrcp.pop %v3188
        %v3319 = vmul.f32 %v2999, %v3318
        %v3320 = vrcp.pop %v3191
        %v3321 = vmul.f32 %v3001, %v3320
        %v3322 = vrcp.pop %v3194
        %v3323 = vmul.f32 %v3003, %v3322
        %v3324 = vrcp.pop %v3197
        %v3325 = vmul.f32 %v3005, %v3324
        %3326 = vrot.lane.b32.xlu0 %v559, 64
        %v3327 = vpop.permute.xlu0 %3326
        %3328 = vrot.lane.b32.xlu0 %v564, 64
        %v3329 = vpop.permute.xlu0 %3328
        %3330 = vrot.lane.b32.xlu0 %v569, 64
        %v3331 = vpop.permute.xlu0 %3330
        %3332 = vrot.lane.b32.xlu0 %v574, 64
        %v3333 = vpop.permute.xlu0 %3332
        %v3339 = vsel %vm443, %v3199, 0
        %v3342 = vsel %vm443, %v3201, 0
        %v3345 = vsel %vm443, %v3203, 0
        %v3348 = vsel %vm443, %v3205, 0
        %3350 = vmatprep.subr.mxu0 0.0
        %3351 = vmatpush1.msra.mxu0 0.0
        %3352 = vmatprep.subr.mxu0 0.0
        %3353 = vmatpush1.msra.mxu0 0.0
        %3354 = vmatprep.subr.mxu0 0.0
        %3355 = vmatpush1.msra.mxu0 0.0
        %3356 = vmatprep.subr.mxu0 0.0
        %3357 = vmatpush1.msra.mxu0 0.0
        %3358 = vmatprep.subr.mxu0 0.0
        %3359 = vmatpush1.msra.mxu0 0.0
        %3360 = vmatprep.subr.mxu0 0.0
        %3361 = vmatpush1.msra.mxu0 0.0
        %3362 = vmatprep.subr.mxu0 0.0
        %3363 = vmatpush1.msra.mxu0 0.0
        %3364 = vmatprep.subr.mxu0 0.0
        %3365 = vmatpush1.msra.mxu0 0.0
        %3366 = vmatprep.subr.mxu0 0.0
        %3367 = vmatpush1.msra.mxu0 0.0
        %3368 = vmatprep.subr.mxu0 0.0
        %3369 = vmatpush1.msra.mxu0 0.0
        %3370 = vmatprep.subr.mxu0 0.0
        %3371 = vmatpush1.msra.mxu0 0.0
        %3372 = vmatprep.subr.mxu0 0.0
        %3373 = vmatpush1.msra.mxu0 0.0
        %3374 = vmatprep.subr.mxu0 0.0
        %3375 = vmatpush1.msra.mxu0 %v3333
        %3376 = vmatprep.subr.mxu0 0.0
        %3377 = vmatpush1.msra.mxu0 %v3331
        %3378 = vmatprep.subr.mxu0 0.0
        %3379 = vmatpush1.msra.mxu0 %v3329
        %3380 = vmatprep.subr.mxu0 0.0
        %3381 = vmatpush1.msra.mxu0 %v3327
        %3382 = vmatprep.subr.mxu0 0.0
        %3383 = vmatpush2.msra.mxu0 0.0
        %3384 = vmatprep.subr.mxu0 0.0
        %3385 = vmatpush2.msra.mxu0 0.0
        %3386 = vmatprep.subr.mxu0 0.0
        %3387 = vmatpush2.msra.mxu0 0.0
        %3388 = vmatprep.subr.mxu0 0.0
        %3389 = vmatpush2.msra.mxu0 0.0
        %3390 = vmatprep.subr.mxu0 0.0
        %3391 = vmatpush2.msra.mxu0 0.0
        %3392 = vmatprep.subr.mxu0 0.0
        %3393 = vmatpush2.msra.mxu0 0.0
        %3394 = vmatprep.subr.mxu0 0.0
        %3395 = vmatpush2.msra.mxu0 0.0
        %3396 = vmatprep.subr.mxu0 0.0
        %3397 = vmatpush2.msra.mxu0 0.0
        %3398 = vmatprep.subr.mxu0 0.0
        %3399 = vmatpush2.msra.mxu0 0.0
        %3400 = vmatprep.subr.mxu0 0.0
        %3401 = vmatpush2.msra.mxu0 0.0
        %3402 = vmatprep.subr.mxu0 0.0
        %3403 = vmatpush2.msra.mxu0 0.0
        %3404 = vmatprep.subr.mxu0 0.0
        %3405 = vmatpush2.msra.mxu0 0.0
        %3406 = vmatprep.subr.mxu0 0.0
        %3407 = vmatpush2.msra.mxu0 0.0
        %3408 = vmatprep.subr.mxu0 0.0
        %3409 = vmatpush2.msra.mxu0 0.0
        %3410 = vmatprep.subr.mxu0 0.0
        %3411 = vmatpush2.msra.mxu0 0.0
        %3412 = vmatprep.subr.mxu0 0.0
        %3413 = vmatpush2.msra.mxu0 0.0
        %3414 = vmatprep.mubr.f32.mxu0 0.0
        %3415 = vmatmul.mubr.f32.gmra.mxu0 %v3339
        %v3416 = vpop.f32.mrf.mxu0
        %v3417 = vadd.f32 0.0, %v3416
        %v3418 = vpop.f32.mrf.mxu0
        %3419 = vmatprep.mubr.f32.mxu0 0.0
        %3420 = vmatmul.mubr.f32.gmra.mxu0 %v3342
        %v3421 = vpop.f32.mrf.mxu0
        %v3422 = vadd.f32 0.0, %v3421
        %v3423 = vpop.f32.mrf.mxu0
        %3424 = vmatprep.mubr.f32.mxu0 0.0
        %3425 = vmatmul.mubr.f32.gmra.mxu0 %v3345
        %v3426 = vpop.f32.mrf.mxu0
        %v3427 = vadd.f32 0.0, %v3426
        %v3428 = vpop.f32.mrf.mxu0
        %3429 = vmatprep.mubr.f32.mxu0 0.0
        %3430 = vmatmul.mubr.f32.gmra.mxu0 %v3348
        %v3431 = vpop.f32.mrf.mxu0
        %v3432 = vadd.f32 0.0, %v3431
        %v3433 = vpop.f32.mrf.mxu0
        %3434 = vdwg.mxu0
        %3435 = vrot.lane.b32.xlu0 %v579, 64
        %v3436 = vpop.permute.xlu0 %3435
        %3437 = vrot.lane.b32.xlu0 %v584, 64
        %v3438 = vpop.permute.xlu0 %3437
        %3439 = vrot.lane.b32.xlu0 %v589, 64
        %v3440 = vpop.permute.xlu0 %3439
        %3441 = vrot.lane.b32.xlu0 %v594, 64
        %v3442 = vpop.permute.xlu0 %3441
        %v3448 = vsel %vm443, %v3207, 0
        %v3451 = vsel %vm443, %v3209, 0
        %v3454 = vsel %vm443, %v3211, 0
        %v3457 = vsel %vm443, %v3213, 0
        %3459 = vmatprep.subr.mxu0 0.0
        %3460 = vmatpush1.msra.mxu0 0.0
        %3461 = vmatprep.subr.mxu0 0.0
        %3462 = vmatpush1.msra.mxu0 0.0
        %3463 = vmatprep.subr.mxu0 0.0
        %3464 = vmatpush1.msra.mxu0 0.0
        %3465 = vmatprep.subr.mxu0 0.0
        %3466 = vmatpush1.msra.mxu0 0.0
        %3467 = vmatprep.subr.mxu0 0.0
        %3468 = vmatpush1.msra.mxu0 0.0
        %3469 = vmatprep.subr.mxu0 0.0
        %3470 = vmatpush1.msra.mxu0 0.0
        %3471 = vmatprep.subr.mxu0 0.0
        %3472 = vmatpush1.msra.mxu0 0.0
        %3473 = vmatprep.subr.mxu0 0.0
        %3474 = vmatpush1.msra.mxu0 0.0
        %3475 = vmatprep.subr.mxu0 0.0
        %3476 = vmatpush1.msra.mxu0 0.0
        %3477 = vmatprep.subr.mxu0 0.0
        %3478 = vmatpush1.msra.mxu0 0.0
        %3479 = vmatprep.subr.mxu0 0.0
        %3480 = vmatpush1.msra.mxu0 0.0
        %3481 = vmatprep.subr.mxu0 0.0
        %3482 = vmatpush1.msra.mxu0 0.0
        %3483 = vmatprep.subr.mxu0 0.0
        %3484 = vmatpush1.msra.mxu0 %v3442
        %3485 = vmatprep.subr.mxu0 0.0
        %3486 = vmatpush1.msra.mxu0 %v3440
        %3487 = vmatprep.subr.mxu0 0.0
        %3488 = vmatpush1.msra.mxu0 %v3438
        %3489 = vmatprep.subr.mxu0 0.0
        %3490 = vmatpush1.msra.mxu0 %v3436
        %3491 = vmatprep.subr.mxu0 0.0
        %3492 = vmatpush2.msra.mxu0 0.0
        %3493 = vmatprep.subr.mxu0 0.0
        %3494 = vmatpush2.msra.mxu0 0.0
        %3495 = vmatprep.subr.mxu0 0.0
        %3496 = vmatpush2.msra.mxu0 0.0
        %3497 = vmatprep.subr.mxu0 0.0
        %3498 = vmatpush2.msra.mxu0 0.0
        %3499 = vmatprep.subr.mxu0 0.0
        %3500 = vmatpush2.msra.mxu0 0.0
        %3501 = vmatprep.subr.mxu0 0.0
        %3502 = vmatpush2.msra.mxu0 0.0
        %3503 = vmatprep.subr.mxu0 0.0
        %3504 = vmatpush2.msra.mxu0 0.0
        %3505 = vmatprep.subr.mxu0 0.0
        %3506 = vmatpush2.msra.mxu0 0.0
        %3507 = vmatprep.subr.mxu0 0.0
        %3508 = vmatpush2.msra.mxu0 0.0
        %3509 = vmatprep.subr.mxu0 0.0
        %3510 = vmatpush2.msra.mxu0 0.0
        %3511 = vmatprep.subr.mxu0 0.0
        %3512 = vmatpush2.msra.mxu0 0.0
        %3513 = vmatprep.subr.mxu0 0.0
        %3514 = vmatpush2.msra.mxu0 0.0
        %3515 = vmatprep.subr.mxu0 0.0
        %3516 = vmatpush2.msra.mxu0 0.0
        %3517 = vmatprep.subr.mxu0 0.0
        %3518 = vmatpush2.msra.mxu0 0.0
        %3519 = vmatprep.subr.mxu0 0.0
        %3520 = vmatpush2.msra.mxu0 0.0
        %3521 = vmatprep.subr.mxu0 0.0
        %3522 = vmatpush2.msra.mxu0 0.0
        %3523 = vmatprep.mubr.f32.mxu0 0.0
        %3524 = vmatmul.mubr.f32.gmra.mxu0 %v3448
        %v3525 = vpop.f32.mrf.mxu0
        %v3526 = vadd.f32 0.0, %v3525
        %v3527 = vpop.f32.mrf.mxu0
        %3528 = vmatprep.mubr.f32.mxu0 0.0
        %3529 = vmatmul.mubr.f32.gmra.mxu0 %v3451
        %v3530 = vpop.f32.mrf.mxu0
        %v3531 = vadd.f32 0.0, %v3530
        %v3532 = vpop.f32.mrf.mxu0
        %3533 = vmatprep.mubr.f32.mxu0 0.0
        %3534 = vmatmul.mubr.f32.gmra.mxu0 %v3454
        %v3535 = vpop.f32.mrf.mxu0
        %v3536 = vadd.f32 0.0, %v3535
        %v3537 = vpop.f32.mrf.mxu0
        %3538 = vmatprep.mubr.f32.mxu0 0.0
        %3539 = vmatmul.mubr.f32.gmra.mxu0 %v3457
        %v3540 = vpop.f32.mrf.mxu0
        %v3541 = vadd.f32 0.0, %v3540
        %v3542 = vpop.f32.mrf.mxu0
        %3543 = vdwg.mxu0
        %3544 = vrot.lane.b32.xlu0 %v599, 64
        %v3545 = vpop.permute.xlu0 %3544
        %3546 = vrot.lane.b32.xlu0 %v604, 64
        %v3547 = vpop.permute.xlu0 %3546
        %3548 = vrot.lane.b32.xlu0 %v609, 64
        %v3549 = vpop.permute.xlu0 %3548
        %3550 = vrot.lane.b32.xlu0 %v614, 64
        %v3551 = vpop.permute.xlu0 %3550
        %v3557 = vsel %vm443, %v3215, 0
        %v3560 = vsel %vm443, %v3217, 0
        %v3563 = vsel %vm443, %v3219, 0
        %v3566 = vsel %vm443, %v3221, 0
        %3568 = vmatprep.subr.mxu0 0.0
        %3569 = vmatpush1.msra.mxu0 0.0
        %3570 = vmatprep.subr.mxu0 0.0
        %3571 = vmatpush1.msra.mxu0 0.0
        %3572 = vmatprep.subr.mxu0 0.0
        %3573 = vmatpush1.msra.mxu0 0.0
        %3574 = vmatprep.subr.mxu0 0.0
        %3575 = vmatpush1.msra.mxu0 0.0
        %3576 = vmatprep.subr.mxu0 0.0
        %3577 = vmatpush1.msra.mxu0 0.0
        %3578 = vmatprep.subr.mxu0 0.0
        %3579 = vmatpush1.msra.mxu0 0.0
        %3580 = vmatprep.subr.mxu0 0.0
        %3581 = vmatpush1.msra.mxu0 0.0
        %3582 = vmatprep.subr.mxu0 0.0
        %3583 = vmatpush1.msra.mxu0 0.0
        %3584 = vmatprep.subr.mxu0 0.0
        %3585 = vmatpush1.msra.mxu0 0.0
        %3586 = vmatprep.subr.mxu0 0.0
        %3587 = vmatpush1.msra.mxu0 0.0
        %3588 = vmatprep.subr.mxu0 0.0
        %3589 = vmatpush1.msra.mxu0 0.0
        %3590 = vmatprep.subr.mxu0 0.0
        %3591 = vmatpush1.msra.mxu0 0.0
        %3592 = vmatprep.subr.mxu0 0.0
        %3593 = vmatpush1.msra.mxu0 %v3551
        %3594 = vmatprep.subr.mxu0 0.0
        %3595 = vmatpush1.msra.mxu0 %v3549
        %3596 = vmatprep.subr.mxu0 0.0
        %3597 = vmatpush1.msra.mxu0 %v3547
        %3598 = vmatprep.subr.mxu0 0.0
        %3599 = vmatpush1.msra.mxu0 %v3545
        %3600 = vmatprep.subr.mxu0 0.0
        %3601 = vmatpush2.msra.mxu0 0.0
        %3602 = vmatprep.subr.mxu0 0.0
        %3603 = vmatpush2.msra.mxu0 0.0
        %3604 = vmatprep.subr.mxu0 0.0
        %3605 = vmatpush2.msra.mxu0 0.0
        %3606 = vmatprep.subr.mxu0 0.0
        %3607 = vmatpush2.msra.mxu0 0.0
        %3608 = vmatprep.subr.mxu0 0.0
        %3609 = vmatpush2.msra.mxu0 0.0
        %3610 = vmatprep.subr.mxu0 0.0
        %3611 = vmatpush2.msra.mxu0 0.0
        %3612 = vmatprep.subr.mxu0 0.0
        %3613 = vmatpush2.msra.mxu0 0.0
        %3614 = vmatprep.subr.mxu0 0.0
        %3615 = vmatpush2.msra.mxu0 0.0
        %3616 = vmatprep.subr.mxu0 0.0
        %3617 = vmatpush2.msra.mxu0 0.0
        %3618 = vmatprep.subr.mxu0 0.0
        %3619 = vmatpush2.msra.mxu0 0.0
        %3620 = vmatprep.subr.mxu0 0.0
        %3621 = vmatpush2.msra.mxu0 0.0
        %3622 = vmatprep.subr.mxu0 0.0
        %3623 = vmatpush2.msra.mxu0 0.0
        %3624 = vmatprep.subr.mxu0 0.0
        %3625 = vmatpush2.msra.mxu0 0.0
        %3626 = vmatprep.subr.mxu0 0.0
        %3627 = vmatpush2.msra.mxu0 0.0
        %3628 = vmatprep.subr.mxu0 0.0
        %3629 = vmatpush2.msra.mxu0 0.0
        %3630 = vmatprep.subr.mxu0 0.0
        %3631 = vmatpush2.msra.mxu0 0.0
        %3632 = vmatprep.mubr.f32.mxu0 0.0
        %3633 = vmatmul.mubr.f32.gmra.mxu0 %v3557
        %v3634 = vpop.f32.mrf.mxu0
        %v3635 = vadd.f32 0.0, %v3634
        %v3636 = vpop.f32.mrf.mxu0
        %3637 = vmatprep.mubr.f32.mxu0 0.0
        %3638 = vmatmul.mubr.f32.gmra.mxu0 %v3560
        %v3639 = vpop.f32.mrf.mxu0
        %v3640 = vadd.f32 0.0, %v3639
        %v3641 = vpop.f32.mrf.mxu0
        %3642 = vmatprep.mubr.f32.mxu0 0.0
        %3643 = vmatmul.mubr.f32.gmra.mxu0 %v3563
        %v3644 = vpop.f32.mrf.mxu0
        %v3645 = vadd.f32 0.0, %v3644
        %v3646 = vpop.f32.mrf.mxu0
        %3647 = vmatprep.mubr.f32.mxu0 0.0
        %3648 = vmatmul.mubr.f32.gmra.mxu0 %v3566
        %v3649 = vpop.f32.mrf.mxu0
        %v3650 = vadd.f32 0.0, %v3649
        %v3651 = vpop.f32.mrf.mxu0
        %3652 = vdwg.mxu0
        %3653 = vrot.lane.b32.xlu0 %v619, 64
        %v3654 = vpop.permute.xlu0 %3653
        %3655 = vrot.lane.b32.xlu0 %v624, 64
        %v3656 = vpop.permute.xlu0 %3655
        %3657 = vrot.lane.b32.xlu0 %v629, 64
        %v3658 = vpop.permute.xlu0 %3657
        %3659 = vrot.lane.b32.xlu0 %v634, 64
        %v3660 = vpop.permute.xlu0 %3659
        %v3666 = vsel %vm443, %v3223, 0
        %v3669 = vsel %vm443, %v3225, 0
        %v3672 = vsel %vm443, %v3227, 0
        %v3675 = vsel %vm443, %v3229, 0
        %3677 = vmatprep.subr.mxu0 0.0
        %3678 = vmatpush1.msra.mxu0 0.0
        %3679 = vmatprep.subr.mxu0 0.0
        %3680 = vmatpush1.msra.mxu0 0.0
        %3681 = vmatprep.subr.mxu0 0.0
        %3682 = vmatpush1.msra.mxu0 0.0
        %3683 = vmatprep.subr.mxu0 0.0
        %3684 = vmatpush1.msra.mxu0 0.0
        %3685 = vmatprep.subr.mxu0 0.0
        %3686 = vmatpush1.msra.mxu0 0.0
        %3687 = vmatprep.subr.mxu0 0.0
        %3688 = vmatpush1.msra.mxu0 0.0
        %3689 = vmatprep.subr.mxu0 0.0
        %3690 = vmatpush1.msra.mxu0 0.0
        %3691 = vmatprep.subr.mxu0 0.0
        %3692 = vmatpush1.msra.mxu0 0.0
        %3693 = vmatprep.subr.mxu0 0.0
        %3694 = vmatpush1.msra.mxu0 0.0
        %3695 = vmatprep.subr.mxu0 0.0
        %3696 = vmatpush1.msra.mxu0 0.0
        %3697 = vmatprep.subr.mxu0 0.0
        %3698 = vmatpush1.msra.mxu0 0.0
        %3699 = vmatprep.subr.mxu0 0.0
        %3700 = vmatpush1.msra.mxu0 0.0
        %3701 = vmatprep.subr.mxu0 0.0
        %3702 = vmatpush1.msra.mxu0 %v3660
        %3703 = vmatprep.subr.mxu0 0.0
        %3704 = vmatpush1.msra.mxu0 %v3658
        %3705 = vmatprep.subr.mxu0 0.0
        %3706 = vmatpush1.msra.mxu0 %v3656
        %3707 = vmatprep.subr.mxu0 0.0
        %3708 = vmatpush1.msra.mxu0 %v3654
        %3709 = vmatprep.subr.mxu0 0.0
        %3710 = vmatpush2.msra.mxu0 0.0
        %3711 = vmatprep.subr.mxu0 0.0
        %3712 = vmatpush2.msra.mxu0 0.0
        %3713 = vmatprep.subr.mxu0 0.0
        %3714 = vmatpush2.msra.mxu0 0.0
        %3715 = vmatprep.subr.mxu0 0.0
        %3716 = vmatpush2.msra.mxu0 0.0
        %3717 = vmatprep.subr.mxu0 0.0
        %3718 = vmatpush2.msra.mxu0 0.0
        %3719 = vmatprep.subr.mxu0 0.0
        %3720 = vmatpush2.msra.mxu0 0.0
        %3721 = vmatprep.subr.mxu0 0.0
        %3722 = vmatpush2.msra.mxu0 0.0
        %3723 = vmatprep.subr.mxu0 0.0
        %3724 = vmatpush2.msra.mxu0 0.0
        %3725 = vmatprep.subr.mxu0 0.0
        %3726 = vmatpush2.msra.mxu0 0.0
        %3727 = vmatprep.subr.mxu0 0.0
        %3728 = vmatpush2.msra.mxu0 0.0
        %3729 = vmatprep.subr.mxu0 0.0
        %3730 = vmatpush2.msra.mxu0 0.0
        %3731 = vmatprep.subr.mxu0 0.0
        %3732 = vmatpush2.msra.mxu0 0.0
        %3733 = vmatprep.subr.mxu0 0.0
        %3734 = vmatpush2.msra.mxu0 0.0
        %3735 = vmatprep.subr.mxu0 0.0
        %3736 = vmatpush2.msra.mxu0 0.0
        %3737 = vmatprep.subr.mxu0 0.0
        %3738 = vmatpush2.msra.mxu0 0.0
        %3739 = vmatprep.subr.mxu0 0.0
        %3740 = vmatpush2.msra.mxu0 0.0
        %3741 = vmatprep.mubr.f32.mxu0 0.0
        %3742 = vmatmul.mubr.f32.gmra.mxu0 %v3666
        %v3743 = vpop.f32.mrf.mxu0
        %v3744 = vadd.f32 0.0, %v3743
        %v3745 = vpop.f32.mrf.mxu0
        %3746 = vmatprep.mubr.f32.mxu0 0.0
        %3747 = vmatmul.mubr.f32.gmra.mxu0 %v3669
        %v3748 = vpop.f32.mrf.mxu0
        %v3749 = vadd.f32 0.0, %v3748
        %v3750 = vpop.f32.mrf.mxu0
        %3751 = vmatprep.mubr.f32.mxu0 0.0
        %3752 = vmatmul.mubr.f32.gmra.mxu0 %v3672
        %v3753 = vpop.f32.mrf.mxu0
        %v3754 = vadd.f32 0.0, %v3753
        %v3755 = vpop.f32.mrf.mxu0
        %3756 = vmatprep.mubr.f32.mxu0 0.0
        %3757 = vmatmul.mubr.f32.gmra.mxu0 %v3675
        %v3758 = vpop.f32.mrf.mxu0
        %v3759 = vadd.f32 0.0, %v3758
        %v3760 = vpop.f32.mrf.mxu0
        %3761 = vdwg.mxu0
        %3762 = vrot.lane.b32.xlu0 %v782, 64
        %v3763 = vpop.permute.xlu0 %3762
        %3764 = vrot.lane.b32.xlu0 %v784, 64
        %v3765 = vpop.permute.xlu0 %3764
        %3766 = vrot.lane.b32.xlu0 %v786, 64
        %v3767 = vpop.permute.xlu0 %3766
        %3768 = vrot.lane.b32.xlu0 %v788, 64
        %v3769 = vpop.permute.xlu0 %3768
        %v3775 = vsel %vm443, %v3231, 0
        %v3778 = vsel %vm443, %v3233, 0
        %v3781 = vsel %vm443, %v3235, 0
        %v3784 = vsel %vm443, %v3237, 0
        %3786 = vmatprep.subr.mxu0 0.0
        %3787 = vmatpush1.msra.mxu0 0.0
        %3788 = vmatprep.subr.mxu0 0.0
        %3789 = vmatpush1.msra.mxu0 0.0
        %3790 = vmatprep.subr.mxu0 0.0
        %3791 = vmatpush1.msra.mxu0 0.0
        %3792 = vmatprep.subr.mxu0 0.0
        %3793 = vmatpush1.msra.mxu0 0.0
        %3794 = vmatprep.subr.mxu0 0.0
        %3795 = vmatpush1.msra.mxu0 0.0
        %3796 = vmatprep.subr.mxu0 0.0
        %3797 = vmatpush1.msra.mxu0 0.0
        %3798 = vmatprep.subr.mxu0 0.0
        %3799 = vmatpush1.msra.mxu0 0.0
        %3800 = vmatprep.subr.mxu0 0.0
        %3801 = vmatpush1.msra.mxu0 0.0
        %3802 = vmatprep.subr.mxu0 0.0
        %3803 = vmatpush1.msra.mxu0 0.0
        %3804 = vmatprep.subr.mxu0 0.0
        %3805 = vmatpush1.msra.mxu0 0.0
        %3806 = vmatprep.subr.mxu0 0.0
        %3807 = vmatpush1.msra.mxu0 0.0
        %3808 = vmatprep.subr.mxu0 0.0
        %3809 = vmatpush1.msra.mxu0 0.0
        %3810 = vmatprep.subr.mxu0 0.0
        %3811 = vmatpush1.msra.mxu0 %v3769
        %3812 = vmatprep.subr.mxu0 0.0
        %3813 = vmatpush1.msra.mxu0 %v3767
        %3814 = vmatprep.subr.mxu0 0.0
        %3815 = vmatpush1.msra.mxu0 %v3765
        %3816 = vmatprep.subr.mxu0 0.0
        %3817 = vmatpush1.msra.mxu0 %v3763
        %3818 = vmatprep.subr.mxu0 0.0
        %3819 = vmatpush2.msra.mxu0 0.0
        %3820 = vmatprep.subr.mxu0 0.0
        %3821 = vmatpush2.msra.mxu0 0.0
        %3822 = vmatprep.subr.mxu0 0.0
        %3823 = vmatpush2.msra.mxu0 0.0
        %3824 = vmatprep.subr.mxu0 0.0
        %3825 = vmatpush2.msra.mxu0 0.0
        %3826 = vmatprep.subr.mxu0 0.0
        %3827 = vmatpush2.msra.mxu0 0.0
        %3828 = vmatprep.subr.mxu0 0.0
        %3829 = vmatpush2.msra.mxu0 0.0
        %3830 = vmatprep.subr.mxu0 0.0
        %3831 = vmatpush2.msra.mxu0 0.0
        %3832 = vmatprep.subr.mxu0 0.0
        %3833 = vmatpush2.msra.mxu0 0.0
        %3834 = vmatprep.subr.mxu0 0.0
        %3835 = vmatpush2.msra.mxu0 0.0
        %3836 = vmatprep.subr.mxu0 0.0
        %3837 = vmatpush2.msra.mxu0 0.0
        %3838 = vmatprep.subr.mxu0 0.0
        %3839 = vmatpush2.msra.mxu0 0.0
        %3840 = vmatprep.subr.mxu0 0.0
        %3841 = vmatpush2.msra.mxu0 0.0
        %3842 = vmatprep.subr.mxu0 0.0
        %3843 = vmatpush2.msra.mxu0 0.0
        %3844 = vmatprep.subr.mxu0 0.0
        %3845 = vmatpush2.msra.mxu0 0.0
        %3846 = vmatprep.subr.mxu0 0.0
        %3847 = vmatpush2.msra.mxu0 0.0
        %3848 = vmatprep.subr.mxu0 0.0
        %3849 = vmatpush2.msra.mxu0 0.0
        %3850 = vmatprep.mubr.f32.mxu0 0.0
        %3851 = vmatmul.mubr.f32.gmra.mxu0 %v3775
        %v3852 = vpop.f32.mrf.mxu0
        %v3853 = vadd.f32 0.0, %v3852
        %v3854 = vpop.f32.mrf.mxu0
        %3855 = vmatprep.mubr.f32.mxu0 0.0
        %3856 = vmatmul.mubr.f32.gmra.mxu0 %v3778
        %v3857 = vpop.f32.mrf.mxu0
        %v3858 = vadd.f32 0.0, %v3857
        %v3859 = vpop.f32.mrf.mxu0
        %3860 = vmatprep.mubr.f32.mxu0 0.0
        %3861 = vmatmul.mubr.f32.gmra.mxu0 %v3781
        %v3862 = vpop.f32.mrf.mxu0
        %v3863 = vadd.f32 0.0, %v3862
        %v3864 = vpop.f32.mrf.mxu0
        %3865 = vmatprep.mubr.f32.mxu0 0.0
        %3866 = vmatmul.mubr.f32.gmra.mxu0 %v3784
        %v3867 = vpop.f32.mrf.mxu0
        %v3868 = vadd.f32 0.0, %v3867
        %v3869 = vpop.f32.mrf.mxu0
        %3870 = vdwg.mxu0
        %3871 = vrot.lane.b32.xlu0 %v790, 64
        %v3872 = vpop.permute.xlu0 %3871
        %3873 = vrot.lane.b32.xlu0 %v792, 64
        %v3874 = vpop.permute.xlu0 %3873
        %3875 = vrot.lane.b32.xlu0 %v794, 64
        %v3876 = vpop.permute.xlu0 %3875
        %3877 = vrot.lane.b32.xlu0 %v796, 64
        %v3878 = vpop.permute.xlu0 %3877
        %v3884 = vsel %vm443, %v3239, 0
        %v3887 = vsel %vm443, %v3241, 0
        %v3890 = vsel %vm443, %v3243, 0
        %v3893 = vsel %vm443, %v3245, 0
        %3895 = vmatprep.subr.mxu0 0.0
        %3896 = vmatpush1.msra.mxu0 0.0
        %3897 = vmatprep.subr.mxu0 0.0
        %3898 = vmatpush1.msra.mxu0 0.0
        %3899 = vmatprep.subr.mxu0 0.0
        %3900 = vmatpush1.msra.mxu0 0.0
        %3901 = vmatprep.subr.mxu0 0.0
        %3902 = vmatpush1.msra.mxu0 0.0
        %3903 = vmatprep.subr.mxu0 0.0
        %3904 = vmatpush1.msra.mxu0 0.0
        %3905 = vmatprep.subr.mxu0 0.0
        %3906 = vmatpush1.msra.mxu0 0.0
        %3907 = vmatprep.subr.mxu0 0.0
        %3908 = vmatpush1.msra.mxu0 0.0
        %3909 = vmatprep.subr.mxu0 0.0
        %3910 = vmatpush1.msra.mxu0 0.0
        %3911 = vmatprep.subr.mxu0 0.0
        %3912 = vmatpush1.msra.mxu0 0.0
        %3913 = vmatprep.subr.mxu0 0.0
        %3914 = vmatpush1.msra.mxu0 0.0
        %3915 = vmatprep.subr.mxu0 0.0
        %3916 = vmatpush1.msra.mxu0 0.0
        %3917 = vmatprep.subr.mxu0 0.0
        %3918 = vmatpush1.msra.mxu0 0.0
        %3919 = vmatprep.subr.mxu0 0.0
        %3920 = vmatpush1.msra.mxu0 %v3878
        %3921 = vmatprep.subr.mxu0 0.0
        %3922 = vmatpush1.msra.mxu0 %v3876
        %3923 = vmatprep.subr.mxu0 0.0
        %3924 = vmatpush1.msra.mxu0 %v3874
        %3925 = vmatprep.subr.mxu0 0.0
        %3926 = vmatpush1.msra.mxu0 %v3872
        %3927 = vmatprep.subr.mxu0 0.0
        %3928 = vmatpush2.msra.mxu0 0.0
        %3929 = vmatprep.subr.mxu0 0.0
        %3930 = vmatpush2.msra.mxu0 0.0
        %3931 = vmatprep.subr.mxu0 0.0
        %3932 = vmatpush2.msra.mxu0 0.0
        %3933 = vmatprep.subr.mxu0 0.0
        %3934 = vmatpush2.msra.mxu0 0.0
        %3935 = vmatprep.subr.mxu0 0.0
        %3936 = vmatpush2.msra.mxu0 0.0
        %3937 = vmatprep.subr.mxu0 0.0
        %3938 = vmatpush2.msra.mxu0 0.0
        %3939 = vmatprep.subr.mxu0 0.0
        %3940 = vmatpush2.msra.mxu0 0.0
        %3941 = vmatprep.subr.mxu0 0.0
        %3942 = vmatpush2.msra.mxu0 0.0
        %3943 = vmatprep.subr.mxu0 0.0
        %3944 = vmatpush2.msra.mxu0 0.0
        %3945 = vmatprep.subr.mxu0 0.0
        %3946 = vmatpush2.msra.mxu0 0.0
        %3947 = vmatprep.subr.mxu0 0.0
        %3948 = vmatpush2.msra.mxu0 0.0
        %3949 = vmatprep.subr.mxu0 0.0
        %3950 = vmatpush2.msra.mxu0 0.0
        %3951 = vmatprep.subr.mxu0 0.0
        %3952 = vmatpush2.msra.mxu0 0.0
        %3953 = vmatprep.subr.mxu0 0.0
        %3954 = vmatpush2.msra.mxu0 0.0
        %3955 = vmatprep.subr.mxu0 0.0
        %3956 = vmatpush2.msra.mxu0 0.0
        %3957 = vmatprep.subr.mxu0 0.0
        %3958 = vmatpush2.msra.mxu0 0.0
        %3959 = vmatprep.mubr.f32.mxu0 0.0
        %3960 = vmatmul.mubr.f32.gmra.mxu0 %v3884
        %v3961 = vpop.f32.mrf.mxu0
        %v3962 = vadd.f32 0.0, %v3961
        %v3963 = vpop.f32.mrf.mxu0
        %3964 = vmatprep.mubr.f32.mxu0 0.0
        %3965 = vmatmul.mubr.f32.gmra.mxu0 %v3887
        %v3966 = vpop.f32.mrf.mxu0
        %v3967 = vadd.f32 0.0, %v3966
        %v3968 = vpop.f32.mrf.mxu0
        %3969 = vmatprep.mubr.f32.mxu0 0.0
        %3970 = vmatmul.mubr.f32.gmra.mxu0 %v3890
        %v3971 = vpop.f32.mrf.mxu0
        %v3972 = vadd.f32 0.0, %v3971
        %v3973 = vpop.f32.mrf.mxu0
        %3974 = vmatprep.mubr.f32.mxu0 0.0
        %3975 = vmatmul.mubr.f32.gmra.mxu0 %v3893
        %v3976 = vpop.f32.mrf.mxu0
        %v3977 = vadd.f32 0.0, %v3976
        %v3978 = vpop.f32.mrf.mxu0
        %3979 = vdwg.mxu0
        %3980 = vrot.lane.b32.xlu0 %v798, 64
        %v3981 = vpop.permute.xlu0 %3980
        %3982 = vrot.lane.b32.xlu0 %v800, 64
        %v3983 = vpop.permute.xlu0 %3982
        %3984 = vrot.lane.b32.xlu0 %v802, 64
        %v3985 = vpop.permute.xlu0 %3984
        %3986 = vrot.lane.b32.xlu0 %v804, 64
        %v3987 = vpop.permute.xlu0 %3986
        %v3993 = vsel %vm443, %v3247, 0
        %v3996 = vsel %vm443, %v3249, 0
        %v3999 = vsel %vm443, %v3251, 0
        %v4002 = vsel %vm443, %v3253, 0
        %4004 = vmatprep.subr.mxu0 0.0
        %4005 = vmatpush1.msra.mxu0 0.0
        %4006 = vmatprep.subr.mxu0 0.0
        %4007 = vmatpush1.msra.mxu0 0.0
        %4008 = vmatprep.subr.mxu0 0.0
        %4009 = vmatpush1.msra.mxu0 0.0
        %4010 = vmatprep.subr.mxu0 0.0
        %4011 = vmatpush1.msra.mxu0 0.0
        %4012 = vmatprep.subr.mxu0 0.0
        %4013 = vmatpush1.msra.mxu0 0.0
        %4014 = vmatprep.subr.mxu0 0.0
        %4015 = vmatpush1.msra.mxu0 0.0
        %4016 = vmatprep.subr.mxu0 0.0
        %4017 = vmatpush1.msra.mxu0 0.0
        %4018 = vmatprep.subr.mxu0 0.0
        %4019 = vmatpush1.msra.mxu0 0.0
        %4020 = vmatprep.subr.mxu0 0.0
        %4021 = vmatpush1.msra.mxu0 0.0
        %4022 = vmatprep.subr.mxu0 0.0
        %4023 = vmatpush1.msra.mxu0 0.0
        %4024 = vmatprep.subr.mxu0 0.0
        %4025 = vmatpush1.msra.mxu0 0.0
        %4026 = vmatprep.subr.mxu0 0.0
        %4027 = vmatpush1.msra.mxu0 0.0
        %4028 = vmatprep.subr.mxu0 0.0
        %4029 = vmatpush1.msra.mxu0 %v3987
        %4030 = vmatprep.subr.mxu0 0.0
        %4031 = vmatpush1.msra.mxu0 %v3985
        %4032 = vmatprep.subr.mxu0 0.0
        %4033 = vmatpush1.msra.mxu0 %v3983
        %4034 = vmatprep.subr.mxu0 0.0
        %4035 = vmatpush1.msra.mxu0 %v3981
        %4036 = vmatprep.subr.mxu0 0.0
        %4037 = vmatpush2.msra.mxu0 0.0
        %4038 = vmatprep.subr.mxu0 0.0
        %4039 = vmatpush2.msra.mxu0 0.0
        %4040 = vmatprep.subr.mxu0 0.0
        %4041 = vmatpush2.msra.mxu0 0.0
        %4042 = vmatprep.subr.mxu0 0.0
        %4043 = vmatpush2.msra.mxu0 0.0
        %4044 = vmatprep.subr.mxu0 0.0
        %4045 = vmatpush2.msra.mxu0 0.0
        %4046 = vmatprep.subr.mxu0 0.0
        %4047 = vmatpush2.msra.mxu0 0.0
        %4048 = vmatprep.subr.mxu0 0.0
        %4049 = vmatpush2.msra.mxu0 0.0
        %4050 = vmatprep.subr.mxu0 0.0
        %4051 = vmatpush2.msra.mxu0 0.0
        %4052 = vmatprep.subr.mxu0 0.0
        %4053 = vmatpush2.msra.mxu0 0.0
        %4054 = vmatprep.subr.mxu0 0.0
        %4055 = vmatpush2.msra.mxu0 0.0
        %4056 = vmatprep.subr.mxu0 0.0
        %4057 = vmatpush2.msra.mxu0 0.0
        %4058 = vmatprep.subr.mxu0 0.0
        %4059 = vmatpush2.msra.mxu0 0.0
        %4060 = vmatprep.subr.mxu0 0.0
        %4061 = vmatpush2.msra.mxu0 0.0
        %4062 = vmatprep.subr.mxu0 0.0
        %4063 = vmatpush2.msra.mxu0 0.0
        %4064 = vmatprep.subr.mxu0 0.0
        %4065 = vmatpush2.msra.mxu0 0.0
        %4066 = vmatprep.subr.mxu0 0.0
        %4067 = vmatpush2.msra.mxu0 0.0
        %4068 = vmatprep.mubr.f32.mxu0 0.0
        %4069 = vmatmul.mubr.f32.gmra.mxu0 %v3993
        %v4070 = vpop.f32.mrf.mxu0
        %v4071 = vadd.f32 0.0, %v4070
        %v4072 = vpop.f32.mrf.mxu0
        %4073 = vmatprep.mubr.f32.mxu0 0.0
        %4074 = vmatmul.mubr.f32.gmra.mxu0 %v3996
        %v4075 = vpop.f32.mrf.mxu0
        %v4076 = vadd.f32 0.0, %v4075
        %v4077 = vpop.f32.mrf.mxu0
        %4078 = vmatprep.mubr.f32.mxu0 0.0
        %4079 = vmatmul.mubr.f32.gmra.mxu0 %v3999
        %v4080 = vpop.f32.mrf.mxu0
        %v4081 = vadd.f32 0.0, %v4080
        %v4082 = vpop.f32.mrf.mxu0
        %4083 = vmatprep.mubr.f32.mxu0 0.0
        %4084 = vmatmul.mubr.f32.gmra.mxu0 %v4002
        %v4085 = vpop.f32.mrf.mxu0
        %v4086 = vadd.f32 0.0, %v4085
        %v4087 = vpop.f32.mrf.mxu0
        %4088 = vdwg.mxu0
        %4089 = vrot.lane.b32.xlu0 %v806, 64
        %v4090 = vpop.permute.xlu0 %4089
        %4091 = vrot.lane.b32.xlu0 %v808, 64
        %v4092 = vpop.permute.xlu0 %4091
        %4093 = vrot.lane.b32.xlu0 %v810, 64
        %v4094 = vpop.permute.xlu0 %4093
        %4095 = vrot.lane.b32.xlu0 %v812, 64
        %v4096 = vpop.permute.xlu0 %4095
        %v4102 = vsel %vm443, %v3255, 0
        %v4105 = vsel %vm443, %v3257, 0
        %v4108 = vsel %vm443, %v3259, 0
        %v4111 = vsel %vm443, %v3261, 0
        %4113 = vmatprep.subr.mxu0 0.0
        %4114 = vmatpush1.msra.mxu0 0.0
        %4115 = vmatprep.subr.mxu0 0.0
        %4116 = vmatpush1.msra.mxu0 0.0
        %4117 = vmatprep.subr.mxu0 0.0
        %4118 = vmatpush1.msra.mxu0 0.0
        %4119 = vmatprep.subr.mxu0 0.0
        %4120 = vmatpush1.msra.mxu0 0.0
        %4121 = vmatprep.subr.mxu0 0.0
        %4122 = vmatpush1.msra.mxu0 0.0
        %4123 = vmatprep.subr.mxu0 0.0
        %4124 = vmatpush1.msra.mxu0 0.0
        %4125 = vmatprep.subr.mxu0 0.0
        %4126 = vmatpush1.msra.mxu0 0.0
        %4127 = vmatprep.subr.mxu0 0.0
        %4128 = vmatpush1.msra.mxu0 0.0
        %4129 = vmatprep.subr.mxu0 0.0
        %4130 = vmatpush1.msra.mxu0 0.0
        %4131 = vmatprep.subr.mxu0 0.0
        %4132 = vmatpush1.msra.mxu0 0.0
        %4133 = vmatprep.subr.mxu0 0.0
        %4134 = vmatpush1.msra.mxu0 0.0
        %4135 = vmatprep.subr.mxu0 0.0
        %4136 = vmatpush1.msra.mxu0 0.0
        %4137 = vmatprep.subr.mxu0 0.0
        %4138 = vmatpush1.msra.mxu0 %v4096
        %4139 = vmatprep.subr.mxu0 0.0
        %4140 = vmatpush1.msra.mxu0 %v4094
        %4141 = vmatprep.subr.mxu0 0.0
        %4142 = vmatpush1.msra.mxu0 %v4092
        %4143 = vmatprep.subr.mxu0 0.0
        %4144 = vmatpush1.msra.mxu0 %v4090
        %4145 = vmatprep.subr.mxu0 0.0
        %4146 = vmatpush2.msra.mxu0 0.0
        %4147 = vmatprep.subr.mxu0 0.0
        %4148 = vmatpush2.msra.mxu0 0.0
        %4149 = vmatprep.subr.mxu0 0.0
        %4150 = vmatpush2.msra.mxu0 0.0
        %4151 = vmatprep.subr.mxu0 0.0
        %4152 = vmatpush2.msra.mxu0 0.0
        %4153 = vmatprep.subr.mxu0 0.0
        %4154 = vmatpush2.msra.mxu0 0.0
        %4155 = vmatprep.subr.mxu0 0.0
        %4156 = vmatpush2.msra.mxu0 0.0
        %4157 = vmatprep.subr.mxu0 0.0
        %4158 = vmatpush2.msra.mxu0 0.0
        %4159 = vmatprep.subr.mxu0 0.0
        %4160 = vmatpush2.msra.mxu0 0.0
        %4161 = vmatprep.subr.mxu0 0.0
        %4162 = vmatpush2.msra.mxu0 0.0
        %4163 = vmatprep.subr.mxu0 0.0
        %4164 = vmatpush2.msra.mxu0 0.0
        %4165 = vmatprep.subr.mxu0 0.0
        %4166 = vmatpush2.msra.mxu0 0.0
        %4167 = vmatprep.subr.mxu0 0.0
        %4168 = vmatpush2.msra.mxu0 0.0
        %4169 = vmatprep.subr.mxu0 0.0
        %4170 = vmatpush2.msra.mxu0 0.0
        %4171 = vmatprep.subr.mxu0 0.0
        %4172 = vmatpush2.msra.mxu0 0.0
        %4173 = vmatprep.subr.mxu0 0.0
        %4174 = vmatpush2.msra.mxu0 0.0
        %4175 = vmatprep.subr.mxu0 0.0
        %4176 = vmatpush2.msra.mxu0 0.0
        %4177 = vmatprep.mubr.f32.mxu0 0.0
        %4178 = vmatmul.mubr.f32.gmra.mxu0 %v4102
        %v4179 = vpop.f32.mrf.mxu0
        %v4180 = vadd.f32 0.0, %v4179
        %v4181 = vpop.f32.mrf.mxu0
        %4182 = vmatprep.mubr.f32.mxu0 0.0
        %4183 = vmatmul.mubr.f32.gmra.mxu0 %v4105
        %v4184 = vpop.f32.mrf.mxu0
        %v4185 = vadd.f32 0.0, %v4184
        %v4186 = vpop.f32.mrf.mxu0
        %4187 = vmatprep.mubr.f32.mxu0 0.0
        %4188 = vmatmul.mubr.f32.gmra.mxu0 %v4108
        %v4189 = vpop.f32.mrf.mxu0
        %v4190 = vadd.f32 0.0, %v4189
        %v4191 = vpop.f32.mrf.mxu0
        %4192 = vmatprep.mubr.f32.mxu0 0.0
        %4193 = vmatmul.mubr.f32.gmra.mxu0 %v4111
        %v4194 = vpop.f32.mrf.mxu0
        %v4195 = vadd.f32 0.0, %v4194
        %v4196 = vpop.f32.mrf.mxu0
        %4197 = vdwg.mxu0
        %4198 = vrot.lane.b32.xlu0 %v814, 64
        %v4199 = vpop.permute.xlu0 %4198
        %4200 = vrot.lane.b32.xlu0 %v816, 64
        %v4201 = vpop.permute.xlu0 %4200
        %4202 = vrot.lane.b32.xlu0 %v818, 64
        %v4203 = vpop.permute.xlu0 %4202
        %4204 = vrot.lane.b32.xlu0 %v820, 64
        %v4205 = vpop.permute.xlu0 %4204
        %v4211 = vsel %vm443, %v3263, 0
        %v4214 = vsel %vm443, %v3265, 0
        %v4217 = vsel %vm443, %v3267, 0
        %v4220 = vsel %vm443, %v3269, 0
        %4222 = vmatprep.subr.mxu0 0.0
        %4223 = vmatpush1.msra.mxu0 0.0
        %4224 = vmatprep.subr.mxu0 0.0
        %4225 = vmatpush1.msra.mxu0 0.0
        %4226 = vmatprep.subr.mxu0 0.0
        %4227 = vmatpush1.msra.mxu0 0.0
        %4228 = vmatprep.subr.mxu0 0.0
        %4229 = vmatpush1.msra.mxu0 0.0
        %4230 = vmatprep.subr.mxu0 0.0
        %4231 = vmatpush1.msra.mxu0 0.0
        %4232 = vmatprep.subr.mxu0 0.0
        %4233 = vmatpush1.msra.mxu0 0.0
        %4234 = vmatprep.subr.mxu0 0.0
        %4235 = vmatpush1.msra.mxu0 0.0
        %4236 = vmatprep.subr.mxu0 0.0
        %4237 = vmatpush1.msra.mxu0 0.0
        %4238 = vmatprep.subr.mxu0 0.0
        %4239 = vmatpush1.msra.mxu0 0.0
        %4240 = vmatprep.subr.mxu0 0.0
        %4241 = vmatpush1.msra.mxu0 0.0
        %4242 = vmatprep.subr.mxu0 0.0
        %4243 = vmatpush1.msra.mxu0 0.0
        %4244 = vmatprep.subr.mxu0 0.0
        %4245 = vmatpush1.msra.mxu0 0.0
        %4246 = vmatprep.subr.mxu0 0.0
        %4247 = vmatpush1.msra.mxu0 %v4205
        %4248 = vmatprep.subr.mxu0 0.0
        %4249 = vmatpush1.msra.mxu0 %v4203
        %4250 = vmatprep.subr.mxu0 0.0
        %4251 = vmatpush1.msra.mxu0 %v4201
        %4252 = vmatprep.subr.mxu0 0.0
        %4253 = vmatpush1.msra.mxu0 %v4199
        %4254 = vmatprep.subr.mxu0 0.0
        %4255 = vmatpush2.msra.mxu0 0.0
        %4256 = vmatprep.subr.mxu0 0.0
        %4257 = vmatpush2.msra.mxu0 0.0
        %4258 = vmatprep.subr.mxu0 0.0
        %4259 = vmatpush2.msra.mxu0 0.0
        %4260 = vmatprep.subr.mxu0 0.0
        %4261 = vmatpush2.msra.mxu0 0.0
        %4262 = vmatprep.subr.mxu0 0.0
        %4263 = vmatpush2.msra.mxu0 0.0
        %4264 = vmatprep.subr.mxu0 0.0
        %4265 = vmatpush2.msra.mxu0 0.0
        %4266 = vmatprep.subr.mxu0 0.0
        %4267 = vmatpush2.msra.mxu0 0.0
        %4268 = vmatprep.subr.mxu0 0.0
        %4269 = vmatpush2.msra.mxu0 0.0
        %4270 = vmatprep.subr.mxu0 0.0
        %4271 = vmatpush2.msra.mxu0 0.0
        %4272 = vmatprep.subr.mxu0 0.0
        %4273 = vmatpush2.msra.mxu0 0.0
        %4274 = vmatprep.subr.mxu0 0.0
        %4275 = vmatpush2.msra.mxu0 0.0
        %4276 = vmatprep.subr.mxu0 0.0
        %4277 = vmatpush2.msra.mxu0 0.0
        %4278 = vmatprep.subr.mxu0 0.0
        %4279 = vmatpush2.msra.mxu0 0.0
        %4280 = vmatprep.subr.mxu0 0.0
        %4281 = vmatpush2.msra.mxu0 0.0
        %4282 = vmatprep.subr.mxu0 0.0
        %4283 = vmatpush2.msra.mxu0 0.0
        %4284 = vmatprep.subr.mxu0 0.0
        %4285 = vmatpush2.msra.mxu0 0.0
        %4286 = vmatprep.mubr.f32.mxu0 0.0
        %4287 = vmatmul.mubr.f32.gmra.mxu0 %v4211
        %v4288 = vpop.f32.mrf.mxu0
        %v4289 = vadd.f32 0.0, %v4288
        %v4290 = vpop.f32.mrf.mxu0
        %4291 = vmatprep.mubr.f32.mxu0 0.0
        %4292 = vmatmul.mubr.f32.gmra.mxu0 %v4214
        %v4293 = vpop.f32.mrf.mxu0
        %v4294 = vadd.f32 0.0, %v4293
        %v4295 = vpop.f32.mrf.mxu0
        %4296 = vmatprep.mubr.f32.mxu0 0.0
        %4297 = vmatmul.mubr.f32.gmra.mxu0 %v4217
        %v4298 = vpop.f32.mrf.mxu0
        %v4299 = vadd.f32 0.0, %v4298
        %v4300 = vpop.f32.mrf.mxu0
        %4301 = vmatprep.mubr.f32.mxu0 0.0
        %4302 = vmatmul.mubr.f32.gmra.mxu0 %v4220
        %v4303 = vpop.f32.mrf.mxu0
        %v4304 = vadd.f32 0.0, %v4303
        %v4305 = vpop.f32.mrf.mxu0
        %4306 = vdwg.mxu0
        %4307 = vrot.lane.b32.xlu0 %v822, 64
        %v4308 = vpop.permute.xlu0 %4307
        %4309 = vrot.lane.b32.xlu0 %v824, 64
        %v4310 = vpop.permute.xlu0 %4309
        %4311 = vrot.lane.b32.xlu0 %v826, 64
        %v4312 = vpop.permute.xlu0 %4311
        %4313 = vrot.lane.b32.xlu0 %v828, 64
        %v4314 = vpop.permute.xlu0 %4313
        %v4320 = vsel %vm443, %v3271, 0
        %v4323 = vsel %vm443, %v3273, 0
        %v4326 = vsel %vm443, %v3275, 0
        %v4329 = vsel %vm443, %v3277, 0
        %4331 = vmatprep.subr.mxu0 0.0
        %4332 = vmatpush1.msra.mxu0 0.0
        %4333 = vmatprep.subr.mxu0 0.0
        %4334 = vmatpush1.msra.mxu0 0.0
        %4335 = vmatprep.subr.mxu0 0.0
        %4336 = vmatpush1.msra.mxu0 0.0
        %4337 = vmatprep.subr.mxu0 0.0
        %4338 = vmatpush1.msra.mxu0 0.0
        %4339 = vmatprep.subr.mxu0 0.0
        %4340 = vmatpush1.msra.mxu0 0.0
        %4341 = vmatprep.subr.mxu0 0.0
        %4342 = vmatpush1.msra.mxu0 0.0
        %4343 = vmatprep.subr.mxu0 0.0
        %4344 = vmatpush1.msra.mxu0 0.0
        %4345 = vmatprep.subr.mxu0 0.0
        %4346 = vmatpush1.msra.mxu0 0.0
        %4347 = vmatprep.subr.mxu0 0.0
        %4348 = vmatpush1.msra.mxu0 0.0
        %4349 = vmatprep.subr.mxu0 0.0
        %4350 = vmatpush1.msra.mxu0 0.0
        %4351 = vmatprep.subr.mxu0 0.0
        %4352 = vmatpush1.msra.mxu0 0.0
        %4353 = vmatprep.subr.mxu0 0.0
        %4354 = vmatpush1.msra.mxu0 0.0
        %4355 = vmatprep.subr.mxu0 0.0
        %4356 = vmatpush1.msra.mxu0 %v4314
        %4357 = vmatprep.subr.mxu0 0.0
        %4358 = vmatpush1.msra.mxu0 %v4312
        %4359 = vmatprep.subr.mxu0 0.0
        %4360 = vmatpush1.msra.mxu0 %v4310
        %4361 = vmatprep.subr.mxu0 0.0
        %4362 = vmatpush1.msra.mxu0 %v4308
        %4363 = vmatprep.subr.mxu0 0.0
        %4364 = vmatpush2.msra.mxu0 0.0
        %4365 = vmatprep.subr.mxu0 0.0
        %4366 = vmatpush2.msra.mxu0 0.0
        %4367 = vmatprep.subr.mxu0 0.0
        %4368 = vmatpush2.msra.mxu0 0.0
        %4369 = vmatprep.subr.mxu0 0.0
        %4370 = vmatpush2.msra.mxu0 0.0
        %4371 = vmatprep.subr.mxu0 0.0
        %4372 = vmatpush2.msra.mxu0 0.0
        %4373 = vmatprep.subr.mxu0 0.0
        %4374 = vmatpush2.msra.mxu0 0.0
        %4375 = vmatprep.subr.mxu0 0.0
        %4376 = vmatpush2.msra.mxu0 0.0
        %4377 = vmatprep.subr.mxu0 0.0
        %4378 = vmatpush2.msra.mxu0 0.0
        %4379 = vmatprep.subr.mxu0 0.0
        %4380 = vmatpush2.msra.mxu0 0.0
        %4381 = vmatprep.subr.mxu0 0.0
        %4382 = vmatpush2.msra.mxu0 0.0
        %4383 = vmatprep.subr.mxu0 0.0
        %4384 = vmatpush2.msra.mxu0 0.0
        %4385 = vmatprep.subr.mxu0 0.0
        %4386 = vmatpush2.msra.mxu0 0.0
        %4387 = vmatprep.subr.mxu0 0.0
        %4388 = vmatpush2.msra.mxu0 0.0
        %4389 = vmatprep.subr.mxu0 0.0
        %4390 = vmatpush2.msra.mxu0 0.0
        %4391 = vmatprep.subr.mxu0 0.0
        %4392 = vmatpush2.msra.mxu0 0.0
        %4393 = vmatprep.subr.mxu0 0.0
        %4394 = vmatpush2.msra.mxu0 0.0
        %4395 = vmatprep.mubr.f32.mxu0 0.0
        %4396 = vmatmul.mubr.f32.gmra.mxu0 %v4320
        %v4397 = vpop.f32.mrf.mxu0
        %v4398 = vadd.f32 0.0, %v4397
        %v4399 = vpop.f32.mrf.mxu0
        %4400 = vmatprep.mubr.f32.mxu0 0.0
        %4401 = vmatmul.mubr.f32.gmra.mxu0 %v4323
        %v4402 = vpop.f32.mrf.mxu0
        %v4403 = vadd.f32 0.0, %v4402
        %v4404 = vpop.f32.mrf.mxu0
        %4405 = vmatprep.mubr.f32.mxu0 0.0
        %4406 = vmatmul.mubr.f32.gmra.mxu0 %v4326
        %v4407 = vpop.f32.mrf.mxu0
        %v4408 = vadd.f32 0.0, %v4407
        %v4409 = vpop.f32.mrf.mxu0
        %4410 = vmatprep.mubr.f32.mxu0 0.0
        %4411 = vmatmul.mubr.f32.gmra.mxu0 %v4329
        %v4412 = vpop.f32.mrf.mxu0
        %v4413 = vadd.f32 0.0, %v4412
        %v4414 = vpop.f32.mrf.mxu0
        %4415 = vdwg.mxu0
        %4416 = vrot.lane.b32.xlu0 %v830, 64
        %v4417 = vpop.permute.xlu0 %4416
        %4418 = vrot.lane.b32.xlu0 %v832, 64
        %v4419 = vpop.permute.xlu0 %4418
        %4420 = vrot.lane.b32.xlu0 %v834, 64
        %v4421 = vpop.permute.xlu0 %4420
        %4422 = vrot.lane.b32.xlu0 %v836, 64
        %v4423 = vpop.permute.xlu0 %4422
        %v4429 = vsel %vm443, %v3279, 0
        %v4432 = vsel %vm443, %v3281, 0
        %v4435 = vsel %vm443, %v3283, 0
        %v4438 = vsel %vm443, %v3285, 0
        %4440 = vmatprep.subr.mxu0 0.0
        %4441 = vmatpush1.msra.mxu0 0.0
        %4442 = vmatprep.subr.mxu0 0.0
        %4443 = vmatpush1.msra.mxu0 0.0
        %4444 = vmatprep.subr.mxu0 0.0
        %4445 = vmatpush1.msra.mxu0 0.0
        %4446 = vmatprep.subr.mxu0 0.0
        %4447 = vmatpush1.msra.mxu0 0.0
        %4448 = vmatprep.subr.mxu0 0.0
        %4449 = vmatpush1.msra.mxu0 0.0
        %4450 = vmatprep.subr.mxu0 0.0
        %4451 = vmatpush1.msra.mxu0 0.0
        %4452 = vmatprep.subr.mxu0 0.0
        %4453 = vmatpush1.msra.mxu0 0.0
        %4454 = vmatprep.subr.mxu0 0.0
        %4455 = vmatpush1.msra.mxu0 0.0
        %4456 = vmatprep.subr.mxu0 0.0
        %4457 = vmatpush1.msra.mxu0 0.0
        %4458 = vmatprep.subr.mxu0 0.0
        %4459 = vmatpush1.msra.mxu0 0.0
        %4460 = vmatprep.subr.mxu0 0.0
        %4461 = vmatpush1.msra.mxu0 0.0
        %4462 = vmatprep.subr.mxu0 0.0
        %4463 = vmatpush1.msra.mxu0 0.0
        %4464 = vmatprep.subr.mxu0 0.0
        %4465 = vmatpush1.msra.mxu0 %v4423
        %4466 = vmatprep.subr.mxu0 0.0
        %4467 = vmatpush1.msra.mxu0 %v4421
        %4468 = vmatprep.subr.mxu0 0.0
        %4469 = vmatpush1.msra.mxu0 %v4419
        %4470 = vmatprep.subr.mxu0 0.0
        %4471 = vmatpush1.msra.mxu0 %v4417
        %4472 = vmatprep.subr.mxu0 0.0
        %4473 = vmatpush2.msra.mxu0 0.0
        %4474 = vmatprep.subr.mxu0 0.0
        %4475 = vmatpush2.msra.mxu0 0.0
        %4476 = vmatprep.subr.mxu0 0.0
        %4477 = vmatpush2.msra.mxu0 0.0
        %4478 = vmatprep.subr.mxu0 0.0
        %4479 = vmatpush2.msra.mxu0 0.0
        %4480 = vmatprep.subr.mxu0 0.0
        %4481 = vmatpush2.msra.mxu0 0.0
        %4482 = vmatprep.subr.mxu0 0.0
        %4483 = vmatpush2.msra.mxu0 0.0
        %4484 = vmatprep.subr.mxu0 0.0
        %4485 = vmatpush2.msra.mxu0 0.0
        %4486 = vmatprep.subr.mxu0 0.0
        %4487 = vmatpush2.msra.mxu0 0.0
        %4488 = vmatprep.subr.mxu0 0.0
        %4489 = vmatpush2.msra.mxu0 0.0
        %4490 = vmatprep.subr.mxu0 0.0
        %4491 = vmatpush2.msra.mxu0 0.0
        %4492 = vmatprep.subr.mxu0 0.0
        %4493 = vmatpush2.msra.mxu0 0.0
        %4494 = vmatprep.subr.mxu0 0.0
        %4495 = vmatpush2.msra.mxu0 0.0
        %4496 = vmatprep.subr.mxu0 0.0
        %4497 = vmatpush2.msra.mxu0 0.0
        %4498 = vmatprep.subr.mxu0 0.0
        %4499 = vmatpush2.msra.mxu0 0.0
        %4500 = vmatprep.subr.mxu0 0.0
        %4501 = vmatpush2.msra.mxu0 0.0
        %4502 = vmatprep.subr.mxu0 0.0
        %4503 = vmatpush2.msra.mxu0 0.0
        %4504 = vmatprep.mubr.f32.mxu0 0.0
        %4505 = vmatmul.mubr.f32.gmra.mxu0 %v4429
        %v4506 = vpop.f32.mrf.mxu0
        %v4507 = vadd.f32 0.0, %v4506
        %v4508 = vpop.f32.mrf.mxu0
        %4509 = vmatprep.mubr.f32.mxu0 0.0
        %4510 = vmatmul.mubr.f32.gmra.mxu0 %v4432
        %v4511 = vpop.f32.mrf.mxu0
        %v4512 = vadd.f32 0.0, %v4511
        %v4513 = vpop.f32.mrf.mxu0
        %4514 = vmatprep.mubr.f32.mxu0 0.0
        %4515 = vmatmul.mubr.f32.gmra.mxu0 %v4435
        %v4516 = vpop.f32.mrf.mxu0
        %v4517 = vadd.f32 0.0, %v4516
        %v4518 = vpop.f32.mrf.mxu0
        %4519 = vmatprep.mubr.f32.mxu0 0.0
        %4520 = vmatmul.mubr.f32.gmra.mxu0 %v4438
        %v4521 = vpop.f32.mrf.mxu0
        %v4522 = vadd.f32 0.0, %v4521
        %v4523 = vpop.f32.mrf.mxu0
        %4524 = vdwg.mxu0
        %4525 = vrot.lane.b32.xlu0 %v838, 64
        %v4526 = vpop.permute.xlu0 %4525
        %4527 = vrot.lane.b32.xlu0 %v840, 64
        %v4528 = vpop.permute.xlu0 %4527
        %4529 = vrot.lane.b32.xlu0 %v842, 64
        %v4530 = vpop.permute.xlu0 %4529
        %4531 = vrot.lane.b32.xlu0 %v844, 64
        %v4532 = vpop.permute.xlu0 %4531
        %v4538 = vsel %vm443, %v3287, 0
        %v4541 = vsel %vm443, %v3289, 0
        %v4544 = vsel %vm443, %v3291, 0
        %v4547 = vsel %vm443, %v3293, 0
        %4549 = vmatprep.subr.mxu0 0.0
        %4550 = vmatpush1.msra.mxu0 0.0
        %4551 = vmatprep.subr.mxu0 0.0
        %4552 = vmatpush1.msra.mxu0 0.0
        %4553 = vmatprep.subr.mxu0 0.0
        %4554 = vmatpush1.msra.mxu0 0.0
        %4555 = vmatprep.subr.mxu0 0.0
        %4556 = vmatpush1.msra.mxu0 0.0
        %4557 = vmatprep.subr.mxu0 0.0
        %4558 = vmatpush1.msra.mxu0 0.0
        %4559 = vmatprep.subr.mxu0 0.0
        %4560 = vmatpush1.msra.mxu0 0.0
        %4561 = vmatprep.subr.mxu0 0.0
        %4562 = vmatpush1.msra.mxu0 0.0
        %4563 = vmatprep.subr.mxu0 0.0
        %4564 = vmatpush1.msra.mxu0 0.0
        %4565 = vmatprep.subr.mxu0 0.0
        %4566 = vmatpush1.msra.mxu0 0.0
        %4567 = vmatprep.subr.mxu0 0.0
        %4568 = vmatpush1.msra.mxu0 0.0
        %4569 = vmatprep.subr.mxu0 0.0
        %4570 = vmatpush1.msra.mxu0 0.0
        %4571 = vmatprep.subr.mxu0 0.0
        %4572 = vmatpush1.msra.mxu0 0.0
        %4573 = vmatprep.subr.mxu0 0.0
        %4574 = vmatpush1.msra.mxu0 %v4532
        %4575 = vmatprep.subr.mxu0 0.0
        %4576 = vmatpush1.msra.mxu0 %v4530
        %4577 = vmatprep.subr.mxu0 0.0
        %4578 = vmatpush1.msra.mxu0 %v4528
        %4579 = vmatprep.subr.mxu0 0.0
        %4580 = vmatpush1.msra.mxu0 %v4526
        %4581 = vmatprep.subr.mxu0 0.0
        %4582 = vmatpush2.msra.mxu0 0.0
        %4583 = vmatprep.subr.mxu0 0.0
        %4584 = vmatpush2.msra.mxu0 0.0
        %4585 = vmatprep.subr.mxu0 0.0
        %4586 = vmatpush2.msra.mxu0 0.0
        %4587 = vmatprep.subr.mxu0 0.0
        %4588 = vmatpush2.msra.mxu0 0.0
        %4589 = vmatprep.subr.mxu0 0.0
        %4590 = vmatpush2.msra.mxu0 0.0
        %4591 = vmatprep.subr.mxu0 0.0
        %4592 = vmatpush2.msra.mxu0 0.0
        %4593 = vmatprep.subr.mxu0 0.0
        %4594 = vmatpush2.msra.mxu0 0.0
        %4595 = vmatprep.subr.mxu0 0.0
        %4596 = vmatpush2.msra.mxu0 0.0
        %4597 = vmatprep.subr.mxu0 0.0
        %4598 = vmatpush2.msra.mxu0 0.0
        %4599 = vmatprep.subr.mxu0 0.0
        %4600 = vmatpush2.msra.mxu0 0.0
        %4601 = vmatprep.subr.mxu0 0.0
        %4602 = vmatpush2.msra.mxu0 0.0
        %4603 = vmatprep.subr.mxu0 0.0
        %4604 = vmatpush2.msra.mxu0 0.0
        %4605 = vmatprep.subr.mxu0 0.0
        %4606 = vmatpush2.msra.mxu0 0.0
        %4607 = vmatprep.subr.mxu0 0.0
        %4608 = vmatpush2.msra.mxu0 0.0
        %4609 = vmatprep.subr.mxu0 0.0
        %4610 = vmatpush2.msra.mxu0 0.0
        %4611 = vmatprep.subr.mxu0 0.0
        %4612 = vmatpush2.msra.mxu0 0.0
        %4613 = vmatprep.mubr.f32.mxu0 0.0
        %4614 = vmatmul.mubr.f32.gmra.mxu0 %v4538
        %v4615 = vpop.f32.mrf.mxu0
        %v4616 = vadd.f32 0.0, %v4615
        %v4617 = vpop.f32.mrf.mxu0
        %4618 = vmatprep.mubr.f32.mxu0 0.0
        %4619 = vmatmul.mubr.f32.gmra.mxu0 %v4541
        %v4620 = vpop.f32.mrf.mxu0
        %v4621 = vadd.f32 0.0, %v4620
        %v4622 = vpop.f32.mrf.mxu0
        %4623 = vmatprep.mubr.f32.mxu0 0.0
        %4624 = vmatmul.mubr.f32.gmra.mxu0 %v4544
        %v4625 = vpop.f32.mrf.mxu0
        %v4626 = vadd.f32 0.0, %v4625
        %v4627 = vpop.f32.mrf.mxu0
        %4628 = vmatprep.mubr.f32.mxu0 0.0
        %4629 = vmatmul.mubr.f32.gmra.mxu0 %v4547
        %v4630 = vpop.f32.mrf.mxu0
        %v4631 = vadd.f32 0.0, %v4630
        %v4632 = vpop.f32.mrf.mxu0
        %4633 = vdwg.mxu0
        %4634 = vrot.lane.b32.xlu0 %v846, 64
        %v4635 = vpop.permute.xlu0 %4634
        %4636 = vrot.lane.b32.xlu0 %v848, 64
        %v4637 = vpop.permute.xlu0 %4636
        %4638 = vrot.lane.b32.xlu0 %v850, 64
        %v4639 = vpop.permute.xlu0 %4638
        %4640 = vrot.lane.b32.xlu0 %v852, 64
        %v4641 = vpop.permute.xlu0 %4640
        %v4647 = vsel %vm443, %v3295, 0
        %v4650 = vsel %vm443, %v3297, 0
        %v4653 = vsel %vm443, %v3299, 0
        %v4656 = vsel %vm443, %v3301, 0
        %4658 = vmatprep.subr.mxu0 0.0
        %4659 = vmatpush1.msra.mxu0 0.0
        %4660 = vmatprep.subr.mxu0 0.0
        %4661 = vmatpush1.msra.mxu0 0.0
        %4662 = vmatprep.subr.mxu0 0.0
        %4663 = vmatpush1.msra.mxu0 0.0
        %4664 = vmatprep.subr.mxu0 0.0
        %4665 = vmatpush1.msra.mxu0 0.0
        %4666 = vmatprep.subr.mxu0 0.0
        %4667 = vmatpush1.msra.mxu0 0.0
        %4668 = vmatprep.subr.mxu0 0.0
        %4669 = vmatpush1.msra.mxu0 0.0
        %4670 = vmatprep.subr.mxu0 0.0
        %4671 = vmatpush1.msra.mxu0 0.0
        %4672 = vmatprep.subr.mxu0 0.0
        %4673 = vmatpush1.msra.mxu0 0.0
        %4674 = vmatprep.subr.mxu0 0.0
        %4675 = vmatpush1.msra.mxu0 0.0
        %4676 = vmatprep.subr.mxu0 0.0
        %4677 = vmatpush1.msra.mxu0 0.0
        %4678 = vmatprep.subr.mxu0 0.0
        %4679 = vmatpush1.msra.mxu0 0.0
        %4680 = vmatprep.subr.mxu0 0.0
        %4681 = vmatpush1.msra.mxu0 0.0
        %4682 = vmatprep.subr.mxu0 0.0
        %4683 = vmatpush1.msra.mxu0 %v4641
        %4684 = vmatprep.subr.mxu0 0.0
        %4685 = vmatpush1.msra.mxu0 %v4639
        %4686 = vmatprep.subr.mxu0 0.0
        %4687 = vmatpush1.msra.mxu0 %v4637
        %4688 = vmatprep.subr.mxu0 0.0
        %4689 = vmatpush1.msra.mxu0 %v4635
        %4690 = vmatprep.subr.mxu0 0.0
        %4691 = vmatpush2.msra.mxu0 0.0
        %4692 = vmatprep.subr.mxu0 0.0
        %4693 = vmatpush2.msra.mxu0 0.0
        %4694 = vmatprep.subr.mxu0 0.0
        %4695 = vmatpush2.msra.mxu0 0.0
        %4696 = vmatprep.subr.mxu0 0.0
        %4697 = vmatpush2.msra.mxu0 0.0
        %4698 = vmatprep.subr.mxu0 0.0
        %4699 = vmatpush2.msra.mxu0 0.0
        %4700 = vmatprep.subr.mxu0 0.0
        %4701 = vmatpush2.msra.mxu0 0.0
        %4702 = vmatprep.subr.mxu0 0.0
        %4703 = vmatpush2.msra.mxu0 0.0
        %4704 = vmatprep.subr.mxu0 0.0
        %4705 = vmatpush2.msra.mxu0 0.0
        %4706 = vmatprep.subr.mxu0 0.0
        %4707 = vmatpush2.msra.mxu0 0.0
        %4708 = vmatprep.subr.mxu0 0.0
        %4709 = vmatpush2.msra.mxu0 0.0
        %4710 = vmatprep.subr.mxu0 0.0
        %4711 = vmatpush2.msra.mxu0 0.0
        %4712 = vmatprep.subr.mxu0 0.0
        %4713 = vmatpush2.msra.mxu0 0.0
        %4714 = vmatprep.subr.mxu0 0.0
        %4715 = vmatpush2.msra.mxu0 0.0
        %4716 = vmatprep.subr.mxu0 0.0
        %4717 = vmatpush2.msra.mxu0 0.0
        %4718 = vmatprep.subr.mxu0 0.0
        %4719 = vmatpush2.msra.mxu0 0.0
        %4720 = vmatprep.subr.mxu0 0.0
        %4721 = vmatpush2.msra.mxu0 0.0
        %4722 = vmatprep.mubr.f32.mxu0 0.0
        %4723 = vmatmul.mubr.f32.gmra.mxu0 %v4647
        %v4724 = vpop.f32.mrf.mxu0
        %v4725 = vadd.f32 0.0, %v4724
        %v4726 = vpop.f32.mrf.mxu0
        %4727 = vmatprep.mubr.f32.mxu0 0.0
        %4728 = vmatmul.mubr.f32.gmra.mxu0 %v4650
        %v4729 = vpop.f32.mrf.mxu0
        %v4730 = vadd.f32 0.0, %v4729
        %v4731 = vpop.f32.mrf.mxu0
        %4732 = vmatprep.mubr.f32.mxu0 0.0
        %4733 = vmatmul.mubr.f32.gmra.mxu0 %v4653
        %v4734 = vpop.f32.mrf.mxu0
        %v4735 = vadd.f32 0.0, %v4734
        %v4736 = vpop.f32.mrf.mxu0
        %4737 = vmatprep.mubr.f32.mxu0 0.0
        %4738 = vmatmul.mubr.f32.gmra.mxu0 %v4656
        %v4739 = vpop.f32.mrf.mxu0
        %v4740 = vadd.f32 0.0, %v4739
        %v4741 = vpop.f32.mrf.mxu0
        %4742 = vdwg.mxu0
        %4743 = vrot.lane.b32.xlu0 %v854, 64
        %v4744 = vpop.permute.xlu0 %4743
        %4745 = vrot.lane.b32.xlu0 %v856, 64
        %v4746 = vpop.permute.xlu0 %4745
        %4747 = vrot.lane.b32.xlu0 %v858, 64
        %v4748 = vpop.permute.xlu0 %4747
        %4749 = vrot.lane.b32.xlu0 %v860, 64
        %v4750 = vpop.permute.xlu0 %4749
        %v4756 = vsel %vm443, %v3303, 0
        %v4759 = vsel %vm443, %v3305, 0
        %v4762 = vsel %vm443, %v3307, 0
        %v4765 = vsel %vm443, %v3309, 0
        %4767 = vmatprep.subr.mxu0 0.0
        %4768 = vmatpush1.msra.mxu0 0.0
        %4769 = vmatprep.subr.mxu0 0.0
        %4770 = vmatpush1.msra.mxu0 0.0
        %4771 = vmatprep.subr.mxu0 0.0
        %4772 = vmatpush1.msra.mxu0 0.0
        %4773 = vmatprep.subr.mxu0 0.0
        %4774 = vmatpush1.msra.mxu0 0.0
        %4775 = vmatprep.subr.mxu0 0.0
        %4776 = vmatpush1.msra.mxu0 0.0
        %4777 = vmatprep.subr.mxu0 0.0
        %4778 = vmatpush1.msra.mxu0 0.0
        %4779 = vmatprep.subr.mxu0 0.0
        %4780 = vmatpush1.msra.mxu0 0.0
        %4781 = vmatprep.subr.mxu0 0.0
        %4782 = vmatpush1.msra.mxu0 0.0
        %4783 = vmatprep.subr.mxu0 0.0
        %4784 = vmatpush1.msra.mxu0 0.0
        %4785 = vmatprep.subr.mxu0 0.0
        %4786 = vmatpush1.msra.mxu0 0.0
        %4787 = vmatprep.subr.mxu0 0.0
        %4788 = vmatpush1.msra.mxu0 0.0
        %4789 = vmatprep.subr.mxu0 0.0
        %4790 = vmatpush1.msra.mxu0 0.0
        %4791 = vmatprep.subr.mxu0 0.0
        %4792 = vmatpush1.msra.mxu0 %v4750
        %4793 = vmatprep.subr.mxu0 0.0
        %4794 = vmatpush1.msra.mxu0 %v4748
        %4795 = vmatprep.subr.mxu0 0.0
        %4796 = vmatpush1.msra.mxu0 %v4746
        %4797 = vmatprep.subr.mxu0 0.0
        %4798 = vmatpush1.msra.mxu0 %v4744
        %4799 = vmatprep.subr.mxu0 0.0
        %4800 = vmatpush2.msra.mxu0 0.0
        %4801 = vmatprep.subr.mxu0 0.0
        %4802 = vmatpush2.msra.mxu0 0.0
        %4803 = vmatprep.subr.mxu0 0.0
        %4804 = vmatpush2.msra.mxu0 0.0
        %4805 = vmatprep.subr.mxu0 0.0
        %4806 = vmatpush2.msra.mxu0 0.0
        %4807 = vmatprep.subr.mxu0 0.0
        %4808 = vmatpush2.msra.mxu0 0.0
        %4809 = vmatprep.subr.mxu0 0.0
        %4810 = vmatpush2.msra.mxu0 0.0
        %4811 = vmatprep.subr.mxu0 0.0
        %4812 = vmatpush2.msra.mxu0 0.0
        %4813 = vmatprep.subr.mxu0 0.0
        %4814 = vmatpush2.msra.mxu0 0.0
        %4815 = vmatprep.subr.mxu0 0.0
        %4816 = vmatpush2.msra.mxu0 0.0
        %4817 = vmatprep.subr.mxu0 0.0
        %4818 = vmatpush2.msra.mxu0 0.0
        %4819 = vmatprep.subr.mxu0 0.0
        %4820 = vmatpush2.msra.mxu0 0.0
        %4821 = vmatprep.subr.mxu0 0.0
        %4822 = vmatpush2.msra.mxu0 0.0
        %4823 = vmatprep.subr.mxu0 0.0
        %4824 = vmatpush2.msra.mxu0 0.0
        %4825 = vmatprep.subr.mxu0 0.0
        %4826 = vmatpush2.msra.mxu0 0.0
        %4827 = vmatprep.subr.mxu0 0.0
        %4828 = vmatpush2.msra.mxu0 0.0
        %4829 = vmatprep.subr.mxu0 0.0
        %4830 = vmatpush2.msra.mxu0 0.0
        %4831 = vmatprep.mubr.f32.mxu0 0.0
        %4832 = vmatmul.mubr.f32.gmra.mxu0 %v4756
        %v4833 = vpop.f32.mrf.mxu0
        %v4834 = vadd.f32 0.0, %v4833
        %v4835 = vpop.f32.mrf.mxu0
        %4836 = vmatprep.mubr.f32.mxu0 0.0
        %4837 = vmatmul.mubr.f32.gmra.mxu0 %v4759
        %v4838 = vpop.f32.mrf.mxu0
        %v4839 = vadd.f32 0.0, %v4838
        %v4840 = vpop.f32.mrf.mxu0
        %4841 = vmatprep.mubr.f32.mxu0 0.0
        %4842 = vmatmul.mubr.f32.gmra.mxu0 %v4762
        %v4843 = vpop.f32.mrf.mxu0
        %v4844 = vadd.f32 0.0, %v4843
        %v4845 = vpop.f32.mrf.mxu0
        %4846 = vmatprep.mubr.f32.mxu0 0.0
        %4847 = vmatmul.mubr.f32.gmra.mxu0 %v4765
        %v4848 = vpop.f32.mrf.mxu0
        %v4849 = vadd.f32 0.0, %v4848
        %v4850 = vpop.f32.mrf.mxu0
        %4851 = vdwg.mxu0
        %4852 = vrot.lane.b32.xlu0 %v862, 64
        %v4853 = vpop.permute.xlu0 %4852
        %4854 = vrot.lane.b32.xlu0 %v864, 64
        %v4855 = vpop.permute.xlu0 %4854
        %4856 = vrot.lane.b32.xlu0 %v866, 64
        %v4857 = vpop.permute.xlu0 %4856
        %4858 = vrot.lane.b32.xlu0 %v868, 64
        %v4859 = vpop.permute.xlu0 %4858
        %v4865 = vsel %vm443, %v3311, 0
        %v4868 = vsel %vm443, %v3313, 0
        %v4871 = vsel %vm443, %v3315, 0
        %v4874 = vsel %vm443, %v3317, 0
        %4876 = vmatprep.subr.mxu0 0.0
        %4877 = vmatpush1.msra.mxu0 0.0
        %4878 = vmatprep.subr.mxu0 0.0
        %4879 = vmatpush1.msra.mxu0 0.0
        %4880 = vmatprep.subr.mxu0 0.0
        %4881 = vmatpush1.msra.mxu0 0.0
        %4882 = vmatprep.subr.mxu0 0.0
        %4883 = vmatpush1.msra.mxu0 0.0
        %4884 = vmatprep.subr.mxu0 0.0
        %4885 = vmatpush1.msra.mxu0 0.0
        %4886 = vmatprep.subr.mxu0 0.0
        %4887 = vmatpush1.msra.mxu0 0.0
        %4888 = vmatprep.subr.mxu0 0.0
        %4889 = vmatpush1.msra.mxu0 0.0
        %4890 = vmatprep.subr.mxu0 0.0
        %4891 = vmatpush1.msra.mxu0 0.0
        %4892 = vmatprep.subr.mxu0 0.0
        %4893 = vmatpush1.msra.mxu0 0.0
        %4894 = vmatprep.subr.mxu0 0.0
        %4895 = vmatpush1.msra.mxu0 0.0
        %4896 = vmatprep.subr.mxu0 0.0
        %4897 = vmatpush1.msra.mxu0 0.0
        %4898 = vmatprep.subr.mxu0 0.0
        %4899 = vmatpush1.msra.mxu0 0.0
        %4900 = vmatprep.subr.mxu0 0.0
        %4901 = vmatpush1.msra.mxu0 %v4859
        %4902 = vmatprep.subr.mxu0 0.0
        %4903 = vmatpush1.msra.mxu0 %v4857
        %4904 = vmatprep.subr.mxu0 0.0
        %4905 = vmatpush1.msra.mxu0 %v4855
        %4906 = vmatprep.subr.mxu0 0.0
        %4907 = vmatpush1.msra.mxu0 %v4853
        %4908 = vmatprep.subr.mxu0 0.0
        %4909 = vmatpush2.msra.mxu0 0.0
        %4910 = vmatprep.subr.mxu0 0.0
        %4911 = vmatpush2.msra.mxu0 0.0
        %4912 = vmatprep.subr.mxu0 0.0
        %4913 = vmatpush2.msra.mxu0 0.0
        %4914 = vmatprep.subr.mxu0 0.0
        %4915 = vmatpush2.msra.mxu0 0.0
        %4916 = vmatprep.subr.mxu0 0.0
        %4917 = vmatpush2.msra.mxu0 0.0
        %4918 = vmatprep.subr.mxu0 0.0
        %4919 = vmatpush2.msra.mxu0 0.0
        %4920 = vmatprep.subr.mxu0 0.0
        %4921 = vmatpush2.msra.mxu0 0.0
        %4922 = vmatprep.subr.mxu0 0.0
        %4923 = vmatpush2.msra.mxu0 0.0
        %4924 = vmatprep.subr.mxu0 0.0
        %4925 = vmatpush2.msra.mxu0 0.0
        %4926 = vmatprep.subr.mxu0 0.0
        %4927 = vmatpush2.msra.mxu0 0.0
        %4928 = vmatprep.subr.mxu0 0.0
        %4929 = vmatpush2.msra.mxu0 0.0
        %4930 = vmatprep.subr.mxu0 0.0
        %4931 = vmatpush2.msra.mxu0 0.0
        %4932 = vmatprep.subr.mxu0 0.0
        %4933 = vmatpush2.msra.mxu0 0.0
        %4934 = vmatprep.subr.mxu0 0.0
        %4935 = vmatpush2.msra.mxu0 0.0
        %4936 = vmatprep.subr.mxu0 0.0
        %4937 = vmatpush2.msra.mxu0 0.0
        %4938 = vmatprep.subr.mxu0 0.0
        %4939 = vmatpush2.msra.mxu0 0.0
        %4940 = vmatprep.mubr.f32.mxu0 0.0
        %4941 = vmatmul.mubr.f32.gmra.mxu0 %v4865
        %v4942 = vpop.f32.mrf.mxu0
        %v4943 = vadd.f32 0.0, %v4942
        %v4944 = vpop.f32.mrf.mxu0
        %4945 = vmatprep.mubr.f32.mxu0 0.0
        %4946 = vmatmul.mubr.f32.gmra.mxu0 %v4868
        %v4947 = vpop.f32.mrf.mxu0
        %v4948 = vadd.f32 0.0, %v4947
        %v4949 = vpop.f32.mrf.mxu0
        %4950 = vmatprep.mubr.f32.mxu0 0.0
        %4951 = vmatmul.mubr.f32.gmra.mxu0 %v4871
        %v4952 = vpop.f32.mrf.mxu0
        %v4953 = vadd.f32 0.0, %v4952
        %v4954 = vpop.f32.mrf.mxu0
        %4955 = vmatprep.mubr.f32.mxu0 0.0
        %4956 = vmatmul.mubr.f32.gmra.mxu0 %v4874
        %v4957 = vpop.f32.mrf.mxu0
        %v4958 = vadd.f32 0.0, %v4957
        %v4959 = vpop.f32.mrf.mxu0
        %4960 = vdwg.mxu0
        %4961 = vrot.lane.b32.xlu0 %v870, 64
        %v4962 = vpop.permute.xlu0 %4961
        %4963 = vrot.lane.b32.xlu0 %v872, 64
        %v4964 = vpop.permute.xlu0 %4963
        %4965 = vrot.lane.b32.xlu0 %v874, 64
        %v4966 = vpop.permute.xlu0 %4965
        %4967 = vrot.lane.b32.xlu0 %v876, 64
        %v4968 = vpop.permute.xlu0 %4967
        %v4974 = vsel %vm443, %v3319, 0
        %v4977 = vsel %vm443, %v3321, 0
        %v4980 = vsel %vm443, %v3323, 0
        %v4983 = vsel %vm443, %v3325, 0
        %4985 = vmatprep.subr.mxu0 0.0
        %4986 = vmatpush1.msra.mxu0 0.0
        %4987 = vmatprep.subr.mxu0 0.0
        %4988 = vmatpush1.msra.mxu0 0.0
        %4989 = vmatprep.subr.mxu0 0.0
        %4990 = vmatpush1.msra.mxu0 0.0
        %4991 = vmatprep.subr.mxu0 0.0
        %4992 = vmatpush1.msra.mxu0 0.0
        %4993 = vmatprep.subr.mxu0 0.0
        %4994 = vmatpush1.msra.mxu0 0.0
        %4995 = vmatprep.subr.mxu0 0.0
        %4996 = vmatpush1.msra.mxu0 0.0
        %4997 = vmatprep.subr.mxu0 0.0
        %4998 = vmatpush1.msra.mxu0 0.0
        %4999 = vmatprep.subr.mxu0 0.0
        %5000 = vmatpush1.msra.mxu0 0.0
        %5001 = vmatprep.subr.mxu0 0.0
        %5002 = vmatpush1.msra.mxu0 0.0
        %5003 = vmatprep.subr.mxu0 0.0
        %5004 = vmatpush1.msra.mxu0 0.0
        %5005 = vmatprep.subr.mxu0 0.0
        %5006 = vmatpush1.msra.mxu0 0.0
        %5007 = vmatprep.subr.mxu0 0.0
        %5008 = vmatpush1.msra.mxu0 0.0
        %5009 = vmatprep.subr.mxu0 0.0
        %5010 = vmatpush1.msra.mxu0 %v4968
        %5011 = vmatprep.subr.mxu0 0.0
        %5012 = vmatpush1.msra.mxu0 %v4966
        %5013 = vmatprep.subr.mxu0 0.0
        %5014 = vmatpush1.msra.mxu0 %v4964
        %5015 = vmatprep.subr.mxu0 0.0
        %5016 = vmatpush1.msra.mxu0 %v4962
        %5017 = vmatprep.subr.mxu0 0.0
        %5018 = vmatpush2.msra.mxu0 0.0
        %5019 = vmatprep.subr.mxu0 0.0
        %5020 = vmatpush2.msra.mxu0 0.0
        %5021 = vmatprep.subr.mxu0 0.0
        %5022 = vmatpush2.msra.mxu0 0.0
        %5023 = vmatprep.subr.mxu0 0.0
        %5024 = vmatpush2.msra.mxu0 0.0
        %5025 = vmatprep.subr.mxu0 0.0
        %5026 = vmatpush2.msra.mxu0 0.0
        %5027 = vmatprep.subr.mxu0 0.0
        %5028 = vmatpush2.msra.mxu0 0.0
        %5029 = vmatprep.subr.mxu0 0.0
        %5030 = vmatpush2.msra.mxu0 0.0
        %5031 = vmatprep.subr.mxu0 0.0
        %5032 = vmatpush2.msra.mxu0 0.0
        %5033 = vmatprep.subr.mxu0 0.0
        %5034 = vmatpush2.msra.mxu0 0.0
        %5035 = vmatprep.subr.mxu0 0.0
        %5036 = vmatpush2.msra.mxu0 0.0
        %5037 = vmatprep.subr.mxu0 0.0
        %5038 = vmatpush2.msra.mxu0 0.0
        %5039 = vmatprep.subr.mxu0 0.0
        %5040 = vmatpush2.msra.mxu0 0.0
        %5041 = vmatprep.subr.mxu0 0.0
        %5042 = vmatpush2.msra.mxu0 0.0
        %5043 = vmatprep.subr.mxu0 0.0
        %5044 = vmatpush2.msra.mxu0 0.0
        %5045 = vmatprep.subr.mxu0 0.0
        %5046 = vmatpush2.msra.mxu0 0.0
        %5047 = vmatprep.subr.mxu0 0.0
        %5048 = vmatpush2.msra.mxu0 0.0
        %5049 = vmatprep.mubr.f32.mxu0 0.0
        %5050 = vmatmul.mubr.f32.gmra.mxu0 %v4974
        %v5051 = vpop.f32.mrf.mxu0
        %v5052 = vadd.f32 0.0, %v5051
        %v5053 = vpop.f32.mrf.mxu0
        %5054 = vmatprep.mubr.f32.mxu0 0.0
        %5055 = vmatmul.mubr.f32.gmra.mxu0 %v4977
        %v5056 = vpop.f32.mrf.mxu0
        %v5057 = vadd.f32 0.0, %v5056
        %v5058 = vpop.f32.mrf.mxu0
        %5059 = vmatprep.mubr.f32.mxu0 0.0
        %5060 = vmatmul.mubr.f32.gmra.mxu0 %v4980
        %v5061 = vpop.f32.mrf.mxu0
        %v5062 = vadd.f32 0.0, %v5061
        %v5063 = vpop.f32.mrf.mxu0
        %5064 = vmatprep.mubr.f32.mxu0 0.0
        %5065 = vmatmul.mubr.f32.gmra.mxu0 %v4983
        %v5066 = vpop.f32.mrf.mxu0
        %v5067 = vadd.f32 0.0, %v5066
        %v5068 = vpop.f32.mrf.mxu0
        %5069 = vdwg.mxu0
        %5086 = vrot.lane.b32.xlu0 %v3853, 8
        %v5087 = vpop.permute.xlu0 %5086
        %5088 = vrot.lane.b32.xlu0 %v3858, 8
        %v5089 = vpop.permute.xlu0 %5088
        %5090 = vrot.lane.b32.xlu0 %v3863, 8
        %v5091 = vpop.permute.xlu0 %5090
        %5092 = vrot.lane.b32.xlu0 %v3868, 8
        %v5093 = vpop.permute.xlu0 %5092
        %5094 = vrot.lane.b32.xlu0 %v3962, 8
        %v5095 = vpop.permute.xlu0 %5094
        %5096 = vrot.lane.b32.xlu0 %v3967, 8
        %v5097 = vpop.permute.xlu0 %5096
        %5098 = vrot.lane.b32.xlu0 %v3972, 8
        %v5099 = vpop.permute.xlu0 %5098
        %5100 = vrot.lane.b32.xlu0 %v3977, 8
        %v5101 = vpop.permute.xlu0 %5100
        %5102 = vrot.lane.b32.xlu0 %v4071, 8
        %v5103 = vpop.permute.xlu0 %5102
        %5104 = vrot.lane.b32.xlu0 %v4076, 8
        %v5105 = vpop.permute.xlu0 %5104
        %5106 = vrot.lane.b32.xlu0 %v4081, 8
        %v5107 = vpop.permute.xlu0 %5106
        %5108 = vrot.lane.b32.xlu0 %v4086, 8
        %v5109 = vpop.permute.xlu0 %5108
        %5110 = vrot.lane.b32.xlu0 %v4180, 8
        %v5111 = vpop.permute.xlu0 %5110
        %5112 = vrot.lane.b32.xlu0 %v4185, 8
        %v5113 = vpop.permute.xlu0 %5112
        %5114 = vrot.lane.b32.xlu0 %v4190, 8
        %v5115 = vpop.permute.xlu0 %5114
        %5116 = vrot.lane.b32.xlu0 %v4195, 8
        %v5117 = vpop.permute.xlu0 %5116
        %5150 = vrot.lane.b32.xlu0 %v4289, 16
        %v5151 = vpop.permute.xlu0 %5150
        %5152 = vrot.lane.b32.xlu0 %v4294, 16
        %v5153 = vpop.permute.xlu0 %5152
        %5154 = vrot.lane.b32.xlu0 %v4299, 16
        %v5155 = vpop.permute.xlu0 %5154
        %5156 = vrot.lane.b32.xlu0 %v4304, 16
        %v5157 = vpop.permute.xlu0 %5156
        %5158 = vrot.lane.b32.xlu0 %v4398, 16
        %v5159 = vpop.permute.xlu0 %5158
        %5160 = vrot.lane.b32.xlu0 %v4403, 16
        %v5161 = vpop.permute.xlu0 %5160
        %5162 = vrot.lane.b32.xlu0 %v4408, 16
        %v5163 = vpop.permute.xlu0 %5162
        %5164 = vrot.lane.b32.xlu0 %v4413, 16
        %v5165 = vpop.permute.xlu0 %5164
        %5166 = vrot.lane.b32.xlu0 %v4507, 16
        %v5167 = vpop.permute.xlu0 %5166
        %5168 = vrot.lane.b32.xlu0 %v4512, 16
        %v5169 = vpop.permute.xlu0 %5168
        %5170 = vrot.lane.b32.xlu0 %v4517, 16
        %v5171 = vpop.permute.xlu0 %5170
        %5172 = vrot.lane.b32.xlu0 %v4522, 16
        %v5173 = vpop.permute.xlu0 %5172
        %5174 = vrot.lane.b32.xlu0 %v4616, 16
        %v5175 = vpop.permute.xlu0 %5174
        %5176 = vrot.lane.b32.xlu0 %v4621, 16
        %v5177 = vpop.permute.xlu0 %5176
        %5178 = vrot.lane.b32.xlu0 %v4626, 16
        %v5179 = vpop.permute.xlu0 %5178
        %5180 = vrot.lane.b32.xlu0 %v4631, 16
        %v5181 = vpop.permute.xlu0 %5180
        %5214 = vrot.lane.b32.xlu0 %v4725, 24
        %v5215 = vpop.permute.xlu0 %5214
        %5216 = vrot.lane.b32.xlu0 %v4730, 24
        %v5217 = vpop.permute.xlu0 %5216
        %5218 = vrot.lane.b32.xlu0 %v4735, 24
        %v5219 = vpop.permute.xlu0 %5218
        %5220 = vrot.lane.b32.xlu0 %v4740, 24
        %v5221 = vpop.permute.xlu0 %5220
        %5222 = vrot.lane.b32.xlu0 %v4834, 24
        %v5223 = vpop.permute.xlu0 %5222
        %5224 = vrot.lane.b32.xlu0 %v4839, 24
        %v5225 = vpop.permute.xlu0 %5224
        %5226 = vrot.lane.b32.xlu0 %v4844, 24
        %v5227 = vpop.permute.xlu0 %5226
        %5228 = vrot.lane.b32.xlu0 %v4849, 24
        %v5229 = vpop.permute.xlu0 %5228
        %5230 = vrot.lane.b32.xlu0 %v4943, 24
        %v5231 = vpop.permute.xlu0 %5230
        %5232 = vrot.lane.b32.xlu0 %v4948, 24
        %v5233 = vpop.permute.xlu0 %5232
        %5234 = vrot.lane.b32.xlu0 %v4953, 24
        %v5235 = vpop.permute.xlu0 %5234
        %5236 = vrot.lane.b32.xlu0 %v4958, 24
        %v5237 = vpop.permute.xlu0 %5236
        %5238 = vrot.lane.b32.xlu0 %v5052, 24
        %v5239 = vpop.permute.xlu0 %5238
        %5240 = vrot.lane.b32.xlu0 %v5057, 24
        %v5241 = vpop.permute.xlu0 %5240
        %5242 = vrot.lane.b32.xlu0 %v5062, 24
        %v5243 = vpop.permute.xlu0 %5242
        %5244 = vrot.lane.b32.xlu0 %v5067, 24
        %v5245 = vpop.permute.xlu0 %5244
        %v5262 = vsel %vm885, %v3417, %v5087
        %v5263 = vsel %vm885, %v3422, %v5089
        %v5264 = vsel %vm885, %v3427, %v5091
        %v5265 = vsel %vm885, %v3432, %v5093
        %v5266 = vsel %vm885, %v3526, %v5095
        %v5267 = vsel %vm885, %v3531, %v5097
        %v5268 = vsel %vm885, %v3536, %v5099
        %v5269 = vsel %vm885, %v3541, %v5101
        %v5270 = vsel %vm885, %v3635, %v5103
        %v5271 = vsel %vm885, %v3640, %v5105
        %v5272 = vsel %vm885, %v3645, %v5107
        %v5273 = vsel %vm885, %v3650, %v5109
        %v5274 = vsel %vm885, %v3744, %v5111
        %v5275 = vsel %vm885, %v3749, %v5113
        %v5276 = vsel %vm885, %v3754, %v5115
        %v5277 = vsel %vm885, %v3759, %v5117
        %vm5278 = vcmask 130048
        %v5279 = vsel %vm5278, %v5262, %v5151
        %v5280 = vsel %vm5278, %v5263, %v5153
        %v5281 = vsel %vm5278, %v5264, %v5155
        %v5282 = vsel %vm5278, %v5265, %v5157
        %v5283 = vsel %vm5278, %v5266, %v5159
        %v5284 = vsel %vm5278, %v5267, %v5161
        %v5285 = vsel %vm5278, %v5268, %v5163
        %v5286 = vsel %vm5278, %v5269, %v5165
        %v5287 = vsel %vm5278, %v5270, %v5167
        %v5288 = vsel %vm5278, %v5271, %v5169
        %v5289 = vsel %vm5278, %v5272, %v5171
        %v5290 = vsel %vm5278, %v5273, %v5173
        %v5291 = vsel %vm5278, %v5274, %v5175
        %v5292 = vsel %vm5278, %v5275, %v5177
        %v5293 = vsel %vm5278, %v5276, %v5179
        %v5294 = vsel %vm5278, %v5277, %v5181
        %vm5295 = vcmask 195584
        %v5296 = vsel %vm5295, %v5279, %v5215
        %v5297 = vsel %vm5295, %v5280, %v5217
        %v5298 = vsel %vm5295, %v5281, %v5219
        %v5299 = vsel %vm5295, %v5282, %v5221
        %v5300 = vsel %vm5295, %v5283, %v5223
        %v5301 = vsel %vm5295, %v5284, %v5225
        %v5302 = vsel %vm5295, %v5285, %v5227
        %v5303 = vsel %vm5295, %v5286, %v5229
        %v5304 = vsel %vm5295, %v5287, %v5231
        %v5305 = vsel %vm5295, %v5288, %v5233
        %v5306 = vsel %vm5295, %v5289, %v5235
        %v5307 = vsel %vm5295, %v5290, %v5237
        %v5308 = vsel %vm5295, %v5291, %v5239
        %v5309 = vsel %vm5295, %v5292, %v5241
        %v5310 = vsel %vm5295, %v5293, %v5243
        %v5311 = vsel %vm5295, %v5294, %v5245
        %v5312 = vld [vmem:[#allocation7] sm:$0xff]
        %v5313 = vld [vmem:[#allocation7 + $0x8] sm:$0xff]
        %v5314 = vld [vmem:[#allocation7 + $0x10] sm:$0xff]
        %v5315 = vld [vmem:[#allocation7 + $0x18] sm:$0xff]
        %v5316 = vld [vmem:[#allocation8] sm:$0x1]
        %v5318 = vlaneseq
        %v5319 = vshrl.u32 %v5318, 7
        %v5320 = vsub.s32 0, %v5319
        %v5321 = vrot.slane %v5316, %v5320
        %v5324 = vsel %vm443, %v5296, 0
        %v5327 = vsel %vm443, %v5297, 0
        %v5330 = vsel %vm443, %v5298, 0
        %v5333 = vsel %vm443, %v5299, 0
        %v5336 = vsel %vm443, %v5300, 0
        %v5339 = vsel %vm443, %v5301, 0
        %v5342 = vsel %vm443, %v5302, 0
        %v5345 = vsel %vm443, %v5303, 0
        %v5348 = vsel %vm443, %v5304, 0
        %v5351 = vsel %vm443, %v5305, 0
        %v5354 = vsel %vm443, %v5306, 0
        %v5357 = vsel %vm443, %v5307, 0
        %v5360 = vsel %vm443, %v5308, 0
        %v5363 = vsel %vm443, %v5309, 0
        %v5366 = vsel %vm443, %v5310, 0
        %v5369 = vsel %vm443, %v5311, 0
        %5371 = vmatprep.subr.mxu0 0.0
        %5372 = vmatpush1.msra.mxu0 0.0
        %5373 = vmatprep.subr.mxu0 0.0
        %5374 = vmatpush1.msra.mxu0 0.0
        %5375 = vmatprep.subr.mxu0 0.0
        %5376 = vmatpush1.msra.mxu0 0.0
        %5377 = vmatprep.subr.mxu0 0.0
        %5378 = vmatpush1.msra.mxu0 0.0
        %5379 = vmatprep.subr.mxu0 0.0
        %5380 = vmatpush1.msra.mxu0 0.0
        %5381 = vmatprep.subr.mxu0 0.0
        %5382 = vmatpush1.msra.mxu0 0.0
        %5383 = vmatprep.subr.mxu0 0.0
        %5384 = vmatpush1.msra.mxu0 0.0
        %5385 = vmatprep.subr.mxu0 0.0
        %5386 = vmatpush1.msra.mxu0 0.0
        %5387 = vmatprep.subr.mxu0 0.0
        %5388 = vmatpush1.msra.mxu0 0.0
        %5389 = vmatprep.subr.mxu0 0.0
        %5390 = vmatpush1.msra.mxu0 0.0
        %5391 = vmatprep.subr.mxu0 0.0
        %5392 = vmatpush1.msra.mxu0 0.0
        %5393 = vmatprep.subr.mxu0 0.0
        %5394 = vmatpush1.msra.mxu0 0.0
        %5395 = vmatprep.subr.mxu0 0.0
        %5396 = vmatpush1.msra.mxu0 %v5315
        %5397 = vmatprep.subr.mxu0 0.0
        %5398 = vmatpush1.msra.mxu0 %v5314
        %5399 = vmatprep.subr.mxu0 0.0
        %5400 = vmatpush1.msra.mxu0 %v5313
        %5401 = vmatprep.subr.mxu0 0.0
        %5402 = vmatpush1.msra.mxu0 %v5312
        %5403 = vmatprep.subr.mxu0 0.0
        %5404 = vmatpush2.msra.mxu0 0.0
        %5405 = vmatprep.subr.mxu0 0.0
        %5406 = vmatpush2.msra.mxu0 0.0
        %5407 = vmatprep.subr.mxu0 0.0
        %5408 = vmatpush2.msra.mxu0 0.0
        %5409 = vmatprep.subr.mxu0 0.0
        %5410 = vmatpush2.msra.mxu0 0.0
        %5411 = vmatprep.subr.mxu0 0.0
        %5412 = vmatpush2.msra.mxu0 0.0
        %5413 = vmatprep.subr.mxu0 0.0
        %5414 = vmatpush2.msra.mxu0 0.0
        %5415 = vmatprep.subr.mxu0 0.0
        %5416 = vmatpush2.msra.mxu0 0.0
        %5417 = vmatprep.subr.mxu0 0.0
        %5418 = vmatpush2.msra.mxu0 0.0
        %5419 = vmatprep.subr.mxu0 0.0
        %5420 = vmatpush2.msra.mxu0 0.0
        %5421 = vmatprep.subr.mxu0 0.0
        %5422 = vmatpush2.msra.mxu0 0.0
        %5423 = vmatprep.subr.mxu0 0.0
        %5424 = vmatpush2.msra.mxu0 0.0
        %5425 = vmatprep.subr.mxu0 0.0
        %5426 = vmatpush2.msra.mxu0 0.0
        %5427 = vmatprep.subr.mxu0 0.0
        %5428 = vmatpush2.msra.mxu0 0.0
        %5429 = vmatprep.subr.mxu0 0.0
        %5430 = vmatpush2.msra.mxu0 0.0
        %5431 = vmatprep.subr.mxu0 0.0
        %5432 = vmatpush2.msra.mxu0 0.0
        %5433 = vmatprep.subr.mxu0 0.0
        %5434 = vmatpush2.msra.mxu0 0.0
        %5435 = vmatprep.mubr.f32.mxu0 0.0
        %5436 = vmatmul.mubr.f32.gmra.mxu0 %v5324
        %v5437 = vpop.f32.mrf.mxu0
        %v5438 = vadd.f32 %v5321, %v5437
        %v5439 = vpop.f32.mrf.mxu0
        %5440 = vmatprep.mubr.f32.mxu0 0.0
        %5441 = vmatmul.mubr.f32.gmra.mxu0 %v5327
        %v5442 = vpop.f32.mrf.mxu0
        %v5443 = vadd.f32 %v5321, %v5442
        %v5444 = vpop.f32.mrf.mxu0
        %5445 = vmatprep.mubr.f32.mxu0 0.0
        %5446 = vmatmul.mubr.f32.gmra.mxu0 %v5330
        %v5447 = vpop.f32.mrf.mxu0
        %v5448 = vadd.f32 %v5321, %v5447
        %v5449 = vpop.f32.mrf.mxu0
        %5450 = vmatprep.mubr.f32.mxu0 0.0
        %5451 = vmatmul.mubr.f32.gmra.mxu0 %v5333
        %v5452 = vpop.f32.mrf.mxu0
        %v5453 = vadd.f32 %v5321, %v5452
        %v5454 = vpop.f32.mrf.mxu0
        %5455 = vmatprep.mubr.f32.mxu0 0.0
        %5456 = vmatmul.mubr.f32.gmra.mxu0 %v5336
        %v5457 = vpop.f32.mrf.mxu0
        %v5458 = vadd.f32 %v5321, %v5457
        %v5459 = vpop.f32.mrf.mxu0
        %5460 = vmatprep.mubr.f32.mxu0 0.0
        %5461 = vmatmul.mubr.f32.gmra.mxu0 %v5339
        %v5462 = vpop.f32.mrf.mxu0
        %v5463 = vadd.f32 %v5321, %v5462
        %v5464 = vpop.f32.mrf.mxu0
        %5465 = vmatprep.mubr.f32.mxu0 0.0
        %5466 = vmatmul.mubr.f32.gmra.mxu0 %v5342
        %v5467 = vpop.f32.mrf.mxu0
        %v5468 = vadd.f32 %v5321, %v5467
        %v5469 = vpop.f32.mrf.mxu0
        %5470 = vmatprep.mubr.f32.mxu0 0.0
        %5471 = vmatmul.mubr.f32.gmra.mxu0 %v5345
        %v5472 = vpop.f32.mrf.mxu0
        %v5473 = vadd.f32 %v5321, %v5472
        %v5474 = vpop.f32.mrf.mxu0
        %5475 = vmatprep.mubr.f32.mxu0 0.0
        %5476 = vmatmul.mubr.f32.gmra.mxu0 %v5348
        %v5477 = vpop.f32.mrf.mxu0
        %v5478 = vadd.f32 %v5321, %v5477
        %v5479 = vpop.f32.mrf.mxu0
        %5480 = vmatprep.mubr.f32.mxu0 0.0
        %5481 = vmatmul.mubr.f32.gmra.mxu0 %v5351
        %v5482 = vpop.f32.mrf.mxu0
        %v5483 = vadd.f32 %v5321, %v5482
        %v5484 = vpop.f32.mrf.mxu0
        %5485 = vmatprep.mubr.f32.mxu0 0.0
        %5486 = vmatmul.mubr.f32.gmra.mxu0 %v5354
        %v5487 = vpop.f32.mrf.mxu0
        %v5488 = vadd.f32 %v5321, %v5487
        %v5489 = vpop.f32.mrf.mxu0
        %5490 = vmatprep.mubr.f32.mxu0 0.0
        %5491 = vmatmul.mubr.f32.gmra.mxu0 %v5357
        %v5492 = vpop.f32.mrf.mxu0
        %v5493 = vadd.f32 %v5321, %v5492
        %v5494 = vpop.f32.mrf.mxu0
        %5495 = vmatprep.mubr.f32.mxu0 0.0
        %5496 = vmatmul.mubr.f32.gmra.mxu0 %v5360
        %v5497 = vpop.f32.mrf.mxu0
        %v5498 = vadd.f32 %v5321, %v5497
        %v5499 = vpop.f32.mrf.mxu0
        %5500 = vmatprep.mubr.f32.mxu0 0.0
        %5501 = vmatmul.mubr.f32.gmra.mxu0 %v5363
        %v5502 = vpop.f32.mrf.mxu0
        %v5503 = vadd.f32 %v5321, %v5502
        %v5504 = vpop.f32.mrf.mxu0
        %5505 = vmatprep.mubr.f32.mxu0 0.0
        %5506 = vmatmul.mubr.f32.gmra.mxu0 %v5366
        %v5507 = vpop.f32.mrf.mxu0
        %v5508 = vadd.f32 %v5321, %v5507
        %v5509 = vpop.f32.mrf.mxu0
        %5510 = vmatprep.mubr.f32.mxu0 0.0
        %5511 = vmatmul.mubr.f32.gmra.mxu0 %v5369
        %v5512 = vpop.f32.mrf.mxu0
        %v5513 = vadd.f32 %v5321, %v5512
        %v5514 = vpop.f32.mrf.mxu0
        %5515 = vdwg.mxu0
        %5516 = vxpose.xlu0.b32.start [1/16] %v5438, 128
        %5517 = vxpose.xlu0.b32.cont [2/16] %v5443, 128
        %5518 = vxpose.xlu0.b32.cont [3/16] %v5448, 128
        %5519 = vxpose.xlu0.b32.cont [4/16] %v5453, 128
        %5520 = vxpose.xlu0.b32.cont [5/16] 0.0, 128
        %5521 = vxpose.xlu0.b32.cont [6/16] 0.0, 128
        %5522 = vxpose.xlu0.b32.cont [7/16] 0.0, 128
        %5523 = vxpose.xlu0.b32.cont [8/16] 0.0, 128
        %5524 = vxpose.xlu0.b32.cont [9/16] 0.0, 128
        %5525 = vxpose.xlu0.b32.cont [10/16] 0.0, 128
        %5526 = vxpose.xlu0.b32.cont [11/16] 0.0, 128
        %5527 = vxpose.xlu0.b32.cont [12/16] 0.0, 128
        %5528 = vxpose.xlu0.b32.cont [13/16] 0.0, 128
        %5529 = vxpose.xlu0.b32.cont [14/16] 0.0, 128
        %5530 = vxpose.xlu0.b32.cont [15/16] 0.0, 128
        %5531 = vxpose.xlu0.b32.end [16/16] 0.0, 128
        %v5532 = vpop.trf.xlu0
        %v5533 = vpop.trf.xlu0
        %v5534 = vpop.trf.xlu0
        %v5535 = vpop.trf.xlu0
        %v5536 = vpop.trf.xlu0
        %v5537 = vpop.trf.xlu0
        %v5538 = vpop.trf.xlu0
        %v5539 = vpop.trf.xlu0
        %v5540 = vpop.trf.xlu0
        %v5541 = vpop.trf.xlu0
        %v5542 = vpop.trf.xlu0
        %v5543 = vpop.trf.xlu0
        %v5544 = vpop.trf.xlu0
        %v5545 = vpop.trf.xlu0
        %v5546 = vpop.trf.xlu0
        %v5547 = vpop.trf.xlu0
        %5548 = vxpose.xlu0.b32.start [1/16] %v5458, 128
        %5549 = vxpose.xlu0.b32.cont [2/16] %v5463, 128
        %5550 = vxpose.xlu0.b32.cont [3/16] %v5468, 128
        %5551 = vxpose.xlu0.b32.cont [4/16] %v5473, 128
        %5552 = vxpose.xlu0.b32.cont [5/16] 0.0, 128
        %5553 = vxpose.xlu0.b32.cont [6/16] 0.0, 128
        %5554 = vxpose.xlu0.b32.cont [7/16] 0.0, 128
        %5555 = vxpose.xlu0.b32.cont [8/16] 0.0, 128
        %5556 = vxpose.xlu0.b32.cont [9/16] 0.0, 128
        %5557 = vxpose.xlu0.b32.cont [10/16] 0.0, 128
        %5558 = vxpose.xlu0.b32.cont [11/16] 0.0, 128
        %5559 = vxpose.xlu0.b32.cont [12/16] 0.0, 128
        %5560 = vxpose.xlu0.b32.cont [13/16] 0.0, 128
        %5561 = vxpose.xlu0.b32.cont [14/16] 0.0, 128
        %5562 = vxpose.xlu0.b32.cont [15/16] 0.0, 128
        %5563 = vxpose.xlu0.b32.end [16/16] 0.0, 128
        %v5564 = vpop.trf.xlu0
        %v5565 = vpop.trf.xlu0
        %v5566 = vpop.trf.xlu0
        %v5567 = vpop.trf.xlu0
        %v5568 = vpop.trf.xlu0
        %v5569 = vpop.trf.xlu0
        %v5570 = vpop.trf.xlu0
        %v5571 = vpop.trf.xlu0
        %v5572 = vpop.trf.xlu0
        %v5573 = vpop.trf.xlu0
        %v5574 = vpop.trf.xlu0
        %v5575 = vpop.trf.xlu0
        %v5576 = vpop.trf.xlu0
        %v5577 = vpop.trf.xlu0
        %v5578 = vpop.trf.xlu0
        %v5579 = vpop.trf.xlu0
        %5580 = vxpose.xlu0.b32.start [1/16] %v5478, 128
        %5581 = vxpose.xlu0.b32.cont [2/16] %v5483, 128
        %5582 = vxpose.xlu0.b32.cont [3/16] %v5488, 128
        %5583 = vxpose.xlu0.b32.cont [4/16] %v5493, 128
        %5584 = vxpose.xlu0.b32.cont [5/16] 0.0, 128
        %5585 = vxpose.xlu0.b32.cont [6/16] 0.0, 128
        %5586 = vxpose.xlu0.b32.cont [7/16] 0.0, 128
        %5587 = vxpose.xlu0.b32.cont [8/16] 0.0, 128
        %5588 = vxpose.xlu0.b32.cont [9/16] 0.0, 128
        %5589 = vxpose.xlu0.b32.cont [10/16] 0.0, 128
        %5590 = vxpose.xlu0.b32.cont [11/16] 0.0, 128
        %5591 = vxpose.xlu0.b32.cont [12/16] 0.0, 128
        %5592 = vxpose.xlu0.b32.cont [13/16] 0.0, 128
        %5593 = vxpose.xlu0.b32.cont [14/16] 0.0, 128
        %5594 = vxpose.xlu0.b32.cont [15/16] 0.0, 128
        %5595 = vxpose.xlu0.b32.end [16/16] 0.0, 128
        %v5596 = vpop.trf.xlu0
        %v5597 = vpop.trf.xlu0
        %v5598 = vpop.trf.xlu0
        %v5599 = vpop.trf.xlu0
        %v5600 = vpop.trf.xlu0
        %v5601 = vpop.trf.xlu0
        %v5602 = vpop.trf.xlu0
        %v5603 = vpop.trf.xlu0
        %v5604 = vpop.trf.xlu0
        %v5605 = vpop.trf.xlu0
        %v5606 = vpop.trf.xlu0
        %v5607 = vpop.trf.xlu0
        %v5608 = vpop.trf.xlu0
        %v5609 = vpop.trf.xlu0
        %v5610 = vpop.trf.xlu0
        %v5611 = vpop.trf.xlu0
        %5612 = vxpose.xlu0.b32.start [1/16] %v5498, 128
        %5613 = vxpose.xlu0.b32.cont [2/16] %v5503, 128
        %5614 = vxpose.xlu0.b32.cont [3/16] %v5508, 128
        %5615 = vxpose.xlu0.b32.cont [4/16] %v5513, 128
        %5616 = vxpose.xlu0.b32.cont [5/16] 0.0, 128
        %5617 = vxpose.xlu0.b32.cont [6/16] 0.0, 128
        %5618 = vxpose.xlu0.b32.cont [7/16] 0.0, 128
        %5619 = vxpose.xlu0.b32.cont [8/16] 0.0, 128
        %5620 = vxpose.xlu0.b32.cont [9/16] 0.0, 128
        %5621 = vxpose.xlu0.b32.cont [10/16] 0.0, 128
        %5622 = vxpose.xlu0.b32.cont [11/16] 0.0, 128
        %5623 = vxpose.xlu0.b32.cont [12/16] 0.0, 128
        %5624 = vxpose.xlu0.b32.cont [13/16] 0.0, 128
        %5625 = vxpose.xlu0.b32.cont [14/16] 0.0, 128
        %5626 = vxpose.xlu0.b32.cont [15/16] 0.0, 128
        %5627 = vxpose.xlu0.b32.end [16/16] 0.0, 128
        %v5628 = vpop.trf.xlu0
        %v5629 = vpop.trf.xlu0
        %v5630 = vpop.trf.xlu0
        %v5631 = vpop.trf.xlu0
        %v5632 = vpop.trf.xlu0
        %v5633 = vpop.trf.xlu0
        %v5634 = vpop.trf.xlu0
        %v5635 = vpop.trf.xlu0
        %v5636 = vpop.trf.xlu0
        %v5637 = vpop.trf.xlu0
        %v5638 = vpop.trf.xlu0
        %v5639 = vpop.trf.xlu0
        %v5640 = vpop.trf.xlu0
        %v5641 = vpop.trf.xlu0
        %v5642 = vpop.trf.xlu0
        %v5643 = vpop.trf.xlu0
        %5644 = vst.msk [vmem:[%s285] sm:$0xff] %vm443, %v5532
        %5645 = vst.msk [vmem:[%s285 + $0x8] sm:$0xff] %vm443, %v5533
        %5646 = vst.msk [vmem:[%s285 + $0x10] sm:$0xff] %vm443, %v5534
        %5647 = vst.msk [vmem:[%s285 + $0x18] sm:$0xff] %vm443, %v5535
        %5648 = vst.msk [vmem:[%s285 + $0x20] sm:$0xff] %vm443, %v5564
        %5649 = vst.msk [vmem:[%s285 + $0x28] sm:$0xff] %vm443, %v5565
        %5650 = vst.msk [vmem:[%s285 + $0x30] sm:$0xff] %vm443, %v5566
        %5651 = vst.msk [vmem:[%s285 + $0x38] sm:$0xff] %vm443, %v5567
        %5652 = vst.msk [vmem:[%s285 + $0x40] sm:$0xff] %vm443, %v5596
        %5653 = vst.msk [vmem:[%s285 + $0x48] sm:$0xff] %vm443, %v5597
        %5654 = vst.msk [vmem:[%s285 + $0x50] sm:$0xff] %vm443, %v5598
        %5655 = vst.msk [vmem:[%s285 + $0x58] sm:$0xff] %vm443, %v5599
        %5656 = vst.msk [vmem:[%s285 + $0x60] sm:$0xff] %vm443, %v5628
        %5657 = vst.msk [vmem:[%s285 + $0x68] sm:$0xff] %vm443, %v5629
        %5658 = vst.msk [vmem:[%s285 + $0x70] sm:$0xff] %vm443, %v5630
        %5659 = vst.msk [vmem:[%s285 + $0x78] sm:$0xff] %vm443, %v5631
        %s5660 = sand.u32 %s142, 1
        %s5661 = scalar_lea.sflag [#allocation4], %s5660
        %s5662 = sand.u32 %s142, 1
        %s5663 = smul.addr %s5662, 128
        %s5664 = scalar_lea.vmem [#allocation10], %s5663
        // Predicated region
        $region57: #{multi_head_attention.1} parent=39 // pred_check
          %p5665 = pneg %p152
        $region58: #{multi_head_attention.1} parent=39 // pred_check_branch
          %5667 = sbr.rel (%p5665) target = $region60
        $region59: #{multi_head_attention.1} parent=39 // pred_region
          %s5668 = smul.u32 4, %s24
          %s5670 = ssub.s32 2048, 2048
          %5671 = vsyncadd %s5661, %s5670
          %s5672 = smul.addr %s5668, 4
          %s5673 = smul.addr %s5672, 128
          %s5674 = scalar_lea.hbm %s5, %s5673
          %s5675 = sshll.u32 %s5664, 4
          %s5676 = int_to_ptr.vmem [resolvable:$true] %s5675
          %5681 = dma.vmem_to_hbm [thread:$0]  %s5676, 2048, %s5674, %s5661, 128, 128, 8
        $region60: #{multi_head_attention.1} parent=39 // pred_fallthru
          _
      $region40: #{multi_head_attention.1} parent=5 // pred_fallthru
        _
      %p5682 = scmp.le.s32.totalorder 2, %s19
      // Predicated region
      $region61: #{multi_head_attention.1} parent=5 // pred_check
        %p5683 = pneg %p5682
      $region62: #{multi_head_attention.1} parent=5 // pred_check_branch
        %5685 = sbr.rel (%p5683) target = $region64
      $region63: #{multi_head_attention.1} parent=5 // pred_region
        %s5686 = ssub.s32 %s19, 2
        // Predicated region
        $region65: #{multi_head_attention.1} parent=63 // pred_check
          %p5687 = pneg %p158
        $region66: #{multi_head_attention.1} parent=63 // pred_check_branch
          %5689 = sbr.rel (%p5687) target = $region68
        $region67: #{multi_head_attention.1} parent=63 // pred_region
          %s5690 = sand.u32 %s143, 1
          %s5691 = scalar_lea.sflag [#allocation4], %s5690
          %s5692 = sand.u32 %s143, 1
          %s5693 = smul.addr %s5692, 128
          %s5694 = scalar_lea.vmem [#allocation10], %s5693
          %5695 = dma.done %s5691, 2048
        $region68: #{multi_head_attention.1} parent=63 // pred_fallthru
          _
      $region64: #{multi_head_attention.1} parent=5 // pred_fallthru
        _
    $region6: #{multi_head_attention.1} parent=1 // loop_footer
      %s23 = sadd.s32 1, %s19
    $region7: #{multi_head_attention.1} parent=1 // loop_footer_branch
      %18 = sbr.rel target = $region3
    $region8: #{multi_head_attention.1} parent=1 // loop_exit
      _
    %5696 = vsyncpa [#allocation3], 1
    %s5697 = scalar_lea.sflag [#allocation3], 1
    %5698 = vsyncpa %s5697, 1
    %5699 = vsyncpa [#allocation6], 1
    %5700 = vsyncpa [#allocation9], 1
    %5701 = vsyncpa [#allocation4], 1
    %s5702 = scalar_lea.sflag [#allocation4], 1
    %5703 = vsyncpa %s5702, 1

</llo_original>
